<compile_context>
chip_gen: v5e
topology: v5e:2x2
jax: 0.10.0
libtpu: 0.0.40
codegen_flags: <defaults>
</compile_context>

<pallas_src>
import functools

import jax
import jax.numpy as jnp
from jax import lax
from jax.experimental import pallas as pl
from jax.experimental.pallas import tpu as pltpu


OUT_PAD = 128          # fc_hi output lanes padded to a lane-dense 128
_NMEL = 40             # HighDecoder's hard-coded high-band mel channels


def _layer_bias_base(li, n_head):
    # bias-row layout: 0:prenet_b1  1:prenet_b2  2:fc_hi_b  then per layer:
    #   +0 fc_b, +1 conv1_b, +2 conv2_b, +3+3h+{0,1,2} = q/k/v bias of head h
    return 3 + li * (3 + 3 * n_head)


# ------------------------------ fused kernel -------------------------------

def _decoder_kernel(x_ref, keep_ref, neg_ref, tap_ref, gb_ref,
                    pw1_ref, pw2_ref, qkvw_ref, fcw_ref,
                    c1w_ref, c2w_ref, hiw_ref, b_ref,
                    o_ref, *, cfg, B, T):
    D = cfg["d_model"]
    H = cfg["n_head"]
    dk = D // H
    L = cfg["n_layers"]
    d_inner = cfg["d_inner"]
    K1, _ = cfg["fft_kernel"]          # K2 == 1 asserted at pack time
    pad1 = (K1 - 1) // 2
    BT = B * T
    eps = 1e-5

    def brow(r, width):                # (1, width) bias row from the packed array
        return b_ref[r:r + 1, 0:width]

    def saln(h, g, b):
        mu = jnp.mean(h, axis=-1, keepdims=True)
        var = jnp.mean(jnp.square(h - mu), axis=-1, keepdims=True)
        return g * ((h - mu) * lax.rsqrt(var + eps)) + b

    def mish(h):                       # h*tanh(softplus(h)) == h*(w^2-1)/(w^2+1)
        w = 1.0 + jnp.exp(jnp.minimum(h, 20.0))
        w2 = w * w
        return h * (w2 - 1.0) * pl.reciprocal(w2 + 1.0, approx=True)

    x = x_ref[...]                     # (BT, D) batch-folded slab
    keep = keep_ref[...]               # (BT, 1)  1 valid / 0 padded
    neg = neg_ref[...]                 # (B, T)   0 valid / -1e9 padded (key mask)
    taps = [tap_ref[t] for t in range(K1)]   # per-tap (BT,1) validity masks

    # ---- prenet: Linear -> ReLU -> (Dropout=id) -> Linear ----
    h = jnp.dot(x, pw1_ref[...], preferred_element_type=jnp.float32) + brow(0, D // 2)
    h = jnp.maximum(h, 0.0)
    x = jnp.dot(h, pw2_ref[...], preferred_element_type=jnp.float32) + brow(1, D)

    # ---- FFT blocks ----
    for li in range(L):
        lb = _layer_bias_base(li, H)

        # multi-head self-attention (internal residual); temperature is folded
        # into the Q weights/biases at pack time.
        out_b = [None] * B
        for hh in range(H):
            qh = jnp.dot(x, qkvw_ref[(li * 3 + 0) * H + hh],
                         preferred_element_type=jnp.float32) + brow(lb + 3 + 3 * hh + 0, dk)
            kh = jnp.dot(x, qkvw_ref[(li * 3 + 1) * H + hh],
                         preferred_element_type=jnp.float32) + brow(lb + 3 + 3 * hh + 1, dk)
            vh = jnp.dot(x, qkvw_ref[(li * 3 + 2) * H + hh],
                         preferred_element_type=jnp.float32) + brow(lb + 3 + 3 * hh + 2, dk)
            for bi in range(B):
                r0, r1 = bi * T, (bi + 1) * T
                s = lax.dot_general(qh[r0:r1], kh[r0:r1],
                                    (((1,), (1,)), ((), ())),
                                    preferred_element_type=jnp.float32)    # (T, T)
                s = s + neg[bi:bi + 1, :]
                s = s - jnp.max(s, axis=-1, keepdims=True)
                e = jnp.exp(s)
                p = e * pl.reciprocal(jnp.sum(e, axis=-1, keepdims=True), approx=True)
                head = jnp.dot(p, vh[r0:r1], preferred_element_type=jnp.float32)
                proj = jnp.dot(head, fcw_ref[li * H + hh],
                               preferred_element_type=jnp.float32)         # (T, D)
                out_b[bi] = proj if out_b[bi] is None else out_b[bi] + proj
        attn = jnp.concatenate(out_b, axis=0) if B > 1 else out_b[0]
        out = attn + brow(lb + 0, D) + x                 # fc bias + residual

        # SALN 0 + mask fill
        out = saln(out, gb_ref[4 * li + 0], gb_ref[4 * li + 1]) * keep

        # position-wise FFN: Conv1d(K1,'same') -> Mish -> Conv1d(1), + residual.
        # Conv1 = K accumulated MXU dots on roll-shifted slabs (no im2col).
        res2 = out
        acc = None
        for tap in range(K1):
            j = tap - pad1
            src = out if j == 0 else pltpu.roll(out, (-j) % BT, 0) * taps[tap]
            contrib = jnp.dot(src, c1w_ref[li * K1 + tap],
                              preferred_element_type=jnp.float32)
            acc = contrib if acc is None else acc + contrib
        h1 = mish(acc + brow(lb + 1, d_inner))
        h2 = jnp.dot(h1, c2w_ref[li], preferred_element_type=jnp.float32) + brow(lb + 2, D)
        out = h2 + res2

        # SALN 1 + mask fill
        x = saln(out, gb_ref[4 * li + 2], gb_ref[4 * li + 3]) * keep

    # ---- fc_hi (lane-padded to 128 columns) + final mask fill ----
    mel = jnp.dot(x, hiw_ref[...], preferred_element_type=jnp.float32) + brow(2, OUT_PAD)
    o_ref[...] = (mel * keep).astype(o_ref.dtype)


# --------------------------------- wrapper ----------------------------------

def high_decoder_forward(packed, enc_seq, style_vector, mask, cfg):
    B, T, D = enc_seq.shape
    L = cfg["n_layers"]
    H = cfg["n_head"]
    dk = D // H
    d_inner = cfg["d_inner"]
    K1, _ = cfg["fft_kernel"]
    pad1 = (K1 - 1) // 2
    BT = B * T

    # tiny XLA-side preprocessing (kept out of the kernel)
    x = enc_seq.reshape(BT, D)
    keep = (~mask).astype(jnp.float32).reshape(BT, 1)           # 1 valid / 0 pad
    neg = mask.astype(jnp.float32) * (-1e9)                     # (B, T) additive key mask
    gb = style_vector @ packed["saln_w"] + packed["saln_b"]     # (B, 4L*D)
    gb = gb.reshape(B, 4 * L, D).transpose(1, 0, 2)             # (4L, B, D)
    gb = jnp.broadcast_to(gb[:, :, None, :], (4 * L, B, T, D)).reshape(4 * L, BT, D)

    # per-tap sequence-boundary masks for the 'same' conv (static, shape-only)
    pos = jnp.arange(T, dtype=jnp.int32)
    tap_rows = []
    for k in range(K1):
        j = k - pad1
        valid = ((pos + j >= 0) & (pos + j < T)).astype(jnp.float32)     # (T,)
        tap_rows.append(jnp.tile(valid, B).reshape(BT, 1))
    tap_mask = jnp.stack(tap_rows)                              # (K1, BT, 1)

    kernel = functools.partial(_decoder_kernel, cfg=cfg, B=B, T=T)

    # advisory cost estimate for the XLA scheduler
    flops = 2 * BT * D * (D // 2) * 2                           # prenet
    flops += L * (3 * 2 * BT * D * D)                           # qkv projections
    flops += L * B * H * (2 * T * T * dk) * 2                   # scores + context
    flops += L * H * (2 * BT * dk * D)                          # per-head out proj
    flops += L * (K1 * 2 * BT * D * d_inner + 2 * BT * d_inner * D)    # convs
    flops += 2 * BT * D * OUT_PAD                               # fc_hi
    transcendentals = L * (B * H * T * T + BT * d_inner)        # softmax + mish exps
    bytes_accessed = 4 * (x.size + keep.size + neg.size + tap_mask.size + gb.size
                          + sum(int(packed[n].size) for n in (
                              "prenet_w1", "prenet_w2", "qkv_w", "fc_w",
                              "c1_w", "c2_w", "fc_hi_w", "biases"))
                          + BT * OUT_PAD)

    out = pl.pallas_call(
        kernel,
        out_shape=jax.ShapeDtypeStruct((BT, OUT_PAD), jnp.float32),
        cost_estimate=pl.CostEstimate(flops=flops,
                                      transcendentals=transcendentals,
                                      bytes_accessed=bytes_accessed),
    )(x, keep, neg, tap_mask, gb,
      packed["prenet_w1"], packed["prenet_w2"],
      packed["qkv_w"], packed["fc_w"],
      packed["c1_w"], packed["c2_w"],
      packed["fc_hi_w"], packed["biases"])

    mel_high = out[:, :_NMEL].reshape(B, T, _NMEL)
    return mel_high, None


# ------------------------- parameter initialization ------------------------

def _init_linear_params(key, fan_in, fan_out):
    kw, kb = jax.random.split(key)
    bound = 1.0 / float(fan_in) ** 0.5
    w = jax.random.uniform(kw, (fan_in, fan_out), jnp.float32, -bound, bound)
    b = jax.random.uniform(kb, (fan_out,), jnp.float32, -bound, bound)
    return w, b


def _init_conv_params(key, K, cin, cout):
    kw, kb = jax.random.split(key)
    bound = 1.0 / float(cin * K) ** 0.5
    w = jax.random.uniform(kw, (K, cin, cout), jnp.float32, -bound, bound)
    b = jax.random.uniform(kb, (cout,), jnp.float32, -bound, bound)
    return w, b


def init_params(key, cfg):
    D = cfg["d_model"]
    H = cfg["n_head"]
    dk = D // H
    d_inner = cfg["d_inner"]
    k1, k2 = cfg["fft_kernel"]
    style_dim = cfg["style_dim"]

    keys = jax.random.split(key, 4 + cfg["n_layers"])
    params = {}
    params["prenet_w1"], params["prenet_b1"] = _init_linear_params(keys[0], D, D // 2)
    params["prenet_w2"], params["prenet_b2"] = _init_linear_params(keys[1], D // 2, D)
    params["fc_hi_w"], params["fc_hi_b"] = _init_linear_params(keys[2], D, _NMEL)

    layers = []
    for li in range(cfg["n_layers"]):
        lk = jax.random.split(keys[4 + li], 8)
        lp = {}
        lp["wq"], lp["bq"] = _init_linear_params(lk[0], D, H * dk)
        lp["wk"], lp["bk"] = _init_linear_params(lk[1], D, H * dk)
        lp["wv"], lp["bv"] = _init_linear_params(lk[2], D, H * dk)
        lp["fc_w"], lp["fc_b"] = _init_linear_params(lk[3], H * dk, D)
        # StyleAdaptiveLayerNorm affine bias -> (ones for gamma, zeros for beta)
        w0, _ = _init_linear_params(lk[4], style_dim, 2 * D)
        lp["saln0_w"] = w0
        lp["saln0_b"] = jnp.concatenate([jnp.ones((D,)), jnp.zeros((D,))]).astype(jnp.float32)
        w1, _ = _init_linear_params(lk[5], style_dim, 2 * D)
        lp["saln1_w"] = w1
        lp["saln1_b"] = jnp.concatenate([jnp.ones((D,)), jnp.zeros((D,))]).astype(jnp.float32)
        lp["conv1_w"], lp["conv1_b"] = _init_conv_params(lk[6], k1, D, d_inner)
        lp["conv2_w"], lp["conv2_b"] = _init_conv_params(lk[7], k2, d_inner, D)
        layers.append(lp)
    params["layers"] = layers
    return params


def pack_params(params, cfg):
    """Repack weights for the fused kernel (done once, host-side)."""
    D = cfg["d_model"]
    H = cfg["n_head"]
    dk = D // H
    K1, K2 = cfg["fft_kernel"]
    assert K1 % 2 == 1, "conv 'same' packing assumes an odd first kernel size"
    assert K2 == 1, "second FFN conv assumed pointwise (fft_conv1d_kernel_size=(9,1))"
    inv_temp = 1.0 / float(D) ** 0.5          # StyleSpeech temperature = sqrt(d_model)
    layers = params["layers"]

    def row128(vec):
        vec = jnp.asarray(vec, jnp.float32).reshape(-1)
        assert vec.shape[0] <= 128
        return jnp.pad(vec, (0, 128 - vec.shape[0]))

    packed = {
        "prenet_w1": params["prenet_w1"],
        "prenet_w2": params["prenet_w2"],
        "fc_hi_w": jnp.pad(params["fc_hi_w"], ((0, 0), (0, OUT_PAD - _NMEL))),
    }

    # Q/K/V weights: (L*3*H, D, dk); head on a leading axis; temperature folded into Q.
    qkv = []
    for lp in layers:
        for name, scale in (("wq", inv_temp), ("wk", 1.0), ("wv", 1.0)):
            for h in range(H):
                qkv.append(lp[name][:, h * dk:(h + 1) * dk] * scale)
    packed["qkv_w"] = jnp.stack(qkv)

    # attention output projection per head: (L*H, dk, D)
    packed["fc_w"] = jnp.stack([lp["fc_w"][h * dk:(h + 1) * dk, :]
                                for lp in layers for h in range(H)])

    # conv weights: conv1 per tap (L*K1, D, d_inner); conv2 pointwise (L, d_inner, D)
    packed["c1_w"] = jnp.stack([lp["conv1_w"][k] for lp in layers for k in range(K1)])
    packed["c2_w"] = jnp.stack([lp["conv2_w"][0] for lp in layers])

    # every bias vector packed into one lane-dense (rows, 128) array
    rows = [row128(params["prenet_b1"]),
            row128(params["prenet_b2"]),
            row128(params["fc_hi_b"])]
    for lp in layers:
        rows.append(row128(lp["fc_b"]))
        rows.append(row128(lp["conv1_b"]))
        rows.append(row128(lp["conv2_b"]))
        for h in range(H):
            rows.append(row128(lp["bq"][h * dk:(h + 1) * dk] * inv_temp))
            rows.append(row128(lp["bk"][h * dk:(h + 1) * dk]))
            rows.append(row128(lp["bv"][h * dk:(h + 1) * dk]))
    while len(rows) % 8:
        rows.append(jnp.zeros((128,), jnp.float32))
    packed["biases"] = jnp.stack(rows)

    # SALN style projections batched: style @ saln_w + saln_b -> [g0,b0,g1,b1] per layer
    packed["saln_w"] = jnp.concatenate(
        [jnp.concatenate([lp["saln0_w"], lp["saln1_w"]], axis=1) for lp in layers], axis=1)
    packed["saln_b"] = jnp.concatenate(
        [jnp.concatenate([lp["saln0_b"], lp["saln1_b"]]) for lp in layers])
    return packed


# -------------------------- pure-JAX reference -----------------------------

def reference_forward(params, enc_seq, style_vector, mask, cfg):
    B, T, D = enc_seq.shape
    H = cfg["n_head"]
    dk = D // H
    temp = float(D) ** 0.5
    keep = (~mask).astype(jnp.float32)[:, :, None]
    neg = mask.astype(jnp.float32)[:, None, :] * (-1e9)

    def saln(x, g, b, eps=1e-5):
        mu = x.mean(-1, keepdims=True)
        var = ((x - mu) ** 2).mean(-1, keepdims=True)
        return g[:, None, :] * ((x - mu) * jax.lax.rsqrt(var + eps)) + b[:, None, :]

    def conv_same(x, w, b):
        K = w.shape[0]
        pad = (K - 1) // 2
        xp = jnp.pad(x, ((0, 0), (pad, pad), (0, 0)))
        acc = jnp.zeros((B, T, w.shape[-1]), jnp.float32)
        for k in range(K):
            acc = acc + jnp.einsum("btc,cd->btd", xp[:, k:k + T], w[k])
        return acc + b

    x = jnp.maximum(enc_seq @ params["prenet_w1"] + params["prenet_b1"], 0.0)
    x = x @ params["prenet_w2"] + params["prenet_b2"]

    for lp in params["layers"]:
        res = x
        q = (x @ lp["wq"] + lp["bq"]).reshape(B, T, H, dk).transpose(0, 2, 1, 3)
        k = (x @ lp["wk"] + lp["bk"]).reshape(B, T, H, dk).transpose(0, 2, 1, 3)
        v = (x @ lp["wv"] + lp["bv"]).reshape(B, T, H, dk).transpose(0, 2, 1, 3)
        s = jnp.einsum("bhtd,bhsd->bhts", q, k) / temp + neg[:, None, :, :]
        p = jax.nn.softmax(s, axis=-1)
        o = jnp.einsum("bhts,bhsd->bhtd", p, v).transpose(0, 2, 1, 3).reshape(B, T, D)
        out = o @ lp["fc_w"] + lp["fc_b"] + res

        style0 = style_vector @ lp["saln0_w"] + lp["saln0_b"]
        out = saln(out, style0[:, :D], style0[:, D:]) * keep

        res2 = out
        h = conv_same(out, lp["conv1_w"], lp["conv1_b"])
        h = h * jnp.tanh(jax.nn.softplus(h))                     # Mish
        h = conv_same(h, lp["conv2_w"], lp["conv2_b"])
        out = h + res2

        style1 = style_vector @ lp["saln1_w"] + lp["saln1_b"]
        x = saln(out, style1[:, :D], style1[:, D:]) * keep

    mel = x @ params["fc_hi_w"] + params["fc_hi_b"]
    return mel * keep


# ---------------------------------- main ------------------------------------

if __name__ == "__main__":
    cfg = dict(
        d_model=32,         # decoder_hidden
        n_head=2,           # decoder_head
        d_inner=64,         # fft_conv1d_filter_size
        fft_kernel=(9, 1),  # fft_conv1d_kernel_size
        style_dim=16,       # style_vector_dim
        n_layers=2,         # decoder_layer
    )
    B, T = 2, 16

    key = jax.random.PRNGKey(0)
    kp, ke, ks = jax.random.split(key, 3)
    params = init_params(kp, cfg)
    packed = pack_params(params, cfg)

    enc_seq = jax.random.normal(ke, (B, T, cfg["d_model"]), jnp.float32)
    style_vector = jax.random.normal(ks, (B, cfg["style_dim"]), jnp.float32)
    lengths = jnp.array([16, 12], dtype=jnp.int32)
    mask = jnp.arange(T)[None, :] >= lengths[:, None]            # True = padded

    fwd = jax.jit(functools.partial(high_decoder_forward, cfg=cfg))
    mel_high, _ = fwd(packed, enc_seq, style_vector, mask)
    mel_high = jax.block_until_ready(mel_high)

    mel_ref = jax.jit(functools.partial(reference_forward, cfg=cfg))(
        params, enc_seq, style_vector, mask)
    mel_ref = jax.block_until_ready(mel_ref)

    assert mel_high.shape == (B, T, _NMEL)
    assert bool(jnp.all(jnp.isfinite(mel_high)))
    max_err = float(jnp.max(jnp.abs(mel_high - mel_ref)))
    assert max_err < 5e-3, f"mismatch vs pure-JAX reference: {max_err}"
    print("KERNEL_OK")
</pallas_src>

<mosaic_0001>
module attributes {stable_mosaic.version = 11 : i64} {
  func.func @_decoder_kernel(%arg0: memref<32x32xf32, #tpu.memory_space<vmem>>, %arg1: memref<32x1xf32, #tpu.memory_space<vmem>>, %arg2: memref<2x16xf32, #tpu.memory_space<vmem>>, %arg3: memref<9x32x1xf32, #tpu.memory_space<vmem>>, %arg4: memref<8x32x32xf32, #tpu.memory_space<vmem>>, %arg5: memref<32x16xf32, #tpu.memory_space<vmem>>, %arg6: memref<16x32xf32, #tpu.memory_space<vmem>>, %arg7: memref<12x32x16xf32, #tpu.memory_space<vmem>>, %arg8: memref<4x16x32xf32, #tpu.memory_space<vmem>>, %arg9: memref<18x32x64xf32, #tpu.memory_space<vmem>>, %arg10: memref<2x64x32xf32, #tpu.memory_space<vmem>>, %arg11: memref<32x128xf32, #tpu.memory_space<vmem>>, %arg12: memref<24x128xf32, #tpu.memory_space<vmem>>, %arg13: memref<32x128xf32, #tpu.memory_space<vmem>>) attributes {dimension_semantics = [], scalar_prefetch = 0 : i64, scratch_operands = 0 : i64, tpu.core_type = #tpu.core_type<tc>} {
    %c0 = arith.constant 0 : index
    %c0_0 = arith.constant 0 : index
    %0 = vector.load %arg0[%c0, %c0_0] : memref<32x32xf32, #tpu.memory_space<vmem>>, vector<32x32xf32>
    %c0_1 = arith.constant 0 : index
    %c0_2 = arith.constant 0 : index
    %1 = vector.load %arg1[%c0_1, %c0_2] : memref<32x1xf32, #tpu.memory_space<vmem>>, vector<32x1xf32>
    %c0_3 = arith.constant 0 : index
    %c0_4 = arith.constant 0 : index
    %2 = vector.load %arg2[%c0_3, %c0_4] : memref<2x16xf32, #tpu.memory_space<vmem>>, vector<2x16xf32>
    %c0_5 = arith.constant 0 : index
    %c0_6 = arith.constant 0 : index
    %c0_7 = arith.constant 0 : index
    %3 = vector.load %arg3[%c0_5, %c0_6, %c0_7] : memref<9x32x1xf32, #tpu.memory_space<vmem>>, vector<1x32x1xf32>
    %4 = vector.shape_cast %3 : vector<1x32x1xf32> to vector<32x1xf32>
    %c1 = arith.constant 1 : index
    %c0_8 = arith.constant 0 : index
    %c0_9 = arith.constant 0 : index
    %5 = vector.load %arg3[%c1, %c0_8, %c0_9] : memref<9x32x1xf32, #tpu.memory_space<vmem>>, vector<1x32x1xf32>
    %6 = vector.shape_cast %5 : vector<1x32x1xf32> to vector<32x1xf32>
    %c2 = arith.constant 2 : index
    %c0_10 = arith.constant 0 : index
    %c0_11 = arith.constant 0 : index
    %7 = vector.load %arg3[%c2, %c0_10, %c0_11] : memref<9x32x1xf32, #tpu.memory_space<vmem>>, vector<1x32x1xf32>
    %8 = vector.shape_cast %7 : vector<1x32x1xf32> to vector<32x1xf32>
    %c3 = arith.constant 3 : index
    %c0_12 = arith.constant 0 : index
    %c0_13 = arith.constant 0 : index
    %9 = vector.load %arg3[%c3, %c0_12, %c0_13] : memref<9x32x1xf32, #tpu.memory_space<vmem>>, vector<1x32x1xf32>
    %10 = vector.shape_cast %9 : vector<1x32x1xf32> to vector<32x1xf32>
    %c5 = arith.constant 5 : index
    %c0_14 = arith.constant 0 : index
    %c0_15 = arith.constant 0 : index
    %11 = vector.load %arg3[%c5, %c0_14, %c0_15] : memref<9x32x1xf32, #tpu.memory_space<vmem>>, vector<1x32x1xf32>
    %12 = vector.shape_cast %11 : vector<1x32x1xf32> to vector<32x1xf32>
    %c6 = arith.constant 6 : index
    %c0_16 = arith.constant 0 : index
    %c0_17 = arith.constant 0 : index
    %13 = vector.load %arg3[%c6, %c0_16, %c0_17] : memref<9x32x1xf32, #tpu.memory_space<vmem>>, vector<1x32x1xf32>
    %14 = vector.shape_cast %13 : vector<1x32x1xf32> to vector<32x1xf32>
    %c7 = arith.constant 7 : index
    %c0_18 = arith.constant 0 : index
    %c0_19 = arith.constant 0 : index
    %15 = vector.load %arg3[%c7, %c0_18, %c0_19] : memref<9x32x1xf32, #tpu.memory_space<vmem>>, vector<1x32x1xf32>
    %16 = vector.shape_cast %15 : vector<1x32x1xf32> to vector<32x1xf32>
    %c8 = arith.constant 8 : index
    %c0_20 = arith.constant 0 : index
    %c0_21 = arith.constant 0 : index
    %17 = vector.load %arg3[%c8, %c0_20, %c0_21] : memref<9x32x1xf32, #tpu.memory_space<vmem>>, vector<1x32x1xf32>
    %18 = vector.shape_cast %17 : vector<1x32x1xf32> to vector<32x1xf32>
    %c0_22 = arith.constant 0 : index
    %c0_23 = arith.constant 0 : index
    %19 = vector.load %arg5[%c0_22, %c0_23] : memref<32x16xf32, #tpu.memory_space<vmem>>, vector<32x16xf32>
    %cst = arith.constant dense<0.000000e+00> : vector<32x16xf32>
    %20 = tpu.matmul %0, %19, %cst {dimension_numbers = #tpu.dot_dimension_numbers<[1], [0], [0], [1], [0, 0, 1, 1], [], []>} : vector<32x32xf32>, vector<32x16xf32>, vector<32x16xf32> -> vector<32x16xf32>
    %c0_24 = arith.constant 0 : index
    %c0_25 = arith.constant 0 : index
    %21 = vector.load %arg12[%c0_24, %c0_25] : memref<24x128xf32, #tpu.memory_space<vmem>>, vector<1x16xf32>
    %22 = vector.broadcast %21 : vector<1x16xf32> to vector<32x16xf32>
    %23 = arith.addf %20, %22 : vector<32x16xf32>
    %cst_26 = arith.constant 0.000000e+00 : f32
    %24 = vector.broadcast %cst_26 : f32 to vector<32x16xf32>
    %25 = arith.maximumf %23, %24 : vector<32x16xf32>
    %c0_27 = arith.constant 0 : index
    %c0_28 = arith.constant 0 : index
    %26 = vector.load %arg6[%c0_27, %c0_28] : memref<16x32xf32, #tpu.memory_space<vmem>>, vector<16x32xf32>
    %cst_29 = arith.constant dense<0.000000e+00> : vector<32x32xf32>
    %27 = tpu.matmul %25, %26, %cst_29 {dimension_numbers = #tpu.dot_dimension_numbers<[1], [0], [0], [1], [0, 0, 1, 1], [], []>} : vector<32x16xf32>, vector<16x32xf32>, vector<32x32xf32> -> vector<32x32xf32>
    %c1_30 = arith.constant 1 : index
    %c0_31 = arith.constant 0 : index
    %28 = vector.load %arg12[%c1_30, %c0_31] : memref<24x128xf32, #tpu.memory_space<vmem>>, vector<1x32xf32>
    %29 = vector.broadcast %28 : vector<1x32xf32> to vector<32x32xf32>
    %30 = arith.addf %27, %29 : vector<32x32xf32>
    %c0_32 = arith.constant 0 : index
    %c0_33 = arith.constant 0 : index
    %c0_34 = arith.constant 0 : index
    %31 = vector.load %arg7[%c0_32, %c0_33, %c0_34] : memref<12x32x16xf32, #tpu.memory_space<vmem>>, vector<1x32x16xf32>
    %32 = vector.shape_cast %31 : vector<1x32x16xf32> to vector<32x16xf32>
    %cst_35 = arith.constant dense<0.000000e+00> : vector<32x16xf32>
    %33 = tpu.matmul %30, %32, %cst_35 {dimension_numbers = #tpu.dot_dimension_numbers<[1], [0], [0], [1], [0, 0, 1, 1], [], []>} : vector<32x32xf32>, vector<32x16xf32>, vector<32x16xf32> -> vector<32x16xf32>
    %c6_36 = arith.constant 6 : index
    %c0_37 = arith.constant 0 : index
    %34 = vector.load %arg12[%c6_36, %c0_37] : memref<24x128xf32, #tpu.memory_space<vmem>>, vector<1x16xf32>
    %35 = vector.broadcast %34 : vector<1x16xf32> to vector<32x16xf32>
    %36 = arith.addf %33, %35 : vector<32x16xf32>
    %c2_38 = arith.constant 2 : index
    %c0_39 = arith.constant 0 : index
    %c0_40 = arith.constant 0 : index
    %37 = vector.load %arg7[%c2_38, %c0_39, %c0_40] : memref<12x32x16xf32, #tpu.memory_space<vmem>>, vector<1x32x16xf32>
    %38 = vector.shape_cast %37 : vector<1x32x16xf32> to vector<32x16xf32>
    %cst_41 = arith.constant dense<0.000000e+00> : vector<32x16xf32>
    %39 = tpu.matmul %30, %38, %cst_41 {dimension_numbers = #tpu.dot_dimension_numbers<[1], [0], [0], [1], [0, 0, 1, 1], [], []>} : vector<32x32xf32>, vector<32x16xf32>, vector<32x16xf32> -> vector<32x16xf32>
    %c7_42 = arith.constant 7 : index
    %c0_43 = arith.constant 0 : index
    %40 = vector.load %arg12[%c7_42, %c0_43] : memref<24x128xf32, #tpu.memory_space<vmem>>, vector<1x16xf32>
    %41 = vector.broadcast %40 : vector<1x16xf32> to vector<32x16xf32>
    %42 = arith.addf %39, %41 : vector<32x16xf32>
    %c4 = arith.constant 4 : index
    %c0_44 = arith.constant 0 : index
    %c0_45 = arith.constant 0 : index
    %43 = vector.load %arg7[%c4, %c0_44, %c0_45] : memref<12x32x16xf32, #tpu.memory_space<vmem>>, vector<1x32x16xf32>
    %44 = vector.shape_cast %43 : vector<1x32x16xf32> to vector<32x16xf32>
    %cst_46 = arith.constant dense<0.000000e+00> : vector<32x16xf32>
    %45 = tpu.matmul %30, %44, %cst_46 {dimension_numbers = #tpu.dot_dimension_numbers<[1], [0], [0], [1], [0, 0, 1, 1], [], []>} : vector<32x32xf32>, vector<32x16xf32>, vector<32x16xf32> -> vector<32x16xf32>
    %c8_47 = arith.constant 8 : index
    %c0_48 = arith.constant 0 : index
    %46 = vector.load %arg12[%c8_47, %c0_48] : memref<24x128xf32, #tpu.memory_space<vmem>>, vector<1x16xf32>
    %47 = vector.broadcast %46 : vector<1x16xf32> to vector<32x16xf32>
    %48 = arith.addf %45, %47 : vector<32x16xf32>
    %49 = vector.extract_strided_slice %36 {offsets = [0, 0], sizes = [16, 16], strides = [1, 1]} : vector<32x16xf32> to vector<16x16xf32>
    %50 = vector.extract_strided_slice %42 {offsets = [0, 0], sizes = [16, 16], strides = [1, 1]} : vector<32x16xf32> to vector<16x16xf32>
    %cst_49 = arith.constant dense<0.000000e+00> : vector<16x16xf32>
    %51 = tpu.matmul %49, %50, %cst_49 {dimension_numbers = #tpu.dot_dimension_numbers<[1], [1], [0], [0], [0, 0, 1, 0], [], []>} : vector<16x16xf32>, vector<16x16xf32>, vector<16x16xf32> -> vector<16x16xf32>
    %52 = vector.extract_strided_slice %2 {offsets = [0, 0], sizes = [1, 16], strides = [1, 1]} : vector<2x16xf32> to vector<1x16xf32>
    %53 = vector.broadcast %52 : vector<1x16xf32> to vector<16x16xf32>
    %54 = arith.addf %51, %53 : vector<16x16xf32>
    %cst_50 = arith.constant dense<0xFF800000> : vector<16xf32>
    %55 = vector.multi_reduction <maximumf>, %54, %cst_50 [1] : vector<16x16xf32> to vector<16xf32>
    %56 = vector.shape_cast %55 : vector<16xf32> to vector<16x1xf32>
    %57 = vector.broadcast %56 : vector<16x1xf32> to vector<16x16xf32>
    %58 = arith.subf %54, %57 : vector<16x16xf32>
    %59 = math.exp %58 : vector<16x16xf32>
    %cst_51 = arith.constant dense<0.000000e+00> : vector<16xf32>
    %60 = vector.multi_reduction <add>, %59, %cst_51 [1] : vector<16x16xf32> to vector<16xf32>
    %61 = vector.shape_cast %60 : vector<16xf32> to vector<16x1xf32>
    %62 = tpu.reciprocal %61 {approx = true} : vector<16x1xf32> -> vector<16x1xf32>
    %63 = vector.broadcast %62 : vector<16x1xf32> to vector<16x16xf32>
    %64 = arith.mulf %59, %63 : vector<16x16xf32>
    %65 = vector.extract_strided_slice %48 {offsets = [0, 0], sizes = [16, 16], strides = [1, 1]} : vector<32x16xf32> to vector<16x16xf32>
    %cst_52 = arith.constant dense<0.000000e+00> : vector<16x16xf32>
    %66 = tpu.matmul %64, %65, %cst_52 {dimension_numbers = #tpu.dot_dimension_numbers<[1], [0], [0], [1], [0, 0, 1, 1], [], []>} : vector<16x16xf32>, vector<16x16xf32>, vector<16x16xf32> -> vector<16x16xf32>
    %c0_53 = arith.constant 0 : index
    %c0_54 = arith.constant 0 : index
    %c0_55 = arith.constant 0 : index
    %67 = vector.load %arg8[%c0_53, %c0_54, %c0_55] : memref<4x16x32xf32, #tpu.memory_space<vmem>>, vector<1x16x32xf32>
    %68 = vector.shape_cast %67 : vector<1x16x32xf32> to vector<16x32xf32>
    %cst_56 = arith.constant dense<0.000000e+00> : vector<16x32xf32>
    %69 = tpu.matmul %66, %68, %cst_56 {dimension_numbers = #tpu.dot_dimension_numbers<[1], [0], [0], [1], [0, 0, 1, 1], [], []>} : vector<16x16xf32>, vector<16x32xf32>, vector<16x32xf32> -> vector<16x32xf32>
    %70 = vector.extract_strided_slice %36 {offsets = [16, 0], sizes = [16, 16], strides = [1, 1]} : vector<32x16xf32> to vector<16x16xf32>
    %71 = vector.extract_strided_slice %42 {offsets = [16, 0], sizes = [16, 16], strides = [1, 1]} : vector<32x16xf32> to vector<16x16xf32>
    %cst_57 = arith.constant dense<0.000000e+00> : vector<16x16xf32>
    %72 = tpu.matmul %70, %71, %cst_57 {dimension_numbers = #tpu.dot_dimension_numbers<[1], [1], [0], [0], [0, 0, 1, 0], [], []>} : vector<16x16xf32>, vector<16x16xf32>, vector<16x16xf32> -> vector<16x16xf32>
    %73 = vector.extract_strided_slice %2 {offsets = [1, 0], sizes = [1, 16], strides = [1, 1]} : vector<2x16xf32> to vector<1x16xf32>
    %74 = vector.broadcast %73 : vector<1x16xf32> to vector<16x16xf32>
    %75 = arith.addf %72, %74 : vector<16x16xf32>
    %cst_58 = arith.constant dense<0xFF800000> : vector<16xf32>
    %76 = vector.multi_reduction <maximumf>, %75, %cst_58 [1] : vector<16x16xf32> to vector<16xf32>
    %77 = vector.shape_cast %76 : vector<16xf32> to vector<16x1xf32>
    %78 = vector.broadcast %77 : vector<16x1xf32> to vector<16x16xf32>
    %79 = arith.subf %75, %78 : vector<16x16xf32>
    %80 = math.exp %79 : vector<16x16xf32>
    %cst_59 = arith.constant dense<0.000000e+00> : vector<16xf32>
    %81 = vector.multi_reduction <add>, %80, %cst_59 [1] : vector<16x16xf32> to vector<16xf32>
    %82 = vector.shape_cast %81 : vector<16xf32> to vector<16x1xf32>
    %83 = tpu.reciprocal %82 {approx = true} : vector<16x1xf32> -> vector<16x1xf32>
    %84 = vector.broadcast %83 : vector<16x1xf32> to vector<16x16xf32>
    %85 = arith.mulf %80, %84 : vector<16x16xf32>
    %86 = vector.extract_strided_slice %48 {offsets = [16, 0], sizes = [16, 16], strides = [1, 1]} : vector<32x16xf32> to vector<16x16xf32>
    %cst_60 = arith.constant dense<0.000000e+00> : vector<16x16xf32>
    %87 = tpu.matmul %85, %86, %cst_60 {dimension_numbers = #tpu.dot_dimension_numbers<[1], [0], [0], [1], [0, 0, 1, 1], [], []>} : vector<16x16xf32>, vector<16x16xf32>, vector<16x16xf32> -> vector<16x16xf32>
    %c0_61 = arith.constant 0 : index
    %c0_62 = arith.constant 0 : index
    %c0_63 = arith.constant 0 : index
    %88 = vector.load %arg8[%c0_61, %c0_62, %c0_63] : memref<4x16x32xf32, #tpu.memory_space<vmem>>, vector<1x16x32xf32>
    %89 = vector.shape_cast %88 : vector<1x16x32xf32> to vector<16x32xf32>
    %cst_64 = arith.constant dense<0.000000e+00> : vector<16x32xf32>
    %90 = tpu.matmul %87, %89, %cst_64 {dimension_numbers = #tpu.dot_dimension_numbers<[1], [0], [0], [1], [0, 0, 1, 1], [], []>} : vector<16x16xf32>, vector<16x32xf32>, vector<16x32xf32> -> vector<16x32xf32>
    %c1_65 = arith.constant 1 : index
    %c0_66 = arith.constant 0 : index
    %c0_67 = arith.constant 0 : index
    %91 = vector.load %arg7[%c1_65, %c0_66, %c0_67] : memref<12x32x16xf32, #tpu.memory_space<vmem>>, vector<1x32x16xf32>
    %92 = vector.shape_cast %91 : vector<1x32x16xf32> to vector<32x16xf32>
    %cst_68 = arith.constant dense<0.000000e+00> : vector<32x16xf32>
    %93 = tpu.matmul %30, %92, %cst_68 {dimension_numbers = #tpu.dot_dimension_numbers<[1], [0], [0], [1], [0, 0, 1, 1], [], []>} : vector<32x32xf32>, vector<32x16xf32>, vector<32x16xf32> -> vector<32x16xf32>
    %c9 = arith.constant 9 : index
    %c0_69 = arith.constant 0 : index
    %94 = vector.load %arg12[%c9, %c0_69] : memref<24x128xf32, #tpu.memory_space<vmem>>, vector<1x16xf32>
    %95 = vector.broadcast %94 : vector<1x16xf32> to vector<32x16xf32>
    %96 = arith.addf %93, %95 : vector<32x16xf32>
    %c3_70 = arith.constant 3 : index
    %c0_71 = arith.constant 0 : index
    %c0_72 = arith.constant 0 : index
    %97 = vector.load %arg7[%c3_70, %c0_71, %c0_72] : memref<12x32x16xf32, #tpu.memory_space<vmem>>, vector<1x32x16xf32>
    %98 = vector.shape_cast %97 : vector<1x32x16xf32> to vector<32x16xf32>
    %cst_73 = arith.constant dense<0.000000e+00> : vector<32x16xf32>
    %99 = tpu.matmul %30, %98, %cst_73 {dimension_numbers = #tpu.dot_dimension_numbers<[1], [0], [0], [1], [0, 0, 1, 1], [], []>} : vector<32x32xf32>, vector<32x16xf32>, vector<32x16xf32> -> vector<32x16xf32>
    %c10 = arith.constant 10 : index
    %c0_74 = arith.constant 0 : index
    %100 = vector.load %arg12[%c10, %c0_74] : memref<24x128xf32, #tpu.memory_space<vmem>>, vector<1x16xf32>
    %101 = vector.broadcast %100 : vector<1x16xf32> to vector<32x16xf32>
    %102 = arith.addf %99, %101 : vector<32x16xf32>
    %c5_75 = arith.constant 5 : index
    %c0_76 = arith.constant 0 : index
    %c0_77 = arith.constant 0 : index
    %103 = vector.load %arg7[%c5_75, %c0_76, %c0_77] : memref<12x32x16xf32, #tpu.memory_space<vmem>>, vector<1x32x16xf32>
    %104 = vector.shape_cast %103 : vector<1x32x16xf32> to vector<32x16xf32>
    %cst_78 = arith.constant dense<0.000000e+00> : vector<32x16xf32>
    %105 = tpu.matmul %30, %104, %cst_78 {dimension_numbers = #tpu.dot_dimension_numbers<[1], [0], [0], [1], [0, 0, 1, 1], [], []>} : vector<32x32xf32>, vector<32x16xf32>, vector<32x16xf32> -> vector<32x16xf32>
    %c11 = arith.constant 11 : index
    %c0_79 = arith.constant 0 : index
    %106 = vector.load %arg12[%c11, %c0_79] : memref<24x128xf32, #tpu.memory_space<vmem>>, vector<1x16xf32>
    %107 = vector.broadcast %106 : vector<1x16xf32> to vector<32x16xf32>
    %108 = arith.addf %105, %107 : vector<32x16xf32>
    %109 = vector.extract_strided_slice %96 {offsets = [0, 0], sizes = [16, 16], strides = [1, 1]} : vector<32x16xf32> to vector<16x16xf32>
    %110 = vector.extract_strided_slice %102 {offsets = [0, 0], sizes = [16, 16], strides = [1, 1]} : vector<32x16xf32> to vector<16x16xf32>
    %cst_80 = arith.constant dense<0.000000e+00> : vector<16x16xf32>
    %111 = tpu.matmul %109, %110, %cst_80 {dimension_numbers = #tpu.dot_dimension_numbers<[1], [1], [0], [0], [0, 0, 1, 0], [], []>} : vector<16x16xf32>, vector<16x16xf32>, vector<16x16xf32> -> vector<16x16xf32>
    %112 = vector.extract_strided_slice %2 {offsets = [0, 0], sizes = [1, 16], strides = [1, 1]} : vector<2x16xf32> to vector<1x16xf32>
    %113 = vector.broadcast %112 : vector<1x16xf32> to vector<16x16xf32>
    %114 = arith.addf %111, %113 : vector<16x16xf32>
    %cst_81 = arith.constant dense<0xFF800000> : vector<16xf32>
    %115 = vector.multi_reduction <maximumf>, %114, %cst_81 [1] : vector<16x16xf32> to vector<16xf32>
    %116 = vector.shape_cast %115 : vector<16xf32> to vector<16x1xf32>
    %117 = vector.broadcast %116 : vector<16x1xf32> to vector<16x16xf32>
    %118 = arith.subf %114, %117 : vector<16x16xf32>
    %119 = math.exp %118 : vector<16x16xf32>
    %cst_82 = arith.constant dense<0.000000e+00> : vector<16xf32>
    %120 = vector.multi_reduction <add>, %119, %cst_82 [1] : vector<16x16xf32> to vector<16xf32>
    %121 = vector.shape_cast %120 : vector<16xf32> to vector<16x1xf32>
    %122 = tpu.reciprocal %121 {approx = true} : vector<16x1xf32> -> vector<16x1xf32>
    %123 = vector.broadcast %122 : vector<16x1xf32> to vector<16x16xf32>
    %124 = arith.mulf %119, %123 : vector<16x16xf32>
    %125 = vector.extract_strided_slice %108 {offsets = [0, 0], sizes = [16, 16], strides = [1, 1]} : vector<32x16xf32> to vector<16x16xf32>
    %cst_83 = arith.constant dense<0.000000e+00> : vector<16x16xf32>
    %126 = tpu.matmul %124, %125, %cst_83 {dimension_numbers = #tpu.dot_dimension_numbers<[1], [0], [0], [1], [0, 0, 1, 1], [], []>} : vector<16x16xf32>, vector<16x16xf32>, vector<16x16xf32> -> vector<16x16xf32>
    %c1_84 = arith.constant 1 : index
    %c0_85 = arith.constant 0 : index
    %c0_86 = arith.constant 0 : index
    %127 = vector.load %arg8[%c1_84, %c0_85, %c0_86] : memref<4x16x32xf32, #tpu.memory_space<vmem>>, vector<1x16x32xf32>
    %128 = vector.shape_cast %127 : vector<1x16x32xf32> to vector<16x32xf32>
    %cst_87 = arith.constant dense<0.000000e+00> : vector<16x32xf32>
    %129 = tpu.matmul %126, %128, %cst_87 {dimension_numbers = #tpu.dot_dimension_numbers<[1], [0], [0], [1], [0, 0, 1, 1], [], []>} : vector<16x16xf32>, vector<16x32xf32>, vector<16x32xf32> -> vector<16x32xf32>
    %130 = arith.addf %69, %129 : vector<16x32xf32>
    %131 = vector.extract_strided_slice %96 {offsets = [16, 0], sizes = [16, 16], strides = [1, 1]} : vector<32x16xf32> to vector<16x16xf32>
    %132 = vector.extract_strided_slice %102 {offsets = [16, 0], sizes = [16, 16], strides = [1, 1]} : vector<32x16xf32> to vector<16x16xf32>
    %cst_88 = arith.constant dense<0.000000e+00> : vector<16x16xf32>
    %133 = tpu.matmul %131, %132, %cst_88 {dimension_numbers = #tpu.dot_dimension_numbers<[1], [1], [0], [0], [0, 0, 1, 0], [], []>} : vector<16x16xf32>, vector<16x16xf32>, vector<16x16xf32> -> vector<16x16xf32>
    %134 = vector.extract_strided_slice %2 {offsets = [1, 0], sizes = [1, 16], strides = [1, 1]} : vector<2x16xf32> to vector<1x16xf32>
    %135 = vector.broadcast %134 : vector<1x16xf32> to vector<16x16xf32>
    %136 = arith.addf %133, %135 : vector<16x16xf32>
    %cst_89 = arith.constant dense<0xFF800000> : vector<16xf32>
    %137 = vector.multi_reduction <maximumf>, %136, %cst_89 [1] : vector<16x16xf32> to vector<16xf32>
    %138 = vector.shape_cast %137 : vector<16xf32> to vector<16x1xf32>
    %139 = vector.broadcast %138 : vector<16x1xf32> to vector<16x16xf32>
    %140 = arith.subf %136, %139 : vector<16x16xf32>
    %141 = math.exp %140 : vector<16x16xf32>
    %cst_90 = arith.constant dense<0.000000e+00> : vector<16xf32>
    %142 = vector.multi_reduction <add>, %141, %cst_90 [1] : vector<16x16xf32> to vector<16xf32>
    %143 = vector.shape_cast %142 : vector<16xf32> to vector<16x1xf32>
    %144 = tpu.reciprocal %143 {approx = true} : vector<16x1xf32> -> vector<16x1xf32>
    %145 = vector.broadcast %144 : vector<16x1xf32> to vector<16x16xf32>
    %146 = arith.mulf %141, %145 : vector<16x16xf32>
    %147 = vector.extract_strided_slice %108 {offsets = [16, 0], sizes = [16, 16], strides = [1, 1]} : vector<32x16xf32> to vector<16x16xf32>
    %cst_91 = arith.constant dense<0.000000e+00> : vector<16x16xf32>
    %148 = tpu.matmul %146, %147, %cst_91 {dimension_numbers = #tpu.dot_dimension_numbers<[1], [0], [0], [1], [0, 0, 1, 1], [], []>} : vector<16x16xf32>, vector<16x16xf32>, vector<16x16xf32> -> vector<16x16xf32>
    %c1_92 = arith.constant 1 : index
    %c0_93 = arith.constant 0 : index
    %c0_94 = arith.constant 0 : index
    %149 = vector.load %arg8[%c1_92, %c0_93, %c0_94] : memref<4x16x32xf32, #tpu.memory_space<vmem>>, vector<1x16x32xf32>
    %150 = vector.shape_cast %149 : vector<1x16x32xf32> to vector<16x32xf32>
    %cst_95 = arith.constant dense<0.000000e+00> : vector<16x32xf32>
    %151 = tpu.matmul %148, %150, %cst_95 {dimension_numbers = #tpu.dot_dimension_numbers<[1], [0], [0], [1], [0, 0, 1, 1], [], []>} : vector<16x16xf32>, vector<16x32xf32>, vector<16x32xf32> -> vector<16x32xf32>
    %152 = arith.addf %90, %151 : vector<16x32xf32>
    %153 = tpu.concatenate %130, %152 in 0 : vector<16x32xf32>, vector<16x32xf32> -> vector<32x32xf32>
    %c3_96 = arith.constant 3 : index
    %c0_97 = arith.constant 0 : index
    %154 = vector.load %arg12[%c3_96, %c0_97] : memref<24x128xf32, #tpu.memory_space<vmem>>, vector<1x32xf32>
    %155 = vector.broadcast %154 : vector<1x32xf32> to vector<32x32xf32>
    %156 = arith.addf %153, %155 : vector<32x32xf32>
    %157 = arith.addf %156, %30 : vector<32x32xf32>
    %c0_98 = arith.constant 0 : index
    %c0_99 = arith.constant 0 : index
    %c0_100 = arith.constant 0 : index
    %158 = vector.load %arg4[%c0_98, %c0_99, %c0_100] : memref<8x32x32xf32, #tpu.memory_space<vmem>>, vector<1x32x32xf32>
    %159 = vector.shape_cast %158 : vector<1x32x32xf32> to vector<32x32xf32>
    %c1_101 = arith.constant 1 : index
    %c0_102 = arith.constant 0 : index
    %c0_103 = arith.constant 0 : index
    %160 = vector.load %arg4[%c1_101, %c0_102, %c0_103] : memref<8x32x32xf32, #tpu.memory_space<vmem>>, vector<1x32x32xf32>
    %161 = vector.shape_cast %160 : vector<1x32x32xf32> to vector<32x32xf32>
    %cst_104 = arith.constant dense<0.000000e+00> : vector<32xf32>
    %162 = vector.multi_reduction <add>, %157, %cst_104 [1] : vector<32x32xf32> to vector<32xf32>
    %163 = vector.shape_cast %162 : vector<32xf32> to vector<32x1xf32>
    %cst_105 = arith.constant 3.200000e+01 : f32
    %164 = vector.broadcast %cst_105 : f32 to vector<32x1xf32>
    %165 = arith.divf %163, %164 : vector<32x1xf32>
    %166 = vector.broadcast %165 : vector<32x1xf32> to vector<32x32xf32>
    %167 = arith.subf %157, %166 : vector<32x32xf32>
    %168 = arith.mulf %167, %167 : vector<32x32xf32>
    %cst_106 = arith.constant dense<0.000000e+00> : vector<32xf32>
    %169 = vector.multi_reduction <add>, %168, %cst_106 [1] : vector<32x32xf32> to vector<32xf32>
    %170 = vector.shape_cast %169 : vector<32xf32> to vector<32x1xf32>
    %cst_107 = arith.constant 3.200000e+01 : f32
    %171 = vector.broadcast %cst_107 : f32 to vector<32x1xf32>
    %172 = arith.divf %170, %171 : vector<32x1xf32>
    %173 = vector.broadcast %165 : vector<32x1xf32> to vector<32x32xf32>
    %174 = arith.subf %157, %173 : vector<32x32xf32>
    %cst_108 = arith.constant 9.99999974E-6 : f32
    %175 = vector.broadcast %cst_108 : f32 to vector<32x1xf32>
    %176 = arith.addf %172, %175 : vector<32x1xf32>
    %177 = math.rsqrt %176 : vector<32x1xf32>
    %178 = vector.broadcast %177 : vector<32x1xf32> to vector<32x32xf32>
    %179 = arith.mulf %174, %178 : vector<32x32xf32>
    %180 = arith.mulf %159, %179 : vector<32x32xf32>
    %181 = arith.addf %180, %161 : vector<32x32xf32>
    %182 = vector.broadcast %1 : vector<32x1xf32> to vector<32x32xf32>
    %183 = arith.mulf %181, %182 : vector<32x32xf32>
    %c4_i32 = arith.constant 4 : i32
    %184 = tpu.dynamic_rotate %183 by %c4_i32 dim 0 : vector<32x32xf32>, i32 -> vector<32x32xf32>
    %185 = vector.broadcast %4 : vector<32x1xf32> to vector<32x32xf32>
    %186 = arith.mulf %184, %185 : vector<32x32xf32>
    %c0_109 = arith.constant 0 : index
    %c0_110 = arith.constant 0 : index
    %c0_111 = arith.constant 0 : index
    %187 = vector.load %arg9[%c0_109, %c0_110, %c0_111] : memref<18x32x64xf32, #tpu.memory_space<vmem>>, vector<1x32x64xf32>
    %188 = vector.shape_cast %187 : vector<1x32x64xf32> to vector<32x64xf32>
    %cst_112 = arith.constant dense<0.000000e+00> : vector<32x64xf32>
    %189 = tpu.matmul %186, %188, %cst_112 {dimension_numbers = #tpu.dot_dimension_numbers<[1], [0], [0], [1], [0, 0, 1, 1], [], []>} : vector<32x32xf32>, vector<32x64xf32>, vector<32x64xf32> -> vector<32x64xf32>
    %c3_i32 = arith.constant 3 : i32
    %190 = tpu.dynamic_rotate %183 by %c3_i32 dim 0 : vector<32x32xf32>, i32 -> vector<32x32xf32>
    %191 = vector.broadcast %6 : vector<32x1xf32> to vector<32x32xf32>
    %192 = arith.mulf %190, %191 : vector<32x32xf32>
    %c1_113 = arith.constant 1 : index
    %c0_114 = arith.constant 0 : index
    %c0_115 = arith.constant 0 : index
    %193 = vector.load %arg9[%c1_113, %c0_114, %c0_115] : memref<18x32x64xf32, #tpu.memory_space<vmem>>, vector<1x32x64xf32>
    %194 = vector.shape_cast %193 : vector<1x32x64xf32> to vector<32x64xf32>
    %cst_116 = arith.constant dense<0.000000e+00> : vector<32x64xf32>
    %195 = tpu.matmul %192, %194, %cst_116 {dimension_numbers = #tpu.dot_dimension_numbers<[1], [0], [0], [1], [0, 0, 1, 1], [], []>} : vector<32x32xf32>, vector<32x64xf32>, vector<32x64xf32> -> vector<32x64xf32>
    %196 = arith.addf %189, %195 : vector<32x64xf32>
    %c2_i32 = arith.constant 2 : i32
    %197 = tpu.dynamic_rotate %183 by %c2_i32 dim 0 : vector<32x32xf32>, i32 -> vector<32x32xf32>
    %198 = vector.broadcast %8 : vector<32x1xf32> to vector<32x32xf32>
    %199 = arith.mulf %197, %198 : vector<32x32xf32>
    %c2_117 = arith.constant 2 : index
    %c0_118 = arith.constant 0 : index
    %c0_119 = arith.constant 0 : index
    %200 = vector.load %arg9[%c2_117, %c0_118, %c0_119] : memref<18x32x64xf32, #tpu.memory_space<vmem>>, vector<1x32x64xf32>
    %201 = vector.shape_cast %200 : vector<1x32x64xf32> to vector<32x64xf32>
    %cst_120 = arith.constant dense<0.000000e+00> : vector<32x64xf32>
    %202 = tpu.matmul %199, %201, %cst_120 {dimension_numbers = #tpu.dot_dimension_numbers<[1], [0], [0], [1], [0, 0, 1, 1], [], []>} : vector<32x32xf32>, vector<32x64xf32>, vector<32x64xf32> -> vector<32x64xf32>
    %203 = arith.addf %196, %202 : vector<32x64xf32>
    %c1_i32 = arith.constant 1 : i32
    %204 = tpu.dynamic_rotate %183 by %c1_i32 dim 0 : vector<32x32xf32>, i32 -> vector<32x32xf32>
    %205 = vector.broadcast %10 : vector<32x1xf32> to vector<32x32xf32>
    %206 = arith.mulf %204, %205 : vector<32x32xf32>
    %c3_121 = arith.constant 3 : index
    %c0_122 = arith.constant 0 : index
    %c0_123 = arith.constant 0 : index
    %207 = vector.load %arg9[%c3_121, %c0_122, %c0_123] : memref<18x32x64xf32, #tpu.memory_space<vmem>>, vector<1x32x64xf32>
    %208 = vector.shape_cast %207 : vector<1x32x64xf32> to vector<32x64xf32>
    %cst_124 = arith.constant dense<0.000000e+00> : vector<32x64xf32>
    %209 = tpu.matmul %206, %208, %cst_124 {dimension_numbers = #tpu.dot_dimension_numbers<[1], [0], [0], [1], [0, 0, 1, 1], [], []>} : vector<32x32xf32>, vector<32x64xf32>, vector<32x64xf32> -> vector<32x64xf32>
    %210 = arith.addf %203, %209 : vector<32x64xf32>
    %c4_125 = arith.constant 4 : index
    %c0_126 = arith.constant 0 : index
    %c0_127 = arith.constant 0 : index
    %211 = vector.load %arg9[%c4_125, %c0_126, %c0_127] : memref<18x32x64xf32, #tpu.memory_space<vmem>>, vector<1x32x64xf32>
    %212 = vector.shape_cast %211 : vector<1x32x64xf32> to vector<32x64xf32>
    %cst_128 = arith.constant dense<0.000000e+00> : vector<32x64xf32>
    %213 = tpu.matmul %183, %212, %cst_128 {dimension_numbers = #tpu.dot_dimension_numbers<[1], [0], [0], [1], [0, 0, 1, 1], [], []>} : vector<32x32xf32>, vector<32x64xf32>, vector<32x64xf32> -> vector<32x64xf32>
    %214 = arith.addf %210, %213 : vector<32x64xf32>
    %c31_i32 = arith.constant 31 : i32
    %215 = tpu.dynamic_rotate %183 by %c31_i32 dim 0 : vector<32x32xf32>, i32 -> vector<32x32xf32>
    %216 = vector.broadcast %12 : vector<32x1xf32> to vector<32x32xf32>
    %217 = arith.mulf %215, %216 : vector<32x32xf32>
    %c5_129 = arith.constant 5 : index
    %c0_130 = arith.constant 0 : index
    %c0_131 = arith.constant 0 : index
    %218 = vector.load %arg9[%c5_129, %c0_130, %c0_131] : memref<18x32x64xf32, #tpu.memory_space<vmem>>, vector<1x32x64xf32>
    %219 = vector.shape_cast %218 : vector<1x32x64xf32> to vector<32x64xf32>
    %cst_132 = arith.constant dense<0.000000e+00> : vector<32x64xf32>
    %220 = tpu.matmul %217, %219, %cst_132 {dimension_numbers = #tpu.dot_dimension_numbers<[1], [0], [0], [1], [0, 0, 1, 1], [], []>} : vector<32x32xf32>, vector<32x64xf32>, vector<32x64xf32> -> vector<32x64xf32>
    %221 = arith.addf %214, %220 : vector<32x64xf32>
    %c30_i32 = arith.constant 30 : i32
    %222 = tpu.dynamic_rotate %183 by %c30_i32 dim 0 : vector<32x32xf32>, i32 -> vector<32x32xf32>
    %223 = vector.broadcast %14 : vector<32x1xf32> to vector<32x32xf32>
    %224 = arith.mulf %222, %223 : vector<32x32xf32>
    %c6_133 = arith.constant 6 : index
    %c0_134 = arith.constant 0 : index
    %c0_135 = arith.constant 0 : index
    %225 = vector.load %arg9[%c6_133, %c0_134, %c0_135] : memref<18x32x64xf32, #tpu.memory_space<vmem>>, vector<1x32x64xf32>
    %226 = vector.shape_cast %225 : vector<1x32x64xf32> to vector<32x64xf32>
    %cst_136 = arith.constant dense<0.000000e+00> : vector<32x64xf32>
    %227 = tpu.matmul %224, %226, %cst_136 {dimension_numbers = #tpu.dot_dimension_numbers<[1], [0], [0], [1], [0, 0, 1, 1], [], []>} : vector<32x32xf32>, vector<32x64xf32>, vector<32x64xf32> -> vector<32x64xf32>
    %228 = arith.addf %221, %227 : vector<32x64xf32>
    %c29_i32 = arith.constant 29 : i32
    %229 = tpu.dynamic_rotate %183 by %c29_i32 dim 0 : vector<32x32xf32>, i32 -> vector<32x32xf32>
    %230 = vector.broadcast %16 : vector<32x1xf32> to vector<32x32xf32>
    %231 = arith.mulf %229, %230 : vector<32x32xf32>
    %c7_137 = arith.constant 7 : index
    %c0_138 = arith.constant 0 : index
    %c0_139 = arith.constant 0 : index
    %232 = vector.load %arg9[%c7_137, %c0_138, %c0_139] : memref<18x32x64xf32, #tpu.memory_space<vmem>>, vector<1x32x64xf32>
    %233 = vector.shape_cast %232 : vector<1x32x64xf32> to vector<32x64xf32>
    %cst_140 = arith.constant dense<0.000000e+00> : vector<32x64xf32>
    %234 = tpu.matmul %231, %233, %cst_140 {dimension_numbers = #tpu.dot_dimension_numbers<[1], [0], [0], [1], [0, 0, 1, 1], [], []>} : vector<32x32xf32>, vector<32x64xf32>, vector<32x64xf32> -> vector<32x64xf32>
    %235 = arith.addf %228, %234 : vector<32x64xf32>
    %c28_i32 = arith.constant 28 : i32
    %236 = tpu.dynamic_rotate %183 by %c28_i32 dim 0 : vector<32x32xf32>, i32 -> vector<32x32xf32>
    %237 = vector.broadcast %18 : vector<32x1xf32> to vector<32x32xf32>
    %238 = arith.mulf %236, %237 : vector<32x32xf32>
    %c8_141 = arith.constant 8 : index
    %c0_142 = arith.constant 0 : index
    %c0_143 = arith.constant 0 : index
    %239 = vector.load %arg9[%c8_141, %c0_142, %c0_143] : memref<18x32x64xf32, #tpu.memory_space<vmem>>, vector<1x32x64xf32>
    %240 = vector.shape_cast %239 : vector<1x32x64xf32> to vector<32x64xf32>
    %cst_144 = arith.constant dense<0.000000e+00> : vector<32x64xf32>
    %241 = tpu.matmul %238, %240, %cst_144 {dimension_numbers = #tpu.dot_dimension_numbers<[1], [0], [0], [1], [0, 0, 1, 1], [], []>} : vector<32x32xf32>, vector<32x64xf32>, vector<32x64xf32> -> vector<32x64xf32>
    %242 = arith.addf %235, %241 : vector<32x64xf32>
    %c4_145 = arith.constant 4 : index
    %c0_146 = arith.constant 0 : index
    %243 = vector.load %arg12[%c4_145, %c0_146] : memref<24x128xf32, #tpu.memory_space<vmem>>, vector<1x64xf32>
    %244 = vector.broadcast %243 : vector<1x64xf32> to vector<32x64xf32>
    %245 = arith.addf %242, %244 : vector<32x64xf32>
    %cst_147 = arith.constant 2.000000e+01 : f32
    %246 = vector.broadcast %cst_147 : f32 to vector<32x64xf32>
    %247 = arith.minimumf %245, %246 : vector<32x64xf32>
    %248 = math.exp %247 : vector<32x64xf32>
    %cst_148 = arith.constant 1.000000e+00 : f32
    %249 = vector.broadcast %cst_148 : f32 to vector<32x64xf32>
    %250 = arith.addf %249, %248 : vector<32x64xf32>
    %251 = arith.mulf %250, %250 : vector<32x64xf32>
    %cst_149 = arith.constant 1.000000e+00 : f32
    %252 = vector.broadcast %cst_149 : f32 to vector<32x64xf32>
    %253 = arith.subf %251, %252 : vector<32x64xf32>
    %254 = arith.mulf %245, %253 : vector<32x64xf32>
    %cst_150 = arith.constant 1.000000e+00 : f32
    %255 = vector.broadcast %cst_150 : f32 to vector<32x64xf32>
    %256 = arith.addf %251, %255 : vector<32x64xf32>
    %257 = tpu.reciprocal %256 {approx = true} : vector<32x64xf32> -> vector<32x64xf32>
    %258 = arith.mulf %254, %257 : vector<32x64xf32>
    %c0_151 = arith.constant 0 : index
    %c0_152 = arith.constant 0 : index
    %c0_153 = arith.constant 0 : index
    %259 = vector.load %arg10[%c0_151, %c0_152, %c0_153] : memref<2x64x32xf32, #tpu.memory_space<vmem>>, vector<1x64x32xf32>
    %260 = vector.shape_cast %259 : vector<1x64x32xf32> to vector<64x32xf32>
    %cst_154 = arith.constant dense<0.000000e+00> : vector<32x32xf32>
    %261 = tpu.matmul %258, %260, %cst_154 {dimension_numbers = #tpu.dot_dimension_numbers<[1], [0], [0], [1], [0, 0, 1, 1], [], []>} : vector<32x64xf32>, vector<64x32xf32>, vector<32x32xf32> -> vector<32x32xf32>
    %c5_155 = arith.constant 5 : index
    %c0_156 = arith.constant 0 : index
    %262 = vector.load %arg12[%c5_155, %c0_156] : memref<24x128xf32, #tpu.memory_space<vmem>>, vector<1x32xf32>
    %263 = vector.broadcast %262 : vector<1x32xf32> to vector<32x32xf32>
    %264 = arith.addf %261, %263 : vector<32x32xf32>
    %265 = arith.addf %264, %183 : vector<32x32xf32>
    %c2_157 = arith.constant 2 : index
    %c0_158 = arith.constant 0 : index
    %c0_159 = arith.constant 0 : index
    %266 = vector.load %arg4[%c2_157, %c0_158, %c0_159] : memref<8x32x32xf32, #tpu.memory_space<vmem>>, vector<1x32x32xf32>
    %267 = vector.shape_cast %266 : vector<1x32x32xf32> to vector<32x32xf32>
    %c3_160 = arith.constant 3 : index
    %c0_161 = arith.constant 0 : index
    %c0_162 = arith.constant 0 : index
    %268 = vector.load %arg4[%c3_160, %c0_161, %c0_162] : memref<8x32x32xf32, #tpu.memory_space<vmem>>, vector<1x32x32xf32>
    %269 = vector.shape_cast %268 : vector<1x32x32xf32> to vector<32x32xf32>
    %cst_163 = arith.constant dense<0.000000e+00> : vector<32xf32>
    %270 = vector.multi_reduction <add>, %265, %cst_163 [1] : vector<32x32xf32> to vector<32xf32>
    %271 = vector.shape_cast %270 : vector<32xf32> to vector<32x1xf32>
    %cst_164 = arith.constant 3.200000e+01 : f32
    %272 = vector.broadcast %cst_164 : f32 to vector<32x1xf32>
    %273 = arith.divf %271, %272 : vector<32x1xf32>
    %274 = vector.broadcast %273 : vector<32x1xf32> to vector<32x32xf32>
    %275 = arith.subf %265, %274 : vector<32x32xf32>
    %276 = arith.mulf %275, %275 : vector<32x32xf32>
    %cst_165 = arith.constant dense<0.000000e+00> : vector<32xf32>
    %277 = vector.multi_reduction <add>, %276, %cst_165 [1] : vector<32x32xf32> to vector<32xf32>
    %278 = vector.shape_cast %277 : vector<32xf32> to vector<32x1xf32>
    %cst_166 = arith.constant 3.200000e+01 : f32
    %279 = vector.broadcast %cst_166 : f32 to vector<32x1xf32>
    %280 = arith.divf %278, %279 : vector<32x1xf32>
    %281 = vector.broadcast %273 : vector<32x1xf32> to vector<32x32xf32>
    %282 = arith.subf %265, %281 : vector<32x32xf32>
    %cst_167 = arith.constant 9.99999974E-6 : f32
    %283 = vector.broadcast %cst_167 : f32 to vector<32x1xf32>
    %284 = arith.addf %280, %283 : vector<32x1xf32>
    %285 = math.rsqrt %284 : vector<32x1xf32>
    %286 = vector.broadcast %285 : vector<32x1xf32> to vector<32x32xf32>
    %287 = arith.mulf %282, %286 : vector<32x32xf32>
    %288 = arith.mulf %267, %287 : vector<32x32xf32>
    %289 = arith.addf %288, %269 : vector<32x32xf32>
    %290 = vector.broadcast %1 : vector<32x1xf32> to vector<32x32xf32>
    %291 = arith.mulf %289, %290 : vector<32x32xf32>
    %c6_168 = arith.constant 6 : index
    %c0_169 = arith.constant 0 : index
    %c0_170 = arith.constant 0 : index
    %292 = vector.load %arg7[%c6_168, %c0_169, %c0_170] : memref<12x32x16xf32, #tpu.memory_space<vmem>>, vector<1x32x16xf32>
    %293 = vector.shape_cast %292 : vector<1x32x16xf32> to vector<32x16xf32>
    %cst_171 = arith.constant dense<0.000000e+00> : vector<32x16xf32>
    %294 = tpu.matmul %291, %293, %cst_171 {dimension_numbers = #tpu.dot_dimension_numbers<[1], [0], [0], [1], [0, 0, 1, 1], [], []>} : vector<32x32xf32>, vector<32x16xf32>, vector<32x16xf32> -> vector<32x16xf32>
    %c15 = arith.constant 15 : index
    %c0_172 = arith.constant 0 : index
    %295 = vector.load %arg12[%c15, %c0_172] : memref<24x128xf32, #tpu.memory_space<vmem>>, vector<1x16xf32>
    %296 = vector.broadcast %295 : vector<1x16xf32> to vector<32x16xf32>
    %297 = arith.addf %294, %296 : vector<32x16xf32>
    %c8_173 = arith.constant 8 : index
    %c0_174 = arith.constant 0 : index
    %c0_175 = arith.constant 0 : index
    %298 = vector.load %arg7[%c8_173, %c0_174, %c0_175] : memref<12x32x16xf32, #tpu.memory_space<vmem>>, vector<1x32x16xf32>
    %299 = vector.shape_cast %298 : vector<1x32x16xf32> to vector<32x16xf32>
    %cst_176 = arith.constant dense<0.000000e+00> : vector<32x16xf32>
    %300 = tpu.matmul %291, %299, %cst_176 {dimension_numbers = #tpu.dot_dimension_numbers<[1], [0], [0], [1], [0, 0, 1, 1], [], []>} : vector<32x32xf32>, vector<32x16xf32>, vector<32x16xf32> -> vector<32x16xf32>
    %c16 = arith.constant 16 : index
    %c0_177 = arith.constant 0 : index
    %301 = vector.load %arg12[%c16, %c0_177] : memref<24x128xf32, #tpu.memory_space<vmem>>, vector<1x16xf32>
    %302 = vector.broadcast %301 : vector<1x16xf32> to vector<32x16xf32>
    %303 = arith.addf %300, %302 : vector<32x16xf32>
    %c10_178 = arith.constant 10 : index
    %c0_179 = arith.constant 0 : index
    %c0_180 = arith.constant 0 : index
    %304 = vector.load %arg7[%c10_178, %c0_179, %c0_180] : memref<12x32x16xf32, #tpu.memory_space<vmem>>, vector<1x32x16xf32>
    %305 = vector.shape_cast %304 : vector<1x32x16xf32> to vector<32x16xf32>
    %cst_181 = arith.constant dense<0.000000e+00> : vector<32x16xf32>
    %306 = tpu.matmul %291, %305, %cst_181 {dimension_numbers = #tpu.dot_dimension_numbers<[1], [0], [0], [1], [0, 0, 1, 1], [], []>} : vector<32x32xf32>, vector<32x16xf32>, vector<32x16xf32> -> vector<32x16xf32>
    %c17 = arith.constant 17 : index
    %c0_182 = arith.constant 0 : index
    %307 = vector.load %arg12[%c17, %c0_182] : memref<24x128xf32, #tpu.memory_space<vmem>>, vector<1x16xf32>
    %308 = vector.broadcast %307 : vector<1x16xf32> to vector<32x16xf32>
    %309 = arith.addf %306, %308 : vector<32x16xf32>
    %310 = vector.extract_strided_slice %297 {offsets = [0, 0], sizes = [16, 16], strides = [1, 1]} : vector<32x16xf32> to vector<16x16xf32>
    %311 = vector.extract_strided_slice %303 {offsets = [0, 0], sizes = [16, 16], strides = [1, 1]} : vector<32x16xf32> to vector<16x16xf32>
    %cst_183 = arith.constant dense<0.000000e+00> : vector<16x16xf32>
    %312 = tpu.matmul %310, %311, %cst_183 {dimension_numbers = #tpu.dot_dimension_numbers<[1], [1], [0], [0], [0, 0, 1, 0], [], []>} : vector<16x16xf32>, vector<16x16xf32>, vector<16x16xf32> -> vector<16x16xf32>
    %313 = vector.extract_strided_slice %2 {offsets = [0, 0], sizes = [1, 16], strides = [1, 1]} : vector<2x16xf32> to vector<1x16xf32>
    %314 = vector.broadcast %313 : vector<1x16xf32> to vector<16x16xf32>
    %315 = arith.addf %312, %314 : vector<16x16xf32>
    %cst_184 = arith.constant dense<0xFF800000> : vector<16xf32>
    %316 = vector.multi_reduction <maximumf>, %315, %cst_184 [1] : vector<16x16xf32> to vector<16xf32>
    %317 = vector.shape_cast %316 : vector<16xf32> to vector<16x1xf32>
    %318 = vector.broadcast %317 : vector<16x1xf32> to vector<16x16xf32>
    %319 = arith.subf %315, %318 : vector<16x16xf32>
    %320 = math.exp %319 : vector<16x16xf32>
    %cst_185 = arith.constant dense<0.000000e+00> : vector<16xf32>
    %321 = vector.multi_reduction <add>, %320, %cst_185 [1] : vector<16x16xf32> to vector<16xf32>
    %322 = vector.shape_cast %321 : vector<16xf32> to vector<16x1xf32>
    %323 = tpu.reciprocal %322 {approx = true} : vector<16x1xf32> -> vector<16x1xf32>
    %324 = vector.broadcast %323 : vector<16x1xf32> to vector<16x16xf32>
    %325 = arith.mulf %320, %324 : vector<16x16xf32>
    %326 = vector.extract_strided_slice %309 {offsets = [0, 0], sizes = [16, 16], strides = [1, 1]} : vector<32x16xf32> to vector<16x16xf32>
    %cst_186 = arith.constant dense<0.000000e+00> : vector<16x16xf32>
    %327 = tpu.matmul %325, %326, %cst_186 {dimension_numbers = #tpu.dot_dimension_numbers<[1], [0], [0], [1], [0, 0, 1, 1], [], []>} : vector<16x16xf32>, vector<16x16xf32>, vector<16x16xf32> -> vector<16x16xf32>
    %c2_187 = arith.constant 2 : index
    %c0_188 = arith.constant 0 : index
    %c0_189 = arith.constant 0 : index
    %328 = vector.load %arg8[%c2_187, %c0_188, %c0_189] : memref<4x16x32xf32, #tpu.memory_space<vmem>>, vector<1x16x32xf32>
    %329 = vector.shape_cast %328 : vector<1x16x32xf32> to vector<16x32xf32>
    %cst_190 = arith.constant dense<0.000000e+00> : vector<16x32xf32>
    %330 = tpu.matmul %327, %329, %cst_190 {dimension_numbers = #tpu.dot_dimension_numbers<[1], [0], [0], [1], [0, 0, 1, 1], [], []>} : vector<16x16xf32>, vector<16x32xf32>, vector<16x32xf32> -> vector<16x32xf32>
    %331 = vector.extract_strided_slice %297 {offsets = [16, 0], sizes = [16, 16], strides = [1, 1]} : vector<32x16xf32> to vector<16x16xf32>
    %332 = vector.extract_strided_slice %303 {offsets = [16, 0], sizes = [16, 16], strides = [1, 1]} : vector<32x16xf32> to vector<16x16xf32>
    %cst_191 = arith.constant dense<0.000000e+00> : vector<16x16xf32>
    %333 = tpu.matmul %331, %332, %cst_191 {dimension_numbers = #tpu.dot_dimension_numbers<[1], [1], [0], [0], [0, 0, 1, 0], [], []>} : vector<16x16xf32>, vector<16x16xf32>, vector<16x16xf32> -> vector<16x16xf32>
    %334 = vector.extract_strided_slice %2 {offsets = [1, 0], sizes = [1, 16], strides = [1, 1]} : vector<2x16xf32> to vector<1x16xf32>
    %335 = vector.broadcast %334 : vector<1x16xf32> to vector<16x16xf32>
    %336 = arith.addf %333, %335 : vector<16x16xf32>
    %cst_192 = arith.constant dense<0xFF800000> : vector<16xf32>
    %337 = vector.multi_reduction <maximumf>, %336, %cst_192 [1] : vector<16x16xf32> to vector<16xf32>
    %338 = vector.shape_cast %337 : vector<16xf32> to vector<16x1xf32>
    %339 = vector.broadcast %338 : vector<16x1xf32> to vector<16x16xf32>
    %340 = arith.subf %336, %339 : vector<16x16xf32>
    %341 = math.exp %340 : vector<16x16xf32>
    %cst_193 = arith.constant dense<0.000000e+00> : vector<16xf32>
    %342 = vector.multi_reduction <add>, %341, %cst_193 [1] : vector<16x16xf32> to vector<16xf32>
    %343 = vector.shape_cast %342 : vector<16xf32> to vector<16x1xf32>
    %344 = tpu.reciprocal %343 {approx = true} : vector<16x1xf32> -> vector<16x1xf32>
    %345 = vector.broadcast %344 : vector<16x1xf32> to vector<16x16xf32>
    %346 = arith.mulf %341, %345 : vector<16x16xf32>
    %347 = vector.extract_strided_slice %309 {offsets = [16, 0], sizes = [16, 16], strides = [1, 1]} : vector<32x16xf32> to vector<16x16xf32>
    %cst_194 = arith.constant dense<0.000000e+00> : vector<16x16xf32>
    %348 = tpu.matmul %346, %347, %cst_194 {dimension_numbers = #tpu.dot_dimension_numbers<[1], [0], [0], [1], [0, 0, 1, 1], [], []>} : vector<16x16xf32>, vector<16x16xf32>, vector<16x16xf32> -> vector<16x16xf32>
    %c2_195 = arith.constant 2 : index
    %c0_196 = arith.constant 0 : index
    %c0_197 = arith.constant 0 : index
    %349 = vector.load %arg8[%c2_195, %c0_196, %c0_197] : memref<4x16x32xf32, #tpu.memory_space<vmem>>, vector<1x16x32xf32>
    %350 = vector.shape_cast %349 : vector<1x16x32xf32> to vector<16x32xf32>
    %cst_198 = arith.constant dense<0.000000e+00> : vector<16x32xf32>
    %351 = tpu.matmul %348, %350, %cst_198 {dimension_numbers = #tpu.dot_dimension_numbers<[1], [0], [0], [1], [0, 0, 1, 1], [], []>} : vector<16x16xf32>, vector<16x32xf32>, vector<16x32xf32> -> vector<16x32xf32>
    %c7_199 = arith.constant 7 : index
    %c0_200 = arith.constant 0 : index
    %c0_201 = arith.constant 0 : index
    %352 = vector.load %arg7[%c7_199, %c0_200, %c0_201] : memref<12x32x16xf32, #tpu.memory_space<vmem>>, vector<1x32x16xf32>
    %353 = vector.shape_cast %352 : vector<1x32x16xf32> to vector<32x16xf32>
    %cst_202 = arith.constant dense<0.000000e+00> : vector<32x16xf32>
    %354 = tpu.matmul %291, %353, %cst_202 {dimension_numbers = #tpu.dot_dimension_numbers<[1], [0], [0], [1], [0, 0, 1, 1], [], []>} : vector<32x32xf32>, vector<32x16xf32>, vector<32x16xf32> -> vector<32x16xf32>
    %c18 = arith.constant 18 : index
    %c0_203 = arith.constant 0 : index
    %355 = vector.load %arg12[%c18, %c0_203] : memref<24x128xf32, #tpu.memory_space<vmem>>, vector<1x16xf32>
    %356 = vector.broadcast %355 : vector<1x16xf32> to vector<32x16xf32>
    %357 = arith.addf %354, %356 : vector<32x16xf32>
    %c9_204 = arith.constant 9 : index
    %c0_205 = arith.constant 0 : index
    %c0_206 = arith.constant 0 : index
    %358 = vector.load %arg7[%c9_204, %c0_205, %c0_206] : memref<12x32x16xf32, #tpu.memory_space<vmem>>, vector<1x32x16xf32>
    %359 = vector.shape_cast %358 : vector<1x32x16xf32> to vector<32x16xf32>
    %cst_207 = arith.constant dense<0.000000e+00> : vector<32x16xf32>
    %360 = tpu.matmul %291, %359, %cst_207 {dimension_numbers = #tpu.dot_dimension_numbers<[1], [0], [0], [1], [0, 0, 1, 1], [], []>} : vector<32x32xf32>, vector<32x16xf32>, vector<32x16xf32> -> vector<32x16xf32>
    %c19 = arith.constant 19 : index
    %c0_208 = arith.constant 0 : index
    %361 = vector.load %arg12[%c19, %c0_208] : memref<24x128xf32, #tpu.memory_space<vmem>>, vector<1x16xf32>
    %362 = vector.broadcast %361 : vector<1x16xf32> to vector<32x16xf32>
    %363 = arith.addf %360, %362 : vector<32x16xf32>
    %c11_209 = arith.constant 11 : index
    %c0_210 = arith.constant 0 : index
    %c0_211 = arith.constant 0 : index
    %364 = vector.load %arg7[%c11_209, %c0_210, %c0_211] : memref<12x32x16xf32, #tpu.memory_space<vmem>>, vector<1x32x16xf32>
    %365 = vector.shape_cast %364 : vector<1x32x16xf32> to vector<32x16xf32>
    %cst_212 = arith.constant dense<0.000000e+00> : vector<32x16xf32>
    %366 = tpu.matmul %291, %365, %cst_212 {dimension_numbers = #tpu.dot_dimension_numbers<[1], [0], [0], [1], [0, 0, 1, 1], [], []>} : vector<32x32xf32>, vector<32x16xf32>, vector<32x16xf32> -> vector<32x16xf32>
    %c20 = arith.constant 20 : index
    %c0_213 = arith.constant 0 : index
    %367 = vector.load %arg12[%c20, %c0_213] : memref<24x128xf32, #tpu.memory_space<vmem>>, vector<1x16xf32>
    %368 = vector.broadcast %367 : vector<1x16xf32> to vector<32x16xf32>
    %369 = arith.addf %366, %368 : vector<32x16xf32>
    %370 = vector.extract_strided_slice %357 {offsets = [0, 0], sizes = [16, 16], strides = [1, 1]} : vector<32x16xf32> to vector<16x16xf32>
    %371 = vector.extract_strided_slice %363 {offsets = [0, 0], sizes = [16, 16], strides = [1, 1]} : vector<32x16xf32> to vector<16x16xf32>
    %cst_214 = arith.constant dense<0.000000e+00> : vector<16x16xf32>
    %372 = tpu.matmul %370, %371, %cst_214 {dimension_numbers = #tpu.dot_dimension_numbers<[1], [1], [0], [0], [0, 0, 1, 0], [], []>} : vector<16x16xf32>, vector<16x16xf32>, vector<16x16xf32> -> vector<16x16xf32>
    %373 = vector.extract_strided_slice %2 {offsets = [0, 0], sizes = [1, 16], strides = [1, 1]} : vector<2x16xf32> to vector<1x16xf32>
    %374 = vector.broadcast %373 : vector<1x16xf32> to vector<16x16xf32>
    %375 = arith.addf %372, %374 : vector<16x16xf32>
    %cst_215 = arith.constant dense<0xFF800000> : vector<16xf32>
    %376 = vector.multi_reduction <maximumf>, %375, %cst_215 [1] : vector<16x16xf32> to vector<16xf32>
    %377 = vector.shape_cast %376 : vector<16xf32> to vector<16x1xf32>
    %378 = vector.broadcast %377 : vector<16x1xf32> to vector<16x16xf32>
    %379 = arith.subf %375, %378 : vector<16x16xf32>
    %380 = math.exp %379 : vector<16x16xf32>
    %cst_216 = arith.constant dense<0.000000e+00> : vector<16xf32>
    %381 = vector.multi_reduction <add>, %380, %cst_216 [1] : vector<16x16xf32> to vector<16xf32>
    %382 = vector.shape_cast %381 : vector<16xf32> to vector<16x1xf32>
    %383 = tpu.reciprocal %382 {approx = true} : vector<16x1xf32> -> vector<16x1xf32>
    %384 = vector.broadcast %383 : vector<16x1xf32> to vector<16x16xf32>
    %385 = arith.mulf %380, %384 : vector<16x16xf32>
    %386 = vector.extract_strided_slice %369 {offsets = [0, 0], sizes = [16, 16], strides = [1, 1]} : vector<32x16xf32> to vector<16x16xf32>
    %cst_217 = arith.constant dense<0.000000e+00> : vector<16x16xf32>
    %387 = tpu.matmul %385, %386, %cst_217 {dimension_numbers = #tpu.dot_dimension_numbers<[1], [0], [0], [1], [0, 0, 1, 1], [], []>} : vector<16x16xf32>, vector<16x16xf32>, vector<16x16xf32> -> vector<16x16xf32>
    %c3_218 = arith.constant 3 : index
    %c0_219 = arith.constant 0 : index
    %c0_220 = arith.constant 0 : index
    %388 = vector.load %arg8[%c3_218, %c0_219, %c0_220] : memref<4x16x32xf32, #tpu.memory_space<vmem>>, vector<1x16x32xf32>
    %389 = vector.shape_cast %388 : vector<1x16x32xf32> to vector<16x32xf32>
    %cst_221 = arith.constant dense<0.000000e+00> : vector<16x32xf32>
    %390 = tpu.matmul %387, %389, %cst_221 {dimension_numbers = #tpu.dot_dimension_numbers<[1], [0], [0], [1], [0, 0, 1, 1], [], []>} : vector<16x16xf32>, vector<16x32xf32>, vector<16x32xf32> -> vector<16x32xf32>
    %391 = arith.addf %330, %390 : vector<16x32xf32>
    %392 = vector.extract_strided_slice %357 {offsets = [16, 0], sizes = [16, 16], strides = [1, 1]} : vector<32x16xf32> to vector<16x16xf32>
    %393 = vector.extract_strided_slice %363 {offsets = [16, 0], sizes = [16, 16], strides = [1, 1]} : vector<32x16xf32> to vector<16x16xf32>
    %cst_222 = arith.constant dense<0.000000e+00> : vector<16x16xf32>
    %394 = tpu.matmul %392, %393, %cst_222 {dimension_numbers = #tpu.dot_dimension_numbers<[1], [1], [0], [0], [0, 0, 1, 0], [], []>} : vector<16x16xf32>, vector<16x16xf32>, vector<16x16xf32> -> vector<16x16xf32>
    %395 = vector.extract_strided_slice %2 {offsets = [1, 0], sizes = [1, 16], strides = [1, 1]} : vector<2x16xf32> to vector<1x16xf32>
    %396 = vector.broadcast %395 : vector<1x16xf32> to vector<16x16xf32>
    %397 = arith.addf %394, %396 : vector<16x16xf32>
    %cst_223 = arith.constant dense<0xFF800000> : vector<16xf32>
    %398 = vector.multi_reduction <maximumf>, %397, %cst_223 [1] : vector<16x16xf32> to vector<16xf32>
    %399 = vector.shape_cast %398 : vector<16xf32> to vector<16x1xf32>
    %400 = vector.broadcast %399 : vector<16x1xf32> to vector<16x16xf32>
    %401 = arith.subf %397, %400 : vector<16x16xf32>
    %402 = math.exp %401 : vector<16x16xf32>
    %cst_224 = arith.constant dense<0.000000e+00> : vector<16xf32>
    %403 = vector.multi_reduction <add>, %402, %cst_224 [1] : vector<16x16xf32> to vector<16xf32>
    %404 = vector.shape_cast %403 : vector<16xf32> to vector<16x1xf32>
    %405 = tpu.reciprocal %404 {approx = true} : vector<16x1xf32> -> vector<16x1xf32>
    %406 = vector.broadcast %405 : vector<16x1xf32> to vector<16x16xf32>
    %407 = arith.mulf %402, %406 : vector<16x16xf32>
    %408 = vector.extract_strided_slice %369 {offsets = [16, 0], sizes = [16, 16], strides = [1, 1]} : vector<32x16xf32> to vector<16x16xf32>
    %cst_225 = arith.constant dense<0.000000e+00> : vector<16x16xf32>
    %409 = tpu.matmul %407, %408, %cst_225 {dimension_numbers = #tpu.dot_dimension_numbers<[1], [0], [0], [1], [0, 0, 1, 1], [], []>} : vector<16x16xf32>, vector<16x16xf32>, vector<16x16xf32> -> vector<16x16xf32>
    %c3_226 = arith.constant 3 : index
    %c0_227 = arith.constant 0 : index
    %c0_228 = arith.constant 0 : index
    %410 = vector.load %arg8[%c3_226, %c0_227, %c0_228] : memref<4x16x32xf32, #tpu.memory_space<vmem>>, vector<1x16x32xf32>
    %411 = vector.shape_cast %410 : vector<1x16x32xf32> to vector<16x32xf32>
    %cst_229 = arith.constant dense<0.000000e+00> : vector<16x32xf32>
    %412 = tpu.matmul %409, %411, %cst_229 {dimension_numbers = #tpu.dot_dimension_numbers<[1], [0], [0], [1], [0, 0, 1, 1], [], []>} : vector<16x16xf32>, vector<16x32xf32>, vector<16x32xf32> -> vector<16x32xf32>
    %413 = arith.addf %351, %412 : vector<16x32xf32>
    %414 = tpu.concatenate %391, %413 in 0 : vector<16x32xf32>, vector<16x32xf32> -> vector<32x32xf32>
    %c12 = arith.constant 12 : index
    %c0_230 = arith.constant 0 : index
    %415 = vector.load %arg12[%c12, %c0_230] : memref<24x128xf32, #tpu.memory_space<vmem>>, vector<1x32xf32>
    %416 = vector.broadcast %415 : vector<1x32xf32> to vector<32x32xf32>
    %417 = arith.addf %414, %416 : vector<32x32xf32>
    %418 = arith.addf %417, %291 : vector<32x32xf32>
    %c4_231 = arith.constant 4 : index
    %c0_232 = arith.constant 0 : index
    %c0_233 = arith.constant 0 : index
    %419 = vector.load %arg4[%c4_231, %c0_232, %c0_233] : memref<8x32x32xf32, #tpu.memory_space<vmem>>, vector<1x32x32xf32>
    %420 = vector.shape_cast %419 : vector<1x32x32xf32> to vector<32x32xf32>
    %c5_234 = arith.constant 5 : index
    %c0_235 = arith.constant 0 : index
    %c0_236 = arith.constant 0 : index
    %421 = vector.load %arg4[%c5_234, %c0_235, %c0_236] : memref<8x32x32xf32, #tpu.memory_space<vmem>>, vector<1x32x32xf32>
    %422 = vector.shape_cast %421 : vector<1x32x32xf32> to vector<32x32xf32>
    %cst_237 = arith.constant dense<0.000000e+00> : vector<32xf32>
    %423 = vector.multi_reduction <add>, %418, %cst_237 [1] : vector<32x32xf32> to vector<32xf32>
    %424 = vector.shape_cast %423 : vector<32xf32> to vector<32x1xf32>
    %cst_238 = arith.constant 3.200000e+01 : f32
    %425 = vector.broadcast %cst_238 : f32 to vector<32x1xf32>
    %426 = arith.divf %424, %425 : vector<32x1xf32>
    %427 = vector.broadcast %426 : vector<32x1xf32> to vector<32x32xf32>
    %428 = arith.subf %418, %427 : vector<32x32xf32>
    %429 = arith.mulf %428, %428 : vector<32x32xf32>
    %cst_239 = arith.constant dense<0.000000e+00> : vector<32xf32>
    %430 = vector.multi_reduction <add>, %429, %cst_239 [1] : vector<32x32xf32> to vector<32xf32>
    %431 = vector.shape_cast %430 : vector<32xf32> to vector<32x1xf32>
    %cst_240 = arith.constant 3.200000e+01 : f32
    %432 = vector.broadcast %cst_240 : f32 to vector<32x1xf32>
    %433 = arith.divf %431, %432 : vector<32x1xf32>
    %434 = vector.broadcast %426 : vector<32x1xf32> to vector<32x32xf32>
    %435 = arith.subf %418, %434 : vector<32x32xf32>
    %cst_241 = arith.constant 9.99999974E-6 : f32
    %436 = vector.broadcast %cst_241 : f32 to vector<32x1xf32>
    %437 = arith.addf %433, %436 : vector<32x1xf32>
    %438 = math.rsqrt %437 : vector<32x1xf32>
    %439 = vector.broadcast %438 : vector<32x1xf32> to vector<32x32xf32>
    %440 = arith.mulf %435, %439 : vector<32x32xf32>
    %441 = arith.mulf %420, %440 : vector<32x32xf32>
    %442 = arith.addf %441, %422 : vector<32x32xf32>
    %443 = vector.broadcast %1 : vector<32x1xf32> to vector<32x32xf32>
    %444 = arith.mulf %442, %443 : vector<32x32xf32>
    %c4_i32_242 = arith.constant 4 : i32
    %445 = tpu.dynamic_rotate %444 by %c4_i32_242 dim 0 : vector<32x32xf32>, i32 -> vector<32x32xf32>
    %446 = vector.broadcast %4 : vector<32x1xf32> to vector<32x32xf32>
    %447 = arith.mulf %445, %446 : vector<32x32xf32>
    %c9_243 = arith.constant 9 : index
    %c0_244 = arith.constant 0 : index
    %c0_245 = arith.constant 0 : index
    %448 = vector.load %arg9[%c9_243, %c0_244, %c0_245] : memref<18x32x64xf32, #tpu.memory_space<vmem>>, vector<1x32x64xf32>
    %449 = vector.shape_cast %448 : vector<1x32x64xf32> to vector<32x64xf32>
    %cst_246 = arith.constant dense<0.000000e+00> : vector<32x64xf32>
    %450 = tpu.matmul %447, %449, %cst_246 {dimension_numbers = #tpu.dot_dimension_numbers<[1], [0], [0], [1], [0, 0, 1, 1], [], []>} : vector<32x32xf32>, vector<32x64xf32>, vector<32x64xf32> -> vector<32x64xf32>
    %c3_i32_247 = arith.constant 3 : i32
    %451 = tpu.dynamic_rotate %444 by %c3_i32_247 dim 0 : vector<32x32xf32>, i32 -> vector<32x32xf32>
    %452 = vector.broadcast %6 : vector<32x1xf32> to vector<32x32xf32>
    %453 = arith.mulf %451, %452 : vector<32x32xf32>
    %c10_248 = arith.constant 10 : index
    %c0_249 = arith.constant 0 : index
    %c0_250 = arith.constant 0 : index
    %454 = vector.load %arg9[%c10_248, %c0_249, %c0_250] : memref<18x32x64xf32, #tpu.memory_space<vmem>>, vector<1x32x64xf32>
    %455 = vector.shape_cast %454 : vector<1x32x64xf32> to vector<32x64xf32>
    %cst_251 = arith.constant dense<0.000000e+00> : vector<32x64xf32>
    %456 = tpu.matmul %453, %455, %cst_251 {dimension_numbers = #tpu.dot_dimension_numbers<[1], [0], [0], [1], [0, 0, 1, 1], [], []>} : vector<32x32xf32>, vector<32x64xf32>, vector<32x64xf32> -> vector<32x64xf32>
    %457 = arith.addf %450, %456 : vector<32x64xf32>
    %c2_i32_252 = arith.constant 2 : i32
    %458 = tpu.dynamic_rotate %444 by %c2_i32_252 dim 0 : vector<32x32xf32>, i32 -> vector<32x32xf32>
    %459 = vector.broadcast %8 : vector<32x1xf32> to vector<32x32xf32>
    %460 = arith.mulf %458, %459 : vector<32x32xf32>
    %c11_253 = arith.constant 11 : index
    %c0_254 = arith.constant 0 : index
    %c0_255 = arith.constant 0 : index
    %461 = vector.load %arg9[%c11_253, %c0_254, %c0_255] : memref<18x32x64xf32, #tpu.memory_space<vmem>>, vector<1x32x64xf32>
    %462 = vector.shape_cast %461 : vector<1x32x64xf32> to vector<32x64xf32>
    %cst_256 = arith.constant dense<0.000000e+00> : vector<32x64xf32>
    %463 = tpu.matmul %460, %462, %cst_256 {dimension_numbers = #tpu.dot_dimension_numbers<[1], [0], [0], [1], [0, 0, 1, 1], [], []>} : vector<32x32xf32>, vector<32x64xf32>, vector<32x64xf32> -> vector<32x64xf32>
    %464 = arith.addf %457, %463 : vector<32x64xf32>
    %c1_i32_257 = arith.constant 1 : i32
    %465 = tpu.dynamic_rotate %444 by %c1_i32_257 dim 0 : vector<32x32xf32>, i32 -> vector<32x32xf32>
    %466 = vector.broadcast %10 : vector<32x1xf32> to vector<32x32xf32>
    %467 = arith.mulf %465, %466 : vector<32x32xf32>
    %c12_258 = arith.constant 12 : index
    %c0_259 = arith.constant 0 : index
    %c0_260 = arith.constant 0 : index
    %468 = vector.load %arg9[%c12_258, %c0_259, %c0_260] : memref<18x32x64xf32, #tpu.memory_space<vmem>>, vector<1x32x64xf32>
    %469 = vector.shape_cast %468 : vector<1x32x64xf32> to vector<32x64xf32>
    %cst_261 = arith.constant dense<0.000000e+00> : vector<32x64xf32>
    %470 = tpu.matmul %467, %469, %cst_261 {dimension_numbers = #tpu.dot_dimension_numbers<[1], [0], [0], [1], [0, 0, 1, 1], [], []>} : vector<32x32xf32>, vector<32x64xf32>, vector<32x64xf32> -> vector<32x64xf32>
    %471 = arith.addf %464, %470 : vector<32x64xf32>
    %c13 = arith.constant 13 : index
    %c0_262 = arith.constant 0 : index
    %c0_263 = arith.constant 0 : index
    %472 = vector.load %arg9[%c13, %c0_262, %c0_263] : memref<18x32x64xf32, #tpu.memory_space<vmem>>, vector<1x32x64xf32>
    %473 = vector.shape_cast %472 : vector<1x32x64xf32> to vector<32x64xf32>
    %cst_264 = arith.constant dense<0.000000e+00> : vector<32x64xf32>
    %474 = tpu.matmul %444, %473, %cst_264 {dimension_numbers = #tpu.dot_dimension_numbers<[1], [0], [0], [1], [0, 0, 1, 1], [], []>} : vector<32x32xf32>, vector<32x64xf32>, vector<32x64xf32> -> vector<32x64xf32>
    %475 = arith.addf %471, %474 : vector<32x64xf32>
    %c31_i32_265 = arith.constant 31 : i32
    %476 = tpu.dynamic_rotate %444 by %c31_i32_265 dim 0 : vector<32x32xf32>, i32 -> vector<32x32xf32>
    %477 = vector.broadcast %12 : vector<32x1xf32> to vector<32x32xf32>
    %478 = arith.mulf %476, %477 : vector<32x32xf32>
    %c14 = arith.constant 14 : index
    %c0_266 = arith.constant 0 : index
    %c0_267 = arith.constant 0 : index
    %479 = vector.load %arg9[%c14, %c0_266, %c0_267] : memref<18x32x64xf32, #tpu.memory_space<vmem>>, vector<1x32x64xf32>
    %480 = vector.shape_cast %479 : vector<1x32x64xf32> to vector<32x64xf32>
    %cst_268 = arith.constant dense<0.000000e+00> : vector<32x64xf32>
    %481 = tpu.matmul %478, %480, %cst_268 {dimension_numbers = #tpu.dot_dimension_numbers<[1], [0], [0], [1], [0, 0, 1, 1], [], []>} : vector<32x32xf32>, vector<32x64xf32>, vector<32x64xf32> -> vector<32x64xf32>
    %482 = arith.addf %475, %481 : vector<32x64xf32>
    %c30_i32_269 = arith.constant 30 : i32
    %483 = tpu.dynamic_rotate %444 by %c30_i32_269 dim 0 : vector<32x32xf32>, i32 -> vector<32x32xf32>
    %484 = vector.broadcast %14 : vector<32x1xf32> to vector<32x32xf32>
    %485 = arith.mulf %483, %484 : vector<32x32xf32>
    %c15_270 = arith.constant 15 : index
    %c0_271 = arith.constant 0 : index
    %c0_272 = arith.constant 0 : index
    %486 = vector.load %arg9[%c15_270, %c0_271, %c0_272] : memref<18x32x64xf32, #tpu.memory_space<vmem>>, vector<1x32x64xf32>
    %487 = vector.shape_cast %486 : vector<1x32x64xf32> to vector<32x64xf32>
    %cst_273 = arith.constant dense<0.000000e+00> : vector<32x64xf32>
    %488 = tpu.matmul %485, %487, %cst_273 {dimension_numbers = #tpu.dot_dimension_numbers<[1], [0], [0], [1], [0, 0, 1, 1], [], []>} : vector<32x32xf32>, vector<32x64xf32>, vector<32x64xf32> -> vector<32x64xf32>
    %489 = arith.addf %482, %488 : vector<32x64xf32>
    %c29_i32_274 = arith.constant 29 : i32
    %490 = tpu.dynamic_rotate %444 by %c29_i32_274 dim 0 : vector<32x32xf32>, i32 -> vector<32x32xf32>
    %491 = vector.broadcast %16 : vector<32x1xf32> to vector<32x32xf32>
    %492 = arith.mulf %490, %491 : vector<32x32xf32>
    %c16_275 = arith.constant 16 : index
    %c0_276 = arith.constant 0 : index
    %c0_277 = arith.constant 0 : index
    %493 = vector.load %arg9[%c16_275, %c0_276, %c0_277] : memref<18x32x64xf32, #tpu.memory_space<vmem>>, vector<1x32x64xf32>
    %494 = vector.shape_cast %493 : vector<1x32x64xf32> to vector<32x64xf32>
    %cst_278 = arith.constant dense<0.000000e+00> : vector<32x64xf32>
    %495 = tpu.matmul %492, %494, %cst_278 {dimension_numbers = #tpu.dot_dimension_numbers<[1], [0], [0], [1], [0, 0, 1, 1], [], []>} : vector<32x32xf32>, vector<32x64xf32>, vector<32x64xf32> -> vector<32x64xf32>
    %496 = arith.addf %489, %495 : vector<32x64xf32>
    %c28_i32_279 = arith.constant 28 : i32
    %497 = tpu.dynamic_rotate %444 by %c28_i32_279 dim 0 : vector<32x32xf32>, i32 -> vector<32x32xf32>
    %498 = vector.broadcast %18 : vector<32x1xf32> to vector<32x32xf32>
    %499 = arith.mulf %497, %498 : vector<32x32xf32>
    %c17_280 = arith.constant 17 : index
    %c0_281 = arith.constant 0 : index
    %c0_282 = arith.constant 0 : index
    %500 = vector.load %arg9[%c17_280, %c0_281, %c0_282] : memref<18x32x64xf32, #tpu.memory_space<vmem>>, vector<1x32x64xf32>
    %501 = vector.shape_cast %500 : vector<1x32x64xf32> to vector<32x64xf32>
    %cst_283 = arith.constant dense<0.000000e+00> : vector<32x64xf32>
    %502 = tpu.matmul %499, %501, %cst_283 {dimension_numbers = #tpu.dot_dimension_numbers<[1], [0], [0], [1], [0, 0, 1, 1], [], []>} : vector<32x32xf32>, vector<32x64xf32>, vector<32x64xf32> -> vector<32x64xf32>
    %503 = arith.addf %496, %502 : vector<32x64xf32>
    %c13_284 = arith.constant 13 : index
    %c0_285 = arith.constant 0 : index
    %504 = vector.load %arg12[%c13_284, %c0_285] : memref<24x128xf32, #tpu.memory_space<vmem>>, vector<1x64xf32>
    %505 = vector.broadcast %504 : vector<1x64xf32> to vector<32x64xf32>
    %506 = arith.addf %503, %505 : vector<32x64xf32>
    %cst_286 = arith.constant 2.000000e+01 : f32
    %507 = vector.broadcast %cst_286 : f32 to vector<32x64xf32>
    %508 = arith.minimumf %506, %507 : vector<32x64xf32>
    %509 = math.exp %508 : vector<32x64xf32>
    %cst_287 = arith.constant 1.000000e+00 : f32
    %510 = vector.broadcast %cst_287 : f32 to vector<32x64xf32>
    %511 = arith.addf %510, %509 : vector<32x64xf32>
    %512 = arith.mulf %511, %511 : vector<32x64xf32>
    %cst_288 = arith.constant 1.000000e+00 : f32
    %513 = vector.broadcast %cst_288 : f32 to vector<32x64xf32>
    %514 = arith.subf %512, %513 : vector<32x64xf32>
    %515 = arith.mulf %506, %514 : vector<32x64xf32>
    %cst_289 = arith.constant 1.000000e+00 : f32
    %516 = vector.broadcast %cst_289 : f32 to vector<32x64xf32>
    %517 = arith.addf %512, %516 : vector<32x64xf32>
    %518 = tpu.reciprocal %517 {approx = true} : vector<32x64xf32> -> vector<32x64xf32>
    %519 = arith.mulf %515, %518 : vector<32x64xf32>
    %c1_290 = arith.constant 1 : index
    %c0_291 = arith.constant 0 : index
    %c0_292 = arith.constant 0 : index
    %520 = vector.load %arg10[%c1_290, %c0_291, %c0_292] : memref<2x64x32xf32, #tpu.memory_space<vmem>>, vector<1x64x32xf32>
    %521 = vector.shape_cast %520 : vector<1x64x32xf32> to vector<64x32xf32>
    %cst_293 = arith.constant dense<0.000000e+00> : vector<32x32xf32>
    %522 = tpu.matmul %519, %521, %cst_293 {dimension_numbers = #tpu.dot_dimension_numbers<[1], [0], [0], [1], [0, 0, 1, 1], [], []>} : vector<32x64xf32>, vector<64x32xf32>, vector<32x32xf32> -> vector<32x32xf32>
    %c14_294 = arith.constant 14 : index
    %c0_295 = arith.constant 0 : index
    %523 = vector.load %arg12[%c14_294, %c0_295] : memref<24x128xf32, #tpu.memory_space<vmem>>, vector<1x32xf32>
    %524 = vector.broadcast %523 : vector<1x32xf32> to vector<32x32xf32>
    %525 = arith.addf %522, %524 : vector<32x32xf32>
    %526 = arith.addf %525, %444 : vector<32x32xf32>
    %c6_296 = arith.constant 6 : index
    %c0_297 = arith.constant 0 : index
    %c0_298 = arith.constant 0 : index
    %527 = vector.load %arg4[%c6_296, %c0_297, %c0_298] : memref<8x32x32xf32, #tpu.memory_space<vmem>>, vector<1x32x32xf32>
    %528 = vector.shape_cast %527 : vector<1x32x32xf32> to vector<32x32xf32>
    %c7_299 = arith.constant 7 : index
    %c0_300 = arith.constant 0 : index
    %c0_301 = arith.constant 0 : index
    %529 = vector.load %arg4[%c7_299, %c0_300, %c0_301] : memref<8x32x32xf32, #tpu.memory_space<vmem>>, vector<1x32x32xf32>
    %530 = vector.shape_cast %529 : vector<1x32x32xf32> to vector<32x32xf32>
    %cst_302 = arith.constant dense<0.000000e+00> : vector<32xf32>
    %531 = vector.multi_reduction <add>, %526, %cst_302 [1] : vector<32x32xf32> to vector<32xf32>
    %532 = vector.shape_cast %531 : vector<32xf32> to vector<32x1xf32>
    %cst_303 = arith.constant 3.200000e+01 : f32
    %533 = vector.broadcast %cst_303 : f32 to vector<32x1xf32>
    %534 = arith.divf %532, %533 : vector<32x1xf32>
    %535 = vector.broadcast %534 : vector<32x1xf32> to vector<32x32xf32>
    %536 = arith.subf %526, %535 : vector<32x32xf32>
    %537 = arith.mulf %536, %536 : vector<32x32xf32>
    %cst_304 = arith.constant dense<0.000000e+00> : vector<32xf32>
    %538 = vector.multi_reduction <add>, %537, %cst_304 [1] : vector<32x32xf32> to vector<32xf32>
    %539 = vector.shape_cast %538 : vector<32xf32> to vector<32x1xf32>
    %cst_305 = arith.constant 3.200000e+01 : f32
    %540 = vector.broadcast %cst_305 : f32 to vector<32x1xf32>
    %541 = arith.divf %539, %540 : vector<32x1xf32>
    %542 = vector.broadcast %534 : vector<32x1xf32> to vector<32x32xf32>
    %543 = arith.subf %526, %542 : vector<32x32xf32>
    %cst_306 = arith.constant 9.99999974E-6 : f32
    %544 = vector.broadcast %cst_306 : f32 to vector<32x1xf32>
    %545 = arith.addf %541, %544 : vector<32x1xf32>
    %546 = math.rsqrt %545 : vector<32x1xf32>
    %547 = vector.broadcast %546 : vector<32x1xf32> to vector<32x32xf32>
    %548 = arith.mulf %543, %547 : vector<32x32xf32>
    %549 = arith.mulf %528, %548 : vector<32x32xf32>
    %550 = arith.addf %549, %530 : vector<32x32xf32>
    %551 = vector.broadcast %1 : vector<32x1xf32> to vector<32x32xf32>
    %552 = arith.mulf %550, %551 : vector<32x32xf32>
    %c0_307 = arith.constant 0 : index
    %c0_308 = arith.constant 0 : index
    %553 = vector.load %arg11[%c0_307, %c0_308] : memref<32x128xf32, #tpu.memory_space<vmem>>, vector<32x128xf32>
    %cst_309 = arith.constant dense<0.000000e+00> : vector<32x128xf32>
    %554 = tpu.matmul %552, %553, %cst_309 {dimension_numbers = #tpu.dot_dimension_numbers<[1], [0], [0], [1], [0, 0, 1, 1], [], []>} : vector<32x32xf32>, vector<32x128xf32>, vector<32x128xf32> -> vector<32x128xf32>
    %c2_310 = arith.constant 2 : index
    %c0_311 = arith.constant 0 : index
    %555 = vector.load %arg12[%c2_310, %c0_311] : memref<24x128xf32, #tpu.memory_space<vmem>>, vector<1x128xf32>
    %556 = vector.broadcast %555 : vector<1x128xf32> to vector<32x128xf32>
    %557 = arith.addf %554, %556 : vector<32x128xf32>
    %558 = vector.broadcast %1 : vector<32x1xf32> to vector<32x128xf32>
    %559 = arith.mulf %557, %558 : vector<32x128xf32>
    %c0_312 = arith.constant 0 : index
    %c0_313 = arith.constant 0 : index
    %560 = vector.load %arg13[%c0_312, %c0_313] : memref<32x128xf32, #tpu.memory_space<vmem>>, vector<32x128xf32>
    tpu.vector_store %arg13[%c0_312, %c0_313], %559 {strides = array<i32>} : memref<32x128xf32, #tpu.memory_space<vmem>>, vector<32x128xf32>,
    return
  }
}

</mosaic_0001>

<llo_original>
// kernel: tile.48
$region0: #{tile.48}
  #allocation0 [shape = 's32[1]{0}', space=sflag, size = 0x4, scoped, tag = 'scoped memory for tile.48']
  %s0 = inlined_call_operand.vmem [shape: f32[16], index: 0, kind: input, shape index: {}]
  %s1 = inlined_call_operand.vmem [shape: f32[2,16], index: 1, kind: output, shape index: {}]
  // Predicated region
  $region2: #{tile.48} parent=0 // pred_check
    _
  $region3: #{tile.48} parent=0 // pred_check_branch
    %3 = sbr.rel (0) target = $region5
  $region4: #{tile.48} parent=0 // pred_region
    _
  $region5: #{tile.48} parent=0 // pred_fallthru
    _
  %v4 = vld [vmem:[%s0] ss:$0 sm:$0xff]
  %5 = vst [vmem:[%s1] sm:$0x3] %v4

// kernel: tile.81
$region0: #{tile.81}
  %s0 = inlined_call_operand.vmem [shape: f32[2,16], index: 0, kind: input, shape index: {}]
  %s1 = inlined_call_operand.vmem [shape: f32[1,32,1], index: 1, kind: output, shape index: {}]
  $region1: #{tile.81} parent=0
    #allocation0 [shape = 'u8[4096]{0}', space=vmem, size = 0x1000, scoped, tag = 'scoped mem for output reshape']
    #allocation1 [shape = 'u8[4096]{0}', space=vmem, size = 0x1000, scoped, tag = 'scoped mem for input reshape']
    %s3 = ssub.s32 4, 1
    %v4 = vld [vmem:[%s0] sm:%s3]
    %5 = vst [vmem:[#allocation1] sm:%s3] %v4
    %v6 = vld [vmem:[#allocation1] sm:$0x1]
    %vm7 = vcmask 130048
    %8 = vst.msk [vmem:[#allocation0] sm:$0x1] %vm7, %v6
    %s9 = scalar_lea.vmem [#allocation1], 1
    %v10 = vld [vmem:[%s9] sm:$0x1]
    %11 = vrot.lane.b32.xlu0 %v10, 16
    %v12 = vpop.permute.xlu0 %11
    %vm13 = vcmask 261248
    %14 = vst.msk [vmem:[#allocation0] sm:$0x1] %vm13, %v12
    %s16 = ssub.s32 2, 1
    %v17 = vld [vmem:[#allocation0] sm:%s16]
    %s19 = ssub.s32 2, 1
    %20 = vst [vmem:[%s1] sm:%s19] %v17

// kernel: high_decoder_forward.1
$region0: #{high_decoder_forward.1}
  #allocation0 [shape = 'u32[]', space=smem, size = 0x4, offset = 0x4, fixed_abs, tag = 'smem constant byte address 0x4 - core index']
  #allocation1 [shape = 'u32[72,128]{1,0:T(1,128)}', space=vmem, size = 0x9000, scoped, tag = 'internal scratch']
  %s0 = inlined_call_operand.vmem [shape: f32[32,32], index: 0, kind: input, shape index: {}]
  %s1 = inlined_call_operand.vmem [shape: f32[32,1], index: 1, kind: input, shape index: {}]
  %s2 = inlined_call_operand.vmem [shape: f32[2,16], index: 2, kind: input, shape index: {}]
  %s3 = inlined_call_operand.vmem [shape: f32[9,32,1], index: 3, kind: input, shape index: {}]
  %s4 = inlined_call_operand.vmem [shape: f32[8,32,32], index: 4, kind: input, shape index: {}]
  %s5 = inlined_call_operand.vmem [shape: f32[32,16], index: 5, kind: input, shape index: {}]
  %s6 = inlined_call_operand.vmem [shape: f32[16,32], index: 6, kind: input, shape index: {}]
  %s7 = inlined_call_operand.vmem [shape: f32[12,32,16], index: 7, kind: input, shape index: {}]
  %s8 = inlined_call_operand.vmem [shape: f32[4,16,32], index: 8, kind: input, shape index: {}]
  %s9 = inlined_call_operand.vmem [shape: f32[18,32,64], index: 9, kind: input, shape index: {}]
  %s10 = inlined_call_operand.vmem [shape: f32[2,64,32], index: 10, kind: input, shape index: {}]
  %s11 = inlined_call_operand.vmem [shape: f32[32,128], index: 11, kind: input, shape index: {}]
  %s12 = inlined_call_operand.vmem [shape: f32[24,128], index: 12, kind: input, shape index: {}]
  %s13 = inlined_call_operand.hbm [shape: f32[32,128], index: 13, kind: output, shape index: {}]
  %s14 = sld [smem:[#allocation0]]
  $region62: #{high_decoder_forward.1} parent=0
    _
  %s16 = ssub.s32 1, %s14
  %s17 = scalar_select 0, %s16, %s14
  $region1: #{high_decoder_forward.1} parent=0
    #allocation2 [shape = 'u8[16384]{0}', space=vmem, size = 0x4000, scoped, tag = 'output window, operand 0, single buffered']
    #allocation3 [shape = 's32[1]{0}', space=sflag, size = 0x4, scoped, tag = 'scoped memory for high_decoder_forward.1']
    %18 = vsyncpa [#allocation3], 0
    // Predicated region
    $region2: #{high_decoder_forward.1} parent=1 // pred_check
      _
    $region3: #{high_decoder_forward.1} parent=1 // pred_check_branch
      %20 = sbr.rel (0) target = $region5
    $region4: #{high_decoder_forward.1} parent=1 // pred_region
      _
    $region5: #{high_decoder_forward.1} parent=1 // pred_fallthru
      _
    // Predicated region
    $region6: #{high_decoder_forward.1} parent=1 // pred_check
      _
    $region7: #{high_decoder_forward.1} parent=1 // pred_check_branch
      %22 = sbr.rel (0) target = $region9
    $region8: #{high_decoder_forward.1} parent=1 // pred_region
      _
    $region9: #{high_decoder_forward.1} parent=1 // pred_fallthru
      _
    // Predicated region
    $region10: #{high_decoder_forward.1} parent=1 // pred_check
      _
    $region11: #{high_decoder_forward.1} parent=1 // pred_check_branch
      %24 = sbr.rel (0) target = $region13
    $region12: #{high_decoder_forward.1} parent=1 // pred_region
      _
    $region13: #{high_decoder_forward.1} parent=1 // pred_fallthru
      _
    // Predicated region
    $region14: #{high_decoder_forward.1} parent=1 // pred_check
      _
    $region15: #{high_decoder_forward.1} parent=1 // pred_check_branch
      %26 = sbr.rel (0) target = $region17
    $region16: #{high_decoder_forward.1} parent=1 // pred_region
      _
    $region17: #{high_decoder_forward.1} parent=1 // pred_fallthru
      _
    // Predicated region
    $region18: #{high_decoder_forward.1} parent=1 // pred_check
      _
    $region19: #{high_decoder_forward.1} parent=1 // pred_check_branch
      %28 = sbr.rel (0) target = $region21
    $region20: #{high_decoder_forward.1} parent=1 // pred_region
      _
    $region21: #{high_decoder_forward.1} parent=1 // pred_fallthru
      _
    // Predicated region
    $region22: #{high_decoder_forward.1} parent=1 // pred_check
      _
    $region23: #{high_decoder_forward.1} parent=1 // pred_check_branch
      %30 = sbr.rel (0) target = $region25
    $region24: #{high_decoder_forward.1} parent=1 // pred_region
      _
    $region25: #{high_decoder_forward.1} parent=1 // pred_fallthru
      _
    // Predicated region
    $region26: #{high_decoder_forward.1} parent=1 // pred_check
      _
    $region27: #{high_decoder_forward.1} parent=1 // pred_check_branch
      %32 = sbr.rel (0) target = $region29
    $region28: #{high_decoder_forward.1} parent=1 // pred_region
      _
    $region29: #{high_decoder_forward.1} parent=1 // pred_fallthru
      _
    // Predicated region
    $region30: #{high_decoder_forward.1} parent=1 // pred_check
      _
    $region31: #{high_decoder_forward.1} parent=1 // pred_check_branch
      %34 = sbr.rel (0) target = $region33
    $region32: #{high_decoder_forward.1} parent=1 // pred_region
      _
    $region33: #{high_decoder_forward.1} parent=1 // pred_fallthru
      _
    // Predicated region
    $region34: #{high_decoder_forward.1} parent=1 // pred_check
      _
    $region35: #{high_decoder_forward.1} parent=1 // pred_check_branch
      %36 = sbr.rel (0) target = $region37
    $region36: #{high_decoder_forward.1} parent=1 // pred_region
      _
    $region37: #{high_decoder_forward.1} parent=1 // pred_fallthru
      _
    // Predicated region
    $region38: #{high_decoder_forward.1} parent=1 // pred_check
      _
    $region39: #{high_decoder_forward.1} parent=1 // pred_check_branch
      %38 = sbr.rel (0) target = $region41
    $region40: #{high_decoder_forward.1} parent=1 // pred_region
      _
    $region41: #{high_decoder_forward.1} parent=1 // pred_fallthru
      _
    // Predicated region
    $region42: #{high_decoder_forward.1} parent=1 // pred_check
      _
    $region43: #{high_decoder_forward.1} parent=1 // pred_check_branch
      %40 = sbr.rel (0) target = $region45
    $region44: #{high_decoder_forward.1} parent=1 // pred_region
      _
    $region45: #{high_decoder_forward.1} parent=1 // pred_fallthru
      _
    // Predicated region
    $region46: #{high_decoder_forward.1} parent=1 // pred_check
      _
    $region47: #{high_decoder_forward.1} parent=1 // pred_check_branch
      %42 = sbr.rel (0) target = $region49
    $region48: #{high_decoder_forward.1} parent=1 // pred_region
      _
    $region49: #{high_decoder_forward.1} parent=1 // pred_fallthru
      _
    // Predicated region
    $region50: #{high_decoder_forward.1} parent=1 // pred_check
      _
    $region51: #{high_decoder_forward.1} parent=1 // pred_check_branch
      %44 = sbr.rel (0) target = $region53
    $region52: #{high_decoder_forward.1} parent=1 // pred_region
      _
    $region53: #{high_decoder_forward.1} parent=1 // pred_fallthru
      _
    %v45 = vld [vmem:[%s0] sm:$0xff]
    %v46 = vld [vmem:[%s0 + $0x8] sm:$0xff]
    %v47 = vld [vmem:[%s0 + $0x10] sm:$0xff]
    %v48 = vld [vmem:[%s0 + $0x18] sm:$0xff]
    %v49 = vld [vmem:[%s1] sm:$0xff]
    %v50 = vld [vmem:[%s1 + $0x8] sm:$0xff]
    %v51 = vld [vmem:[%s1 + $0x10] sm:$0xff]
    %v52 = vld [vmem:[%s1 + $0x18] sm:$0xff]
    %v53 = vld [vmem:[%s2] sm:$0x3]
    %v54 = vld [vmem:[%s3] sm:$0xff]
    %v55 = vld [vmem:[%s3 + $0x8] sm:$0xff]
    %v56 = vld [vmem:[%s3 + $0x10] sm:$0xff]
    %v57 = vld [vmem:[%s3 + $0x18] sm:$0xff]
    %s58 = scalar_lea.vmem %s3, 32
    %v59 = vld [vmem:[%s58] sm:$0xff]
    %v60 = vld [vmem:[%s58 + $0x8] sm:$0xff]
    %v61 = vld [vmem:[%s58 + $0x10] sm:$0xff]
    %v62 = vld [vmem:[%s58 + $0x18] sm:$0xff]
    %s63 = scalar_lea.vmem %s3, 64
    %v64 = vld [vmem:[%s63] sm:$0xff]
    %v65 = vld [vmem:[%s63 + $0x8] sm:$0xff]
    %v66 = vld [vmem:[%s63 + $0x10] sm:$0xff]
    %v67 = vld [vmem:[%s63 + $0x18] sm:$0xff]
    %s68 = scalar_lea.vmem %s3, 96
    %v69 = vld [vmem:[%s68] sm:$0xff]
    %v70 = vld [vmem:[%s68 + $0x8] sm:$0xff]
    %v71 = vld [vmem:[%s68 + $0x10] sm:$0xff]
    %v72 = vld [vmem:[%s68 + $0x18] sm:$0xff]
    %s73 = scalar_lea.vmem %s3, 160
    %v74 = vld [vmem:[%s73] sm:$0xff]
    %v75 = vld [vmem:[%s73 + $0x8] sm:$0xff]
    %v76 = vld [vmem:[%s73 + $0x10] sm:$0xff]
    %v77 = vld [vmem:[%s73 + $0x18] sm:$0xff]
    %s78 = scalar_lea.vmem %s3, 192
    %v79 = vld [vmem:[%s78] sm:$0xff]
    %v80 = vld [vmem:[%s78 + $0x8] sm:$0xff]
    %v81 = vld [vmem:[%s78 + $0x10] sm:$0xff]
    %v82 = vld [vmem:[%s78 + $0x18] sm:$0xff]
    %s83 = scalar_lea.vmem %s3, 224
    %v84 = vld [vmem:[%s83] sm:$0xff]
    %v85 = vld [vmem:[%s83 + $0x8] sm:$0xff]
    %v86 = vld [vmem:[%s83 + $0x10] sm:$0xff]
    %v87 = vld [vmem:[%s83 + $0x18] sm:$0xff]
    %s88 = scalar_lea.vmem %s3, 256
    %v89 = vld [vmem:[%s88] sm:$0xff]
    %v90 = vld [vmem:[%s88 + $0x8] sm:$0xff]
    %v91 = vld [vmem:[%s88 + $0x10] sm:$0xff]
    %v92 = vld [vmem:[%s88 + $0x18] sm:$0xff]
    %v93 = vld [vmem:[%s5] sm:$0xff]
    %v94 = vld [vmem:[%s5 + $0x8] sm:$0xff]
    %v95 = vld [vmem:[%s5 + $0x10] sm:$0xff]
    %v96 = vld [vmem:[%s5 + $0x18] sm:$0xff]
    %v97 = vld [vmem:[%s12] sm:$0x1]
    %v98 = vperm.slane %v97, 0
    %vm99 = vcmask 261120
    %v101 = vsel %vm99, %v45, 0
    %v104 = vsel %vm99, %v46, 0
    %v107 = vsel %vm99, %v47, 0
    %v110 = vsel %vm99, %v48, 0
    %112 = vmatpush.msra.mxu0 0.0
    %113 = vmatpush.msra.mxu0 0.0
    %114 = vmatpush.msra.mxu0 0.0
    %115 = vmatpush.msra.mxu0 0.0
    %116 = vmatpush.msra.mxu0 0.0
    %117 = vmatpush.msra.mxu0 0.0
    %118 = vmatpush.msra.mxu0 0.0
    %119 = vmatpush.msra.mxu0 0.0
    %120 = vmatpush.msra.mxu0 0.0
    %121 = vmatpush.msra.mxu0 0.0
    %122 = vmatpush.msra.mxu0 0.0
    %123 = vmatpush.msra.mxu0 0.0
    %124 = vmatpush.msra.mxu0 %v96
    %125 = vmatpush.msra.mxu0 %v95
    %126 = vmatpush.msra.mxu0 %v94
    %127 = vmatpush.msra.mxu0 %v93
    %128 = vmatmul.f32.gmra.mxu0 %v101
    %v129 = vpop.f32.mrf.mxu0
    %v130 = vadd.f32 %v98, %v129
    %131 = vmatmul.f32.gmra.mxu0 %v104
    %v132 = vpop.f32.mrf.mxu0
    %v133 = vadd.f32 %v98, %v132
    %134 = vmatmul.f32.gmra.mxu0 %v107
    %v135 = vpop.f32.mrf.mxu0
    %v136 = vadd.f32 %v98, %v135
    %137 = vmatmul.f32.gmra.mxu0 %v110
    %v138 = vpop.f32.mrf.mxu0
    %v139 = vadd.f32 %v98, %v138
    %140 = vdwg.mxu0
    %v141 = vmax.f32 %v130, 0.0
    %v142 = vmax.f32 %v133, 0.0
    %v143 = vmax.f32 %v136, 0.0
    %v144 = vmax.f32 %v139, 0.0
    %v145 = vld [vmem:[%s6] sm:$0xff]
    %v146 = vld [vmem:[%s6 + $0x8] sm:$0xff]
    %v147 = vld [vmem:[%s12 + $0x1] sm:$0x1]
    %v148 = vperm.slane %v147, 0
    %vm149 = vcmask 130048
    %v151 = vsel %vm149, %v141, 0
    %v154 = vsel %vm149, %v142, 0
    %v157 = vsel %vm149, %v143, 0
    %v160 = vsel %vm149, %v144, 0
    %162 = vmatpush.msra.mxu0 0.0
    %163 = vmatpush.msra.mxu0 0.0
    %164 = vmatpush.msra.mxu0 0.0
    %165 = vmatpush.msra.mxu0 0.0
    %166 = vmatpush.msra.mxu0 0.0
    %167 = vmatpush.msra.mxu0 0.0
    %168 = vmatpush.msra.mxu0 0.0
    %169 = vmatpush.msra.mxu0 0.0
    %170 = vmatpush.msra.mxu0 0.0
    %171 = vmatpush.msra.mxu0 0.0
    %172 = vmatpush.msra.mxu0 0.0
    %173 = vmatpush.msra.mxu0 0.0
    %174 = vmatpush.msra.mxu0 0.0
    %175 = vmatpush.msra.mxu0 0.0
    %176 = vmatpush.msra.mxu0 %v146
    %177 = vmatpush.msra.mxu0 %v145
    %178 = vmatmul.f32.gmra.mxu0 %v151
    %v179 = vpop.f32.mrf.mxu0
    %v180 = vadd.f32 %v148, %v179
    %181 = vmatmul.f32.gmra.mxu0 %v154
    %v182 = vpop.f32.mrf.mxu0
    %v183 = vadd.f32 %v148, %v182
    %184 = vmatmul.f32.gmra.mxu0 %v157
    %v185 = vpop.f32.mrf.mxu0
    %v186 = vadd.f32 %v148, %v185
    %187 = vmatmul.f32.gmra.mxu0 %v160
    %v188 = vpop.f32.mrf.mxu0
    %v189 = vadd.f32 %v148, %v188
    %190 = vdwg.mxu0
    %v191 = vld [vmem:[%s7] sm:$0xff]
    %v192 = vld [vmem:[%s7 + $0x8] sm:$0xff]
    %v193 = vld [vmem:[%s7 + $0x10] sm:$0xff]
    %v194 = vld [vmem:[%s7 + $0x18] sm:$0xff]
    %v195 = vld [vmem:[%s12 + $0x6] sm:$0x1]
    %v196 = vperm.slane %v195, 0
    %v198 = vsel %vm99, %v180, 0
    %v201 = vsel %vm99, %v183, 0
    %v204 = vsel %vm99, %v186, 0
    %v207 = vsel %vm99, %v189, 0
    %209 = vmatpush.msra.mxu0 0.0
    %210 = vmatpush.msra.mxu0 0.0
    %211 = vmatpush.msra.mxu0 0.0
    %212 = vmatpush.msra.mxu0 0.0
    %213 = vmatpush.msra.mxu0 0.0
    %214 = vmatpush.msra.mxu0 0.0
    %215 = vmatpush.msra.mxu0 0.0
    %216 = vmatpush.msra.mxu0 0.0
    %217 = vmatpush.msra.mxu0 0.0
    %218 = vmatpush.msra.mxu0 0.0
    %219 = vmatpush.msra.mxu0 0.0
    %220 = vmatpush.msra.mxu0 0.0
    %221 = vmatpush.msra.mxu0 %v194
    %222 = vmatpush.msra.mxu0 %v193
    %223 = vmatpush.msra.mxu0 %v192
    %224 = vmatpush.msra.mxu0 %v191
    %225 = vmatmul.f32.gmra.mxu0 %v198
    %v226 = vpop.f32.mrf.mxu0
    %v227 = vadd.f32 %v196, %v226
    %228 = vmatmul.f32.gmra.mxu0 %v201
    %v229 = vpop.f32.mrf.mxu0
    %v230 = vadd.f32 %v196, %v229
    %231 = vmatmul.f32.gmra.mxu0 %v204
    %v232 = vpop.f32.mrf.mxu0
    %v233 = vadd.f32 %v196, %v232
    %234 = vmatmul.f32.gmra.mxu0 %v207
    %v235 = vpop.f32.mrf.mxu0
    %v236 = vadd.f32 %v196, %v235
    %237 = vdwg.mxu0
    %s238 = scalar_lea.vmem %s7, 64
    %v239 = vld [vmem:[%s238] sm:$0xff]
    %v240 = vld [vmem:[%s238 + $0x8] sm:$0xff]
    %v241 = vld [vmem:[%s238 + $0x10] sm:$0xff]
    %v242 = vld [vmem:[%s238 + $0x18] sm:$0xff]
    %v243 = vld [vmem:[%s12 + $0x7] sm:$0x1]
    %v244 = vperm.slane %v243, 0
    %245 = vmatpush.msra.mxu0 0.0
    %246 = vmatpush.msra.mxu0 0.0
    %247 = vmatpush.msra.mxu0 0.0
    %248 = vmatpush.msra.mxu0 0.0
    %249 = vmatpush.msra.mxu0 0.0
    %250 = vmatpush.msra.mxu0 0.0
    %251 = vmatpush.msra.mxu0 0.0
    %252 = vmatpush.msra.mxu0 0.0
    %253 = vmatpush.msra.mxu0 0.0
    %254 = vmatpush.msra.mxu0 0.0
    %255 = vmatpush.msra.mxu0 0.0
    %256 = vmatpush.msra.mxu0 0.0
    %257 = vmatpush.msra.mxu0 %v242
    %258 = vmatpush.msra.mxu0 %v241
    %259 = vmatpush.msra.mxu0 %v240
    %260 = vmatpush.msra.mxu0 %v239
    %261 = vmatmul.f32.gmra.mxu0 %v198
    %v262 = vpop.f32.mrf.mxu0
    %v263 = vadd.f32 %v244, %v262
    %264 = vmatmul.f32.gmra.mxu0 %v201
    %v265 = vpop.f32.mrf.mxu0
    %v266 = vadd.f32 %v244, %v265
    %267 = vmatmul.f32.gmra.mxu0 %v204
    %v268 = vpop.f32.mrf.mxu0
    %v269 = vadd.f32 %v244, %v268
    %270 = vmatmul.f32.gmra.mxu0 %v207
    %v271 = vpop.f32.mrf.mxu0
    %v272 = vadd.f32 %v244, %v271
    %273 = vdwg.mxu0
    %s274 = scalar_lea.vmem %s7, 128
    %v275 = vld [vmem:[%s274] sm:$0xff]
    %v276 = vld [vmem:[%s274 + $0x8] sm:$0xff]
    %v277 = vld [vmem:[%s274 + $0x10] sm:$0xff]
    %v278 = vld [vmem:[%s274 + $0x18] sm:$0xff]
    %v279 = vld [vmem:[%s12 + $0x8] sm:$0x1]
    %v280 = vperm.slane %v279, 0
    %281 = vmatpush.msra.mxu0 0.0
    %282 = vmatpush.msra.mxu0 0.0
    %283 = vmatpush.msra.mxu0 0.0
    %284 = vmatpush.msra.mxu0 0.0
    %285 = vmatpush.msra.mxu0 0.0
    %286 = vmatpush.msra.mxu0 0.0
    %287 = vmatpush.msra.mxu0 0.0
    %288 = vmatpush.msra.mxu0 0.0
    %289 = vmatpush.msra.mxu0 0.0
    %290 = vmatpush.msra.mxu0 0.0
    %291 = vmatpush.msra.mxu0 0.0
    %292 = vmatpush.msra.mxu0 0.0
    %293 = vmatpush.msra.mxu0 %v278
    %294 = vmatpush.msra.mxu0 %v277
    %295 = vmatpush.msra.mxu0 %v276
    %296 = vmatpush.msra.mxu0 %v275
    %297 = vmatmul.f32.gmra.mxu0 %v198
    %v298 = vpop.f32.mrf.mxu0
    %v299 = vadd.f32 %v280, %v298
    %300 = vmatmul.f32.gmra.mxu0 %v201
    %v301 = vpop.f32.mrf.mxu0
    %v302 = vadd.f32 %v280, %v301
    %303 = vmatmul.f32.gmra.mxu0 %v204
    %v304 = vpop.f32.mrf.mxu0
    %v305 = vadd.f32 %v280, %v304
    %306 = vmatmul.f32.gmra.mxu0 %v207
    %v307 = vpop.f32.mrf.mxu0
    %v308 = vadd.f32 %v280, %v307
    %309 = vdwg.mxu0
    %v310 = vperm.slane %v53, 0
    %v312 = vsel %vm149, %v227, 0
    %v315 = vsel %vm149, %v230, 0
    %v318 = vsel %vm149, %v263, 0
    %v321 = vsel %vm149, %v266, 0
    %323 = vmatpush.xpose.msra.mxu0 0.0
    %324 = vmatpush.xpose.msra.mxu0 0.0
    %325 = vmatpush.xpose.msra.mxu0 0.0
    %326 = vmatpush.xpose.msra.mxu0 0.0
    %327 = vmatpush.xpose.msra.mxu0 0.0
    %328 = vmatpush.xpose.msra.mxu0 0.0
    %329 = vmatpush.xpose.msra.mxu0 0.0
    %330 = vmatpush.xpose.msra.mxu0 0.0
    %331 = vmatpush.xpose.msra.mxu0 0.0
    %332 = vmatpush.xpose.msra.mxu0 0.0
    %333 = vmatpush.xpose.msra.mxu0 0.0
    %334 = vmatpush.xpose.msra.mxu0 0.0
    %335 = vmatpush.xpose.msra.mxu0 0.0
    %336 = vmatpush.xpose.msra.mxu0 0.0
    %337 = vmatpush.xpose.msra.mxu0 %v321
    %338 = vmatpush.xpose.msra.mxu0 %v318
    %339 = vmatmul.f32.gmra.mxu0 %v312
    %v340 = vpop.f32.mrf.mxu0
    %v341 = vadd.f32 %v310, %v340
    %342 = vmatmul.f32.gmra.mxu0 %v315
    %v343 = vpop.f32.mrf.mxu0
    %v344 = vadd.f32 %v310, %v343
    %345 = vdwg.mxu0
    %v346 = vsel %vm149, %v341, -inf
    %347 = vmax.xlane.f32.xlu0 %v346
    %v348 = vpop.xlane.xlu0 %347
    %v349 = vsel %vm149, %v344, -inf
    %350 = vmax.xlane.f32.xlu0 %v349
    %v351 = vpop.xlane.xlu0 %350
    %v352 = vsub.f32 %v341, %v348
    %v353 = vsub.f32 %v344, %v351
    %v354 = vmul.f32 %v352, 1.442695
    %v355 = vpow.pop %v354
    %v356 = vmul.f32 %v353, 1.442695
    %v357 = vpow.pop %v356
    %v358 = vsel %vm149, %v355, 0.0
    %359 = vadd.xlane.f32.xlu0 %v358
    %v360 = vpop.xlane.xlu0 %359
    %v361 = vsel %vm149, %v357, 0.0
    %362 = vadd.xlane.f32.xlu0 %v361
    %v363 = vpop.xlane.xlu0 %362
    %v364 = vrcp.pop %v360
    %v365 = vrcp.pop %v363
    %v366 = vmul.f32 %v355, %v364
    %v367 = vmul.f32 %v357, %v365
    %v369 = vsel %vm149, %v366, 0
    %v372 = vsel %vm149, %v367, 0
    %374 = vmatpush.msra.mxu0 0.0
    %375 = vmatpush.msra.mxu0 0.0
    %376 = vmatpush.msra.mxu0 0.0
    %377 = vmatpush.msra.mxu0 0.0
    %378 = vmatpush.msra.mxu0 0.0
    %379 = vmatpush.msra.mxu0 0.0
    %380 = vmatpush.msra.mxu0 0.0
    %381 = vmatpush.msra.mxu0 0.0
    %382 = vmatpush.msra.mxu0 0.0
    %383 = vmatpush.msra.mxu0 0.0
    %384 = vmatpush.msra.mxu0 0.0
    %385 = vmatpush.msra.mxu0 0.0
    %386 = vmatpush.msra.mxu0 0.0
    %387 = vmatpush.msra.mxu0 0.0
    %388 = vmatpush.msra.mxu0 %v302
    %389 = vmatpush.msra.mxu0 %v299
    %390 = vmatmul.f32.gmra.mxu0 %v369
    %v391 = vpop.f32.mrf.mxu0
    %v392 = vadd.f32 0.0, %v391
    %393 = vmatmul.f32.gmra.mxu0 %v372
    %v394 = vpop.f32.mrf.mxu0
    %v395 = vadd.f32 0.0, %v394
    %396 = vdwg.mxu0
    %v397 = vld [vmem:[%s8] sm:$0xff]
    %v398 = vld [vmem:[%s8 + $0x8] sm:$0xff]
    %v399 = vperm.slane %v53, 1
    %v401 = vsel %vm149, %v233, 0
    %v404 = vsel %vm149, %v236, 0
    %v407 = vsel %vm149, %v269, 0
    %v410 = vsel %vm149, %v272, 0
    %412 = vmatpush.xpose.msra.mxu0 0.0
    %413 = vmatpush.xpose.msra.mxu0 0.0
    %414 = vmatpush.xpose.msra.mxu0 0.0
    %415 = vmatpush.xpose.msra.mxu0 0.0
    %416 = vmatpush.xpose.msra.mxu0 0.0
    %417 = vmatpush.xpose.msra.mxu0 0.0
    %418 = vmatpush.xpose.msra.mxu0 0.0
    %419 = vmatpush.xpose.msra.mxu0 0.0
    %420 = vmatpush.xpose.msra.mxu0 0.0
    %421 = vmatpush.xpose.msra.mxu0 0.0
    %422 = vmatpush.xpose.msra.mxu0 0.0
    %423 = vmatpush.xpose.msra.mxu0 0.0
    %424 = vmatpush.xpose.msra.mxu0 0.0
    %425 = vmatpush.xpose.msra.mxu0 0.0
    %426 = vmatpush.xpose.msra.mxu0 %v410
    %427 = vmatpush.xpose.msra.mxu0 %v407
    %428 = vmatmul.f32.gmra.mxu0 %v401
    %v429 = vpop.f32.mrf.mxu0
    %v430 = vadd.f32 %v399, %v429
    %431 = vmatmul.f32.gmra.mxu0 %v404
    %v432 = vpop.f32.mrf.mxu0
    %v433 = vadd.f32 %v399, %v432
    %434 = vdwg.mxu0
    %v435 = vsel %vm149, %v430, -inf
    %436 = vmax.xlane.f32.xlu0 %v435
    %v437 = vpop.xlane.xlu0 %436
    %v438 = vsel %vm149, %v433, -inf
    %439 = vmax.xlane.f32.xlu0 %v438
    %v440 = vpop.xlane.xlu0 %439
    %v441 = vsub.f32 %v430, %v437
    %v442 = vsub.f32 %v433, %v440
    %v443 = vmul.f32 %v441, 1.442695
    %v444 = vpow.pop %v443
    %v445 = vmul.f32 %v442, 1.442695
    %v446 = vpow.pop %v445
    %v447 = vsel %vm149, %v444, 0.0
    %448 = vadd.xlane.f32.xlu0 %v447
    %v449 = vpop.xlane.xlu0 %448
    %v450 = vsel %vm149, %v446, 0.0
    %451 = vadd.xlane.f32.xlu0 %v450
    %v452 = vpop.xlane.xlu0 %451
    %v453 = vrcp.pop %v449
    %v454 = vrcp.pop %v452
    %v455 = vmul.f32 %v444, %v453
    %v456 = vmul.f32 %v446, %v454
    %v458 = vsel %vm149, %v455, 0
    %v461 = vsel %vm149, %v456, 0
    %463 = vmatpush.msra.mxu0 0.0
    %464 = vmatpush.msra.mxu0 0.0
    %465 = vmatpush.msra.mxu0 0.0
    %466 = vmatpush.msra.mxu0 0.0
    %467 = vmatpush.msra.mxu0 0.0
    %468 = vmatpush.msra.mxu0 0.0
    %469 = vmatpush.msra.mxu0 0.0
    %470 = vmatpush.msra.mxu0 0.0
    %471 = vmatpush.msra.mxu0 0.0
    %472 = vmatpush.msra.mxu0 0.0
    %473 = vmatpush.msra.mxu0 0.0
    %474 = vmatpush.msra.mxu0 0.0
    %475 = vmatpush.msra.mxu0 0.0
    %476 = vmatpush.msra.mxu0 0.0
    %477 = vmatpush.msra.mxu0 %v308
    %478 = vmatpush.msra.mxu0 %v305
    %479 = vmatmul.f32.gmra.mxu0 %v458
    %v480 = vpop.f32.mrf.mxu0
    %v481 = vadd.f32 0.0, %v480
    %482 = vmatmul.f32.gmra.mxu0 %v461
    %v483 = vpop.f32.mrf.mxu0
    %v484 = vadd.f32 0.0, %v483
    %485 = vdwg.mxu0
    %s486 = scalar_lea.vmem %s7, 32
    %v487 = vld [vmem:[%s486] sm:$0xff]
    %v488 = vld [vmem:[%s486 + $0x8] sm:$0xff]
    %v489 = vld [vmem:[%s486 + $0x10] sm:$0xff]
    %v490 = vld [vmem:[%s486 + $0x18] sm:$0xff]
    %v491 = vld [vmem:[%s12 + $0x9] sm:$0x1]
    %v492 = vperm.slane %v491, 0
    %493 = vmatpush.msra.mxu0 0.0
    %494 = vmatpush.msra.mxu0 0.0
    %495 = vmatpush.msra.mxu0 0.0
    %496 = vmatpush.msra.mxu0 0.0
    %497 = vmatpush.msra.mxu0 0.0
    %498 = vmatpush.msra.mxu0 0.0
    %499 = vmatpush.msra.mxu0 0.0
    %500 = vmatpush.msra.mxu0 0.0
    %501 = vmatpush.msra.mxu0 0.0
    %502 = vmatpush.msra.mxu0 0.0
    %503 = vmatpush.msra.mxu0 0.0
    %504 = vmatpush.msra.mxu0 0.0
    %505 = vmatpush.msra.mxu0 %v490
    %506 = vmatpush.msra.mxu0 %v489
    %507 = vmatpush.msra.mxu0 %v488
    %508 = vmatpush.msra.mxu0 %v487
    %509 = vmatmul.f32.gmra.mxu0 %v198
    %v510 = vpop.f32.mrf.mxu0
    %v511 = vadd.f32 %v492, %v510
    %512 = vmatmul.f32.gmra.mxu0 %v201
    %v513 = vpop.f32.mrf.mxu0
    %v514 = vadd.f32 %v492, %v513
    %515 = vmatmul.f32.gmra.mxu0 %v204
    %v516 = vpop.f32.mrf.mxu0
    %v517 = vadd.f32 %v492, %v516
    %518 = vmatmul.f32.gmra.mxu0 %v207
    %v519 = vpop.f32.mrf.mxu0
    %v520 = vadd.f32 %v492, %v519
    %521 = vdwg.mxu0
    %s522 = scalar_lea.vmem %s7, 96
    %v523 = vld [vmem:[%s522] sm:$0xff]
    %v524 = vld [vmem:[%s522 + $0x8] sm:$0xff]
    %v525 = vld [vmem:[%s522 + $0x10] sm:$0xff]
    %v526 = vld [vmem:[%s522 + $0x18] sm:$0xff]
    %v527 = vld [vmem:[%s12 + $0xa] sm:$0x1]
    %v528 = vperm.slane %v527, 0
    %529 = vmatpush.msra.mxu0 0.0
    %530 = vmatpush.msra.mxu0 0.0
    %531 = vmatpush.msra.mxu0 0.0
    %532 = vmatpush.msra.mxu0 0.0
    %533 = vmatpush.msra.mxu0 0.0
    %534 = vmatpush.msra.mxu0 0.0
    %535 = vmatpush.msra.mxu0 0.0
    %536 = vmatpush.msra.mxu0 0.0
    %537 = vmatpush.msra.mxu0 0.0
    %538 = vmatpush.msra.mxu0 0.0
    %539 = vmatpush.msra.mxu0 0.0
    %540 = vmatpush.msra.mxu0 0.0
    %541 = vmatpush.msra.mxu0 %v526
    %542 = vmatpush.msra.mxu0 %v525
    %543 = vmatpush.msra.mxu0 %v524
    %544 = vmatpush.msra.mxu0 %v523
    %545 = vmatmul.f32.gmra.mxu0 %v198
    %v546 = vpop.f32.mrf.mxu0
    %v547 = vadd.f32 %v528, %v546
    %548 = vmatmul.f32.gmra.mxu0 %v201
    %v549 = vpop.f32.mrf.mxu0
    %v550 = vadd.f32 %v528, %v549
    %551 = vmatmul.f32.gmra.mxu0 %v204
    %v552 = vpop.f32.mrf.mxu0
    %v553 = vadd.f32 %v528, %v552
    %554 = vmatmul.f32.gmra.mxu0 %v207
    %v555 = vpop.f32.mrf.mxu0
    %v556 = vadd.f32 %v528, %v555
    %557 = vdwg.mxu0
    %s558 = scalar_lea.vmem %s7, 160
    %v559 = vld [vmem:[%s558] sm:$0xff]
    %v560 = vld [vmem:[%s558 + $0x8] sm:$0xff]
    %v561 = vld [vmem:[%s558 + $0x10] sm:$0xff]
    %v562 = vld [vmem:[%s558 + $0x18] sm:$0xff]
    %v563 = vld [vmem:[%s12 + $0xb] sm:$0x1]
    %v564 = vperm.slane %v563, 0
    %565 = vmatpush.msra.mxu0 0.0
    %566 = vmatpush.msra.mxu0 0.0
    %567 = vmatpush.msra.mxu0 0.0
    %568 = vmatpush.msra.mxu0 0.0
    %569 = vmatpush.msra.mxu0 0.0
    %570 = vmatpush.msra.mxu0 0.0
    %571 = vmatpush.msra.mxu0 0.0
    %572 = vmatpush.msra.mxu0 0.0
    %573 = vmatpush.msra.mxu0 0.0
    %574 = vmatpush.msra.mxu0 0.0
    %575 = vmatpush.msra.mxu0 0.0
    %576 = vmatpush.msra.mxu0 0.0
    %577 = vmatpush.msra.mxu0 %v562
    %578 = vmatpush.msra.mxu0 %v561
    %579 = vmatpush.msra.mxu0 %v560
    %580 = vmatpush.msra.mxu0 %v559
    %581 = vmatmul.f32.gmra.mxu0 %v198
    %v582 = vpop.f32.mrf.mxu0
    %v583 = vadd.f32 %v564, %v582
    %584 = vmatmul.f32.gmra.mxu0 %v201
    %v585 = vpop.f32.mrf.mxu0
    %v586 = vadd.f32 %v564, %v585
    %587 = vmatmul.f32.gmra.mxu0 %v204
    %v588 = vpop.f32.mrf.mxu0
    %v589 = vadd.f32 %v564, %v588
    %590 = vmatmul.f32.gmra.mxu0 %v207
    %v591 = vpop.f32.mrf.mxu0
    %v592 = vadd.f32 %v564, %v591
    %593 = vdwg.mxu0
    %v595 = vsel %vm149, %v511, 0
    %v598 = vsel %vm149, %v514, 0
    %v601 = vsel %vm149, %v547, 0
    %v604 = vsel %vm149, %v550, 0
    %606 = vmatpush.xpose.msra.mxu0 0.0
    %607 = vmatpush.xpose.msra.mxu0 0.0
    %608 = vmatpush.xpose.msra.mxu0 0.0
    %609 = vmatpush.xpose.msra.mxu0 0.0
    %610 = vmatpush.xpose.msra.mxu0 0.0
    %611 = vmatpush.xpose.msra.mxu0 0.0
    %612 = vmatpush.xpose.msra.mxu0 0.0
    %613 = vmatpush.xpose.msra.mxu0 0.0
    %614 = vmatpush.xpose.msra.mxu0 0.0
    %615 = vmatpush.xpose.msra.mxu0 0.0
    %616 = vmatpush.xpose.msra.mxu0 0.0
    %617 = vmatpush.xpose.msra.mxu0 0.0
    %618 = vmatpush.xpose.msra.mxu0 0.0
    %619 = vmatpush.xpose.msra.mxu0 0.0
    %620 = vmatpush.xpose.msra.mxu0 %v604
    %621 = vmatpush.xpose.msra.mxu0 %v601
    %622 = vmatmul.f32.gmra.mxu0 %v595
    %v623 = vpop.f32.mrf.mxu0
    %v624 = vadd.f32 %v310, %v623
    %625 = vmatmul.f32.gmra.mxu0 %v598
    %v626 = vpop.f32.mrf.mxu0
    %v627 = vadd.f32 %v310, %v626
    %628 = vdwg.mxu0
    %v629 = vsel %vm149, %v624, -inf
    %630 = vmax.xlane.f32.xlu0 %v629
    %v631 = vpop.xlane.xlu0 %630
    %v632 = vsel %vm149, %v627, -inf
    %633 = vmax.xlane.f32.xlu0 %v632
    %v634 = vpop.xlane.xlu0 %633
    %v635 = vsub.f32 %v624, %v631
    %v636 = vsub.f32 %v627, %v634
    %v637 = vmul.f32 %v635, 1.442695
    %v638 = vpow.pop %v637
    %v639 = vmul.f32 %v636, 1.442695
    %v640 = vpow.pop %v639
    %v641 = vsel %vm149, %v638, 0.0
    %642 = vadd.xlane.f32.xlu0 %v641
    %v643 = vpop.xlane.xlu0 %642
    %v644 = vsel %vm149, %v640, 0.0
    %645 = vadd.xlane.f32.xlu0 %v644
    %v646 = vpop.xlane.xlu0 %645
    %v647 = vrcp.pop %v643
    %v648 = vrcp.pop %v646
    %v649 = vmul.f32 %v638, %v647
    %v650 = vmul.f32 %v640, %v648
    %v652 = vsel %vm149, %v649, 0
    %v655 = vsel %vm149, %v650, 0
    %657 = vmatpush.msra.mxu0 0.0
    %658 = vmatpush.msra.mxu0 0.0
    %659 = vmatpush.msra.mxu0 0.0
    %660 = vmatpush.msra.mxu0 0.0
    %661 = vmatpush.msra.mxu0 0.0
    %662 = vmatpush.msra.mxu0 0.0
    %663 = vmatpush.msra.mxu0 0.0
    %664 = vmatpush.msra.mxu0 0.0
    %665 = vmatpush.msra.mxu0 0.0
    %666 = vmatpush.msra.mxu0 0.0
    %667 = vmatpush.msra.mxu0 0.0
    %668 = vmatpush.msra.mxu0 0.0
    %669 = vmatpush.msra.mxu0 0.0
    %670 = vmatpush.msra.mxu0 0.0
    %671 = vmatpush.msra.mxu0 %v586
    %672 = vmatpush.msra.mxu0 %v583
    %673 = vmatmul.f32.gmra.mxu0 %v652
    %v674 = vpop.f32.mrf.mxu0
    %v675 = vadd.f32 0.0, %v674
    %676 = vmatmul.f32.gmra.mxu0 %v655
    %v677 = vpop.f32.mrf.mxu0
    %v678 = vadd.f32 0.0, %v677
    %679 = vdwg.mxu0
    %s680 = scalar_lea.vmem %s8, 16
    %v681 = vld [vmem:[%s680] sm:$0xff]
    %v682 = vld [vmem:[%s680 + $0x8] sm:$0xff]
    %v684 = vsel %vm149, %v675, 0
    %v687 = vsel %vm149, %v678, 0
    %689 = vmatpush.msra.mxu0 0.0
    %690 = vmatpush.msra.mxu0 0.0
    %691 = vmatpush.msra.mxu0 0.0
    %692 = vmatpush.msra.mxu0 0.0
    %693 = vmatpush.msra.mxu0 0.0
    %694 = vmatpush.msra.mxu0 0.0
    %695 = vmatpush.msra.mxu0 0.0
    %696 = vmatpush.msra.mxu0 0.0
    %697 = vmatpush.msra.mxu0 0.0
    %698 = vmatpush.msra.mxu0 0.0
    %699 = vmatpush.msra.mxu0 0.0
    %700 = vmatpush.msra.mxu0 0.0
    %701 = vmatpush.msra.mxu0 0.0
    %702 = vmatpush.msra.mxu0 0.0
    %703 = vmatpush.msra.mxu0 %v682
    %704 = vmatpush.msra.mxu0 %v681
    %705 = vmatmul.f32.gmra.mxu0 %v684
    %v706 = vpop.f32.mrf.mxu0
    %v707 = vadd.f32 0.0, %v706
    %708 = vmatmul.f32.gmra.mxu0 %v687
    %v709 = vpop.f32.mrf.mxu0
    %v710 = vadd.f32 0.0, %v709
    %711 = vdwg.mxu0
    %v713 = vsel %vm149, %v392, 0
    %v716 = vsel %vm149, %v395, 0
    %718 = vmatpush.msra.mxu0 0.0
    %719 = vmatpush.msra.mxu0 0.0
    %720 = vmatpush.msra.mxu0 0.0
    %721 = vmatpush.msra.mxu0 0.0
    %722 = vmatpush.msra.mxu0 0.0
    %723 = vmatpush.msra.mxu0 0.0
    %724 = vmatpush.msra.mxu0 0.0
    %725 = vmatpush.msra.mxu0 0.0
    %726 = vmatpush.msra.mxu0 0.0
    %727 = vmatpush.msra.mxu0 0.0
    %728 = vmatpush.msra.mxu0 0.0
    %729 = vmatpush.msra.mxu0 0.0
    %730 = vmatpush.msra.mxu0 0.0
    %731 = vmatpush.msra.mxu0 0.0
    %732 = vmatpush.msra.mxu0 %v398
    %733 = vmatpush.msra.mxu0 %v397
    %734 = vmatmul.f32.gmra.mxu0 %v713
    %v735 = vpop.f32.mrf.mxu0
    %v736 = vadd.f32 %v707, %v735
    %737 = vmatmul.f32.gmra.mxu0 %v716
    %v738 = vpop.f32.mrf.mxu0
    %v739 = vadd.f32 %v710, %v738
    %740 = vdwg.mxu0
    %v742 = vsel %vm149, %v517, 0
    %v745 = vsel %vm149, %v520, 0
    %v748 = vsel %vm149, %v553, 0
    %v751 = vsel %vm149, %v556, 0
    %753 = vmatpush.xpose.msra.mxu0 0.0
    %754 = vmatpush.xpose.msra.mxu0 0.0
    %755 = vmatpush.xpose.msra.mxu0 0.0
    %756 = vmatpush.xpose.msra.mxu0 0.0
    %757 = vmatpush.xpose.msra.mxu0 0.0
    %758 = vmatpush.xpose.msra.mxu0 0.0
    %759 = vmatpush.xpose.msra.mxu0 0.0
    %760 = vmatpush.xpose.msra.mxu0 0.0
    %761 = vmatpush.xpose.msra.mxu0 0.0
    %762 = vmatpush.xpose.msra.mxu0 0.0
    %763 = vmatpush.xpose.msra.mxu0 0.0
    %764 = vmatpush.xpose.msra.mxu0 0.0
    %765 = vmatpush.xpose.msra.mxu0 0.0
    %766 = vmatpush.xpose.msra.mxu0 0.0
    %767 = vmatpush.xpose.msra.mxu0 %v751
    %768 = vmatpush.xpose.msra.mxu0 %v748
    %769 = vmatmul.f32.gmra.mxu0 %v742
    %v770 = vpop.f32.mrf.mxu0
    %v771 = vadd.f32 %v399, %v770
    %772 = vmatmul.f32.gmra.mxu0 %v745
    %v773 = vpop.f32.mrf.mxu0
    %v774 = vadd.f32 %v399, %v773
    %775 = vdwg.mxu0
    %v776 = vsel %vm149, %v771, -inf
    %777 = vmax.xlane.f32.xlu0 %v776
    %v778 = vpop.xlane.xlu0 %777
    %v779 = vsel %vm149, %v774, -inf
    %780 = vmax.xlane.f32.xlu0 %v779
    %v781 = vpop.xlane.xlu0 %780
    %v782 = vsub.f32 %v771, %v778
    %v783 = vsub.f32 %v774, %v781
    %v784 = vmul.f32 %v782, 1.442695
    %v785 = vpow.pop %v784
    %v786 = vmul.f32 %v783, 1.442695
    %v787 = vpow.pop %v786
    %v788 = vsel %vm149, %v785, 0.0
    %789 = vadd.xlane.f32.xlu0 %v788
    %v790 = vpop.xlane.xlu0 %789
    %v791 = vsel %vm149, %v787, 0.0
    %792 = vadd.xlane.f32.xlu0 %v791
    %v793 = vpop.xlane.xlu0 %792
    %v794 = vrcp.pop %v790
    %v795 = vrcp.pop %v793
    %v796 = vmul.f32 %v785, %v794
    %v797 = vmul.f32 %v787, %v795
    %v799 = vsel %vm149, %v796, 0
    %v802 = vsel %vm149, %v797, 0
    %804 = vmatpush.msra.mxu0 0.0
    %805 = vmatpush.msra.mxu0 0.0
    %806 = vmatpush.msra.mxu0 0.0
    %807 = vmatpush.msra.mxu0 0.0
    %808 = vmatpush.msra.mxu0 0.0
    %809 = vmatpush.msra.mxu0 0.0
    %810 = vmatpush.msra.mxu0 0.0
    %811 = vmatpush.msra.mxu0 0.0
    %812 = vmatpush.msra.mxu0 0.0
    %813 = vmatpush.msra.mxu0 0.0
    %814 = vmatpush.msra.mxu0 0.0
    %815 = vmatpush.msra.mxu0 0.0
    %816 = vmatpush.msra.mxu0 0.0
    %817 = vmatpush.msra.mxu0 0.0
    %818 = vmatpush.msra.mxu0 %v592
    %819 = vmatpush.msra.mxu0 %v589
    %820 = vmatmul.f32.gmra.mxu0 %v799
    %v821 = vpop.f32.mrf.mxu0
    %v822 = vadd.f32 0.0, %v821
    %823 = vmatmul.f32.gmra.mxu0 %v802
    %v824 = vpop.f32.mrf.mxu0
    %v825 = vadd.f32 0.0, %v824
    %826 = vdwg.mxu0
    %v828 = vsel %vm149, %v822, 0
    %v831 = vsel %vm149, %v825, 0
    %833 = vmatpush.msra.mxu0 0.0
    %834 = vmatpush.msra.mxu0 0.0
    %835 = vmatpush.msra.mxu0 0.0
    %836 = vmatpush.msra.mxu0 0.0
    %837 = vmatpush.msra.mxu0 0.0
    %838 = vmatpush.msra.mxu0 0.0
    %839 = vmatpush.msra.mxu0 0.0
    %840 = vmatpush.msra.mxu0 0.0
    %841 = vmatpush.msra.mxu0 0.0
    %842 = vmatpush.msra.mxu0 0.0
    %843 = vmatpush.msra.mxu0 0.0
    %844 = vmatpush.msra.mxu0 0.0
    %845 = vmatpush.msra.mxu0 0.0
    %846 = vmatpush.msra.mxu0 0.0
    %847 = vmatpush.msra.mxu0 %v682
    %848 = vmatpush.msra.mxu0 %v681
    %849 = vmatmul.f32.gmra.mxu0 %v828
    %v850 = vpop.f32.mrf.mxu0
    %v851 = vadd.f32 0.0, %v850
    %852 = vmatmul.f32.gmra.mxu0 %v831
    %v853 = vpop.f32.mrf.mxu0
    %v854 = vadd.f32 0.0, %v853
    %855 = vdwg.mxu0
    %v857 = vsel %vm149, %v481, 0
    %v860 = vsel %vm149, %v484, 0
    %862 = vmatpush.msra.mxu0 0.0
    %863 = vmatpush.msra.mxu0 0.0
    %864 = vmatpush.msra.mxu0 0.0
    %865 = vmatpush.msra.mxu0 0.0
    %866 = vmatpush.msra.mxu0 0.0
    %867 = vmatpush.msra.mxu0 0.0
    %868 = vmatpush.msra.mxu0 0.0
    %869 = vmatpush.msra.mxu0 0.0
    %870 = vmatpush.msra.mxu0 0.0
    %871 = vmatpush.msra.mxu0 0.0
    %872 = vmatpush.msra.mxu0 0.0
    %873 = vmatpush.msra.mxu0 0.0
    %874 = vmatpush.msra.mxu0 0.0
    %875 = vmatpush.msra.mxu0 0.0
    %876 = vmatpush.msra.mxu0 %v398
    %877 = vmatpush.msra.mxu0 %v397
    %878 = vmatmul.f32.gmra.mxu0 %v857
    %v879 = vpop.f32.mrf.mxu0
    %v880 = vadd.f32 %v851, %v879
    %881 = vmatmul.f32.gmra.mxu0 %v860
    %v882 = vpop.f32.mrf.mxu0
    %v883 = vadd.f32 %v854, %v882
    %884 = vdwg.mxu0
    %v885 = vld [vmem:[%s12 + $0x3] sm:$0x1]
    %v886 = vperm.slane %v885, 0
    %v887 = vadd.f32 %v736, %v886
    %v888 = vadd.f32 %v739, %v886
    %v889 = vadd.f32 %v880, %v886
    %v890 = vadd.f32 %v883, %v886
    %v891 = vadd.f32 %v887, %v180
    %v892 = vadd.f32 %v888, %v183
    %v893 = vadd.f32 %v889, %v186
    %v894 = vadd.f32 %v890, %v189
    %v895 = vld [vmem:[%s4] sm:$0xff]
    %v896 = vld [vmem:[%s4 + $0x8] sm:$0xff]
    %v897 = vld [vmem:[%s4 + $0x10] sm:$0xff]
    %v898 = vld [vmem:[%s4 + $0x18] sm:$0xff]
    %s899 = scalar_lea.vmem %s4, 32
    %v900 = vld [vmem:[%s899] sm:$0xff]
    %v901 = vld [vmem:[%s899 + $0x8] sm:$0xff]
    %v902 = vld [vmem:[%s899 + $0x10] sm:$0xff]
    %v903 = vld [vmem:[%s899 + $0x18] sm:$0xff]
    %v904 = vsel %vm99, %v891, 0.0
    %905 = vadd.xlane.f32.xlu0 %v904
    %v906 = vpop.xlane.xlu0 %905
    %v907 = vsel %vm99, %v892, 0.0
    %908 = vadd.xlane.f32.xlu0 %v907
    %v909 = vpop.xlane.xlu0 %908
    %v910 = vsel %vm99, %v893, 0.0
    %911 = vadd.xlane.f32.xlu0 %v910
    %v912 = vpop.xlane.xlu0 %911
    %v913 = vsel %vm99, %v894, 0.0
    %914 = vadd.xlane.f32.xlu0 %v913
    %v915 = vpop.xlane.xlu0 %914
    %v916 = vrcp.pop 32.0
    %v917 = vmul.f32 32.0, %v916
    %v918 = vsub.f32 1.0, %v917
    %v919 = vmul.f32 %v916, %v918
    %v920 = vadd.f32 %v916, %v919
    %vm921 = vweird.f32 %v916
    %v922 = vsel %vm921, %v916, %v920
    %v923 = vmul.f32 %v906, %v922
    %v924 = vmul.f32 %v909, %v922
    %v925 = vmul.f32 %v912, %v922
    %v926 = vmul.f32 %v915, %v922
    %v927 = vsub.f32 %v891, %v923
    %v928 = vsub.f32 %v892, %v924
    %v929 = vsub.f32 %v893, %v925
    %v930 = vsub.f32 %v894, %v926
    %v931 = vmul.f32 %v927, %v927
    %v932 = vmul.f32 %v928, %v928
    %v933 = vmul.f32 %v929, %v929
    %v934 = vmul.f32 %v930, %v930
    %v935 = vsel %vm99, %v931, 0.0
    %936 = vadd.xlane.f32.xlu0 %v935
    %v937 = vpop.xlane.xlu0 %936
    %v938 = vsel %vm99, %v932, 0.0
    %939 = vadd.xlane.f32.xlu0 %v938
    %v940 = vpop.xlane.xlu0 %939
    %v941 = vsel %vm99, %v933, 0.0
    %942 = vadd.xlane.f32.xlu0 %v941
    %v943 = vpop.xlane.xlu0 %942
    %v944 = vsel %vm99, %v934, 0.0
    %945 = vadd.xlane.f32.xlu0 %v944
    %v946 = vpop.xlane.xlu0 %945
    %v947 = vmul.f32 %v937, %v922
    %v948 = vmul.f32 %v940, %v922
    %v949 = vmul.f32 %v943, %v922
    %v950 = vmul.f32 %v946, %v922
    %v951 = vadd.f32 %v947, 1e-05
    %v952 = vadd.f32 %v948, 1e-05
    %v953 = vadd.f32 %v949, 1e-05
    %v954 = vadd.f32 %v950, 1e-05
    %v955 = vrsqrt.pop %v951
    %v956 = vmul.f32 %v955, %v951
    %v957 = vmul.f32 %v956, %v955
    %v958 = vmul.f32 0.5, %v957
    %v959 = vsub.f32 1.5, %v958
    %v960 = vmul.f32 %v955, %v959
    %vm961 = vweird.f32 %v951
    %vm962 = vweird.f32 %v955
    %vm963 = vmor %vm961, %vm962
    %v964 = vsel %vm963, %v955, %v960
    %v965 = vrsqrt.pop %v952
    %v966 = vmul.f32 %v965, %v952
    %v967 = vmul.f32 %v966, %v965
    %v968 = vmul.f32 0.5, %v967
    %v969 = vsub.f32 1.5, %v968
    %v970 = vmul.f32 %v965, %v969
    %vm971 = vweird.f32 %v952
    %vm972 = vweird.f32 %v965
    %vm973 = vmor %vm971, %vm972
    %v974 = vsel %vm973, %v965, %v970
    %v975 = vrsqrt.pop %v953
    %v976 = vmul.f32 %v975, %v953
    %v977 = vmul.f32 %v976, %v975
    %v978 = vmul.f32 0.5, %v977
    %v979 = vsub.f32 1.5, %v978
    %v980 = vmul.f32 %v975, %v979
    %vm981 = vweird.f32 %v953
    %vm982 = vweird.f32 %v975
    %vm983 = vmor %vm981, %vm982
    %v984 = vsel %vm983, %v975, %v980
    %v985 = vrsqrt.pop %v954
    %v986 = vmul.f32 %v985, %v954
    %v987 = vmul.f32 %v986, %v985
    %v988 = vmul.f32 0.5, %v987
    %v989 = vsub.f32 1.5, %v988
    %v990 = vmul.f32 %v985, %v989
    %vm991 = vweird.f32 %v954
    %vm992 = vweird.f32 %v985
    %vm993 = vmor %vm991, %vm992
    %v994 = vsel %vm993, %v985, %v990
    %v995 = vmul.f32 %v927, %v964
    %v996 = vmul.f32 %v928, %v974
    %v997 = vmul.f32 %v929, %v984
    %v998 = vmul.f32 %v930, %v994
    %v999 = vmul.f32 %v895, %v995
    %v1000 = vmul.f32 %v896, %v996
    %v1001 = vmul.f32 %v897, %v997
    %v1002 = vmul.f32 %v898, %v998
    %v1003 = vadd.f32 %v999, %v900
    %v1004 = vadd.f32 %v1000, %v901
    %v1005 = vadd.f32 %v1001, %v902
    %v1006 = vadd.f32 %v1002, %v903
    %1008 = vset.pattern.permute.xlu0 0
    %1009 = vperm.xlu0 %1008, %v49
    %v1010 = vpop.permute.xlu0 %1009
    %1013 = vset.pattern.permute.xlu0 0
    %1014 = vperm.xlu0 %1013, %v50
    %v1015 = vpop.permute.xlu0 %1014
    %1018 = vset.pattern.permute.xlu0 0
    %1019 = vperm.xlu0 %1018, %v51
    %v1020 = vpop.permute.xlu0 %1019
    %1023 = vset.pattern.permute.xlu0 0
    %1024 = vperm.xlu0 %1023, %v52
    %v1025 = vpop.permute.xlu0 %1024
    %v1027 = vmul.f32 %v1003, %v1010
    %v1028 = vmul.f32 %v1004, %v1015
    %v1029 = vmul.f32 %v1005, %v1020
    %v1030 = vmul.f32 %v1006, %v1025
    %v1031 = vrot.slane %v1027, 4
    %v1032 = vrot.slane %v1028, 4
    %v1033 = vrot.slane %v1029, 4
    %v1034 = vrot.slane %v1030, 4
    %v1035 = vlaneseq
    %v1036 = vshrl.u32 %v1035, 7
    %vm1037 = vcmp.lt.s32.totalorder %v1036, 4
    %v1038 = vsel %vm1037, %v1033, %v1034
    %v1039 = vsel %vm1037, %v1032, %v1033
    %v1040 = vsel %vm1037, %v1031, %v1032
    %v1041 = vsel %vm1037, %v1034, %v1031
    %1043 = vset.pattern.permute.xlu0 0
    %1044 = vperm.xlu0 %1043, %v54
    %v1045 = vpop.permute.xlu0 %1044
    %1048 = vset.pattern.permute.xlu0 0
    %1049 = vperm.xlu0 %1048, %v55
    %v1050 = vpop.permute.xlu0 %1049
    %1053 = vset.pattern.permute.xlu0 0
    %1054 = vperm.xlu0 %1053, %v56
    %v1055 = vpop.permute.xlu0 %1054
    %1058 = vset.pattern.permute.xlu0 0
    %1059 = vperm.xlu0 %1058, %v57
    %v1060 = vpop.permute.xlu0 %1059
    %v1062 = vmul.f32 %v1041, %v1045
    %v1063 = vmul.f32 %v1040, %v1050
    %v1064 = vmul.f32 %v1039, %v1055
    %v1065 = vmul.f32 %v1038, %v1060
    %v1066 = vld [vmem:[%s9] sm:$0xff]
    %v1067 = vld [vmem:[%s9 + $0x8] sm:$0xff]
    %v1068 = vld [vmem:[%s9 + $0x10] sm:$0xff]
    %v1069 = vld [vmem:[%s9 + $0x18] sm:$0xff]
    %v1070 = vrot.slane %v1027, 5
    %v1071 = vrot.slane %v1028, 5
    %v1072 = vrot.slane %v1029, 5
    %v1073 = vrot.slane %v1030, 5
    %vm1074 = vcmp.lt.s32.totalorder %v1036, 3
    %v1075 = vsel %vm1074, %v1072, %v1073
    %v1076 = vsel %vm1074, %v1071, %v1072
    %v1077 = vsel %vm1074, %v1070, %v1071
    %v1078 = vsel %vm1074, %v1073, %v1070
    %1080 = vset.pattern.permute.xlu0 0
    %1081 = vperm.xlu0 %1080, %v59
    %v1082 = vpop.permute.xlu0 %1081
    %1085 = vset.pattern.permute.xlu0 0
    %1086 = vperm.xlu0 %1085, %v60
    %v1087 = vpop.permute.xlu0 %1086
    %1090 = vset.pattern.permute.xlu0 0
    %1091 = vperm.xlu0 %1090, %v61
    %v1092 = vpop.permute.xlu0 %1091
    %1095 = vset.pattern.permute.xlu0 0
    %1096 = vperm.xlu0 %1095, %v62
    %v1097 = vpop.permute.xlu0 %1096
    %v1099 = vmul.f32 %v1078, %v1082
    %v1100 = vmul.f32 %v1077, %v1087
    %v1101 = vmul.f32 %v1076, %v1092
    %v1102 = vmul.f32 %v1075, %v1097
    %s1103 = scalar_lea.vmem %s9, 32
    %v1104 = vld [vmem:[%s1103] sm:$0xff]
    %v1105 = vld [vmem:[%s1103 + $0x8] sm:$0xff]
    %v1106 = vld [vmem:[%s1103 + $0x10] sm:$0xff]
    %v1107 = vld [vmem:[%s1103 + $0x18] sm:$0xff]
    %v1109 = vsel %vm99, %v1099, 0
    %v1112 = vsel %vm99, %v1100, 0
    %v1115 = vsel %vm99, %v1101, 0
    %v1118 = vsel %vm99, %v1102, 0
    %1120 = vmatpush.msra.mxu0 0.0
    %1121 = vmatpush.msra.mxu0 0.0
    %1122 = vmatpush.msra.mxu0 0.0
    %1123 = vmatpush.msra.mxu0 0.0
    %1124 = vmatpush.msra.mxu0 0.0
    %1125 = vmatpush.msra.mxu0 0.0
    %1126 = vmatpush.msra.mxu0 0.0
    %1127 = vmatpush.msra.mxu0 0.0
    %1128 = vmatpush.msra.mxu0 0.0
    %1129 = vmatpush.msra.mxu0 0.0
    %1130 = vmatpush.msra.mxu0 0.0
    %1131 = vmatpush.msra.mxu0 0.0
    %1132 = vmatpush.msra.mxu0 %v1107
    %1133 = vmatpush.msra.mxu0 %v1106
    %1134 = vmatpush.msra.mxu0 %v1105
    %1135 = vmatpush.msra.mxu0 %v1104
    %1136 = vmatmul.f32.gmra.mxu0 %v1109
    %v1137 = vpop.f32.mrf.mxu0
    %v1138 = vadd.f32 0.0, %v1137
    %1139 = vmatmul.f32.gmra.mxu0 %v1112
    %v1140 = vpop.f32.mrf.mxu0
    %v1141 = vadd.f32 0.0, %v1140
    %1142 = vmatmul.f32.gmra.mxu0 %v1115
    %v1143 = vpop.f32.mrf.mxu0
    %v1144 = vadd.f32 0.0, %v1143
    %1145 = vmatmul.f32.gmra.mxu0 %v1118
    %v1146 = vpop.f32.mrf.mxu0
    %v1147 = vadd.f32 0.0, %v1146
    %1148 = vdwg.mxu0
    %v1150 = vsel %vm99, %v1062, 0
    %v1153 = vsel %vm99, %v1063, 0
    %v1156 = vsel %vm99, %v1064, 0
    %v1159 = vsel %vm99, %v1065, 0
    %1161 = vmatpush.msra.mxu0 0.0
    %1162 = vmatpush.msra.mxu0 0.0
    %1163 = vmatpush.msra.mxu0 0.0
    %1164 = vmatpush.msra.mxu0 0.0
    %1165 = vmatpush.msra.mxu0 0.0
    %1166 = vmatpush.msra.mxu0 0.0
    %1167 = vmatpush.msra.mxu0 0.0
    %1168 = vmatpush.msra.mxu0 0.0
    %1169 = vmatpush.msra.mxu0 0.0
    %1170 = vmatpush.msra.mxu0 0.0
    %1171 = vmatpush.msra.mxu0 0.0
    %1172 = vmatpush.msra.mxu0 0.0
    %1173 = vmatpush.msra.mxu0 %v1069
    %1174 = vmatpush.msra.mxu0 %v1068
    %1175 = vmatpush.msra.mxu0 %v1067
    %1176 = vmatpush.msra.mxu0 %v1066
    %1177 = vmatmul.f32.gmra.mxu0 %v1150
    %v1178 = vpop.f32.mrf.mxu0
    %v1179 = vadd.f32 %v1138, %v1178
    %1180 = vmatmul.f32.gmra.mxu0 %v1153
    %v1181 = vpop.f32.mrf.mxu0
    %v1182 = vadd.f32 %v1141, %v1181
    %1183 = vmatmul.f32.gmra.mxu0 %v1156
    %v1184 = vpop.f32.mrf.mxu0
    %v1185 = vadd.f32 %v1144, %v1184
    %1186 = vmatmul.f32.gmra.mxu0 %v1159
    %v1187 = vpop.f32.mrf.mxu0
    %v1188 = vadd.f32 %v1147, %v1187
    %1189 = vdwg.mxu0
    %v1190 = vrot.slane %v1027, 6
    %v1191 = vrot.slane %v1028, 6
    %v1192 = vrot.slane %v1029, 6
    %v1193 = vrot.slane %v1030, 6
    %vm1194 = vcmp.lt.s32.totalorder %v1036, 2
    %v1195 = vsel %vm1194, %v1192, %v1193
    %v1196 = vsel %vm1194, %v1191, %v1192
    %v1197 = vsel %vm1194, %v1190, %v1191
    %v1198 = vsel %vm1194, %v1193, %v1190
    %1200 = vset.pattern.permute.xlu0 0
    %1201 = vperm.xlu0 %1200, %v64
    %v1202 = vpop.permute.xlu0 %1201
    %1205 = vset.pattern.permute.xlu0 0
    %1206 = vperm.xlu0 %1205, %v65
    %v1207 = vpop.permute.xlu0 %1206
    %1210 = vset.pattern.permute.xlu0 0
    %1211 = vperm.xlu0 %1210, %v66
    %v1212 = vpop.permute.xlu0 %1211
    %1215 = vset.pattern.permute.xlu0 0
    %1216 = vperm.xlu0 %1215, %v67
    %v1217 = vpop.permute.xlu0 %1216
    %v1219 = vmul.f32 %v1198, %v1202
    %v1220 = vmul.f32 %v1197, %v1207
    %v1221 = vmul.f32 %v1196, %v1212
    %v1222 = vmul.f32 %v1195, %v1217
    %s1223 = scalar_lea.vmem %s9, 64
    %v1224 = vld [vmem:[%s1223] sm:$0xff]
    %v1225 = vld [vmem:[%s1223 + $0x8] sm:$0xff]
    %v1226 = vld [vmem:[%s1223 + $0x10] sm:$0xff]
    %v1227 = vld [vmem:[%s1223 + $0x18] sm:$0xff]
    %v1229 = vsel %vm99, %v1219, 0
    %v1232 = vsel %vm99, %v1220, 0
    %v1235 = vsel %vm99, %v1221, 0
    %v1238 = vsel %vm99, %v1222, 0
    %1240 = vmatpush.msra.mxu0 0.0
    %1241 = vmatpush.msra.mxu0 0.0
    %1242 = vmatpush.msra.mxu0 0.0
    %1243 = vmatpush.msra.mxu0 0.0
    %1244 = vmatpush.msra.mxu0 0.0
    %1245 = vmatpush.msra.mxu0 0.0
    %1246 = vmatpush.msra.mxu0 0.0
    %1247 = vmatpush.msra.mxu0 0.0
    %1248 = vmatpush.msra.mxu0 0.0
    %1249 = vmatpush.msra.mxu0 0.0
    %1250 = vmatpush.msra.mxu0 0.0
    %1251 = vmatpush.msra.mxu0 0.0
    %1252 = vmatpush.msra.mxu0 %v1227
    %1253 = vmatpush.msra.mxu0 %v1226
    %1254 = vmatpush.msra.mxu0 %v1225
    %1255 = vmatpush.msra.mxu0 %v1224
    %1256 = vmatmul.f32.gmra.mxu0 %v1229
    %v1257 = vpop.f32.mrf.mxu0
    %v1258 = vadd.f32 0.0, %v1257
    %1259 = vmatmul.f32.gmra.mxu0 %v1232
    %v1260 = vpop.f32.mrf.mxu0
    %v1261 = vadd.f32 0.0, %v1260
    %1262 = vmatmul.f32.gmra.mxu0 %v1235
    %v1263 = vpop.f32.mrf.mxu0
    %v1264 = vadd.f32 0.0, %v1263
    %1265 = vmatmul.f32.gmra.mxu0 %v1238
    %v1266 = vpop.f32.mrf.mxu0
    %v1267 = vadd.f32 0.0, %v1266
    %1268 = vdwg.mxu0
    %v1269 = vadd.f32 %v1179, %v1258
    %v1270 = vadd.f32 %v1182, %v1261
    %v1271 = vadd.f32 %v1185, %v1264
    %v1272 = vadd.f32 %v1188, %v1267
    %v1273 = vrot.slane %v1027, 7
    %v1274 = vrot.slane %v1028, 7
    %v1275 = vrot.slane %v1029, 7
    %v1276 = vrot.slane %v1030, 7
    %vm1277 = vcmp.lt.s32.totalorder %v1036, 1
    %v1278 = vsel %vm1277, %v1275, %v1276
    %v1279 = vsel %vm1277, %v1274, %v1275
    %v1280 = vsel %vm1277, %v1273, %v1274
    %v1281 = vsel %vm1277, %v1276, %v1273
    %1283 = vset.pattern.permute.xlu0 0
    %1284 = vperm.xlu0 %1283, %v69
    %v1285 = vpop.permute.xlu0 %1284
    %1288 = vset.pattern.permute.xlu0 0
    %1289 = vperm.xlu0 %1288, %v70
    %v1290 = vpop.permute.xlu0 %1289
    %1293 = vset.pattern.permute.xlu0 0
    %1294 = vperm.xlu0 %1293, %v71
    %v1295 = vpop.permute.xlu0 %1294
    %1298 = vset.pattern.permute.xlu0 0
    %1299 = vperm.xlu0 %1298, %v72
    %v1300 = vpop.permute.xlu0 %1299
    %v1302 = vmul.f32 %v1281, %v1285
    %v1303 = vmul.f32 %v1280, %v1290
    %v1304 = vmul.f32 %v1279, %v1295
    %v1305 = vmul.f32 %v1278, %v1300
    %s1306 = scalar_lea.vmem %s9, 96
    %v1307 = vld [vmem:[%s1306] sm:$0xff]
    %v1308 = vld [vmem:[%s1306 + $0x8] sm:$0xff]
    %v1309 = vld [vmem:[%s1306 + $0x10] sm:$0xff]
    %v1310 = vld [vmem:[%s1306 + $0x18] sm:$0xff]
    %v1312 = vsel %vm99, %v1302, 0
    %v1315 = vsel %vm99, %v1303, 0
    %v1318 = vsel %vm99, %v1304, 0
    %v1321 = vsel %vm99, %v1305, 0
    %1323 = vmatpush.msra.mxu0 0.0
    %1324 = vmatpush.msra.mxu0 0.0
    %1325 = vmatpush.msra.mxu0 0.0
    %1326 = vmatpush.msra.mxu0 0.0
    %1327 = vmatpush.msra.mxu0 0.0
    %1328 = vmatpush.msra.mxu0 0.0
    %1329 = vmatpush.msra.mxu0 0.0
    %1330 = vmatpush.msra.mxu0 0.0
    %1331 = vmatpush.msra.mxu0 0.0
    %1332 = vmatpush.msra.mxu0 0.0
    %1333 = vmatpush.msra.mxu0 0.0
    %1334 = vmatpush.msra.mxu0 0.0
    %1335 = vmatpush.msra.mxu0 %v1310
    %1336 = vmatpush.msra.mxu0 %v1309
    %1337 = vmatpush.msra.mxu0 %v1308
    %1338 = vmatpush.msra.mxu0 %v1307
    %1339 = vmatmul.f32.gmra.mxu0 %v1312
    %v1340 = vpop.f32.mrf.mxu0
    %v1341 = vadd.f32 0.0, %v1340
    %1342 = vmatmul.f32.gmra.mxu0 %v1315
    %v1343 = vpop.f32.mrf.mxu0
    %v1344 = vadd.f32 0.0, %v1343
    %1345 = vmatmul.f32.gmra.mxu0 %v1318
    %v1346 = vpop.f32.mrf.mxu0
    %v1347 = vadd.f32 0.0, %v1346
    %1348 = vmatmul.f32.gmra.mxu0 %v1321
    %v1349 = vpop.f32.mrf.mxu0
    %v1350 = vadd.f32 0.0, %v1349
    %1351 = vdwg.mxu0
    %v1352 = vadd.f32 %v1269, %v1341
    %v1353 = vadd.f32 %v1270, %v1344
    %v1354 = vadd.f32 %v1271, %v1347
    %v1355 = vadd.f32 %v1272, %v1350
    %s1356 = scalar_lea.vmem %s9, 128
    %v1357 = vld [vmem:[%s1356] sm:$0xff]
    %v1358 = vld [vmem:[%s1356 + $0x8] sm:$0xff]
    %v1359 = vld [vmem:[%s1356 + $0x10] sm:$0xff]
    %v1360 = vld [vmem:[%s1356 + $0x18] sm:$0xff]
    %v1362 = vsel %vm99, %v1027, 0
    %v1365 = vsel %vm99, %v1028, 0
    %v1368 = vsel %vm99, %v1029, 0
    %v1371 = vsel %vm99, %v1030, 0
    %1373 = vmatpush.msra.mxu0 0.0
    %1374 = vmatpush.msra.mxu0 0.0
    %1375 = vmatpush.msra.mxu0 0.0
    %1376 = vmatpush.msra.mxu0 0.0
    %1377 = vmatpush.msra.mxu0 0.0
    %1378 = vmatpush.msra.mxu0 0.0
    %1379 = vmatpush.msra.mxu0 0.0
    %1380 = vmatpush.msra.mxu0 0.0
    %1381 = vmatpush.msra.mxu0 0.0
    %1382 = vmatpush.msra.mxu0 0.0
    %1383 = vmatpush.msra.mxu0 0.0
    %1384 = vmatpush.msra.mxu0 0.0
    %1385 = vmatpush.msra.mxu0 %v1360
    %1386 = vmatpush.msra.mxu0 %v1359
    %1387 = vmatpush.msra.mxu0 %v1358
    %1388 = vmatpush.msra.mxu0 %v1357
    %1389 = vmatmul.f32.gmra.mxu0 %v1362
    %v1390 = vpop.f32.mrf.mxu0
    %v1391 = vadd.f32 0.0, %v1390
    %1392 = vmatmul.f32.gmra.mxu0 %v1365
    %v1393 = vpop.f32.mrf.mxu0
    %v1394 = vadd.f32 0.0, %v1393
    %1395 = vmatmul.f32.gmra.mxu0 %v1368
    %v1396 = vpop.f32.mrf.mxu0
    %v1397 = vadd.f32 0.0, %v1396
    %1398 = vmatmul.f32.gmra.mxu0 %v1371
    %v1399 = vpop.f32.mrf.mxu0
    %v1400 = vadd.f32 0.0, %v1399
    %1401 = vdwg.mxu0
    %v1402 = vadd.f32 %v1352, %v1391
    %v1403 = vadd.f32 %v1353, %v1394
    %v1404 = vadd.f32 %v1354, %v1397
    %v1405 = vadd.f32 %v1355, %v1400
    %v1406 = vrot.slane %v1027, 1
    %v1407 = vrot.slane %v1028, 1
    %v1408 = vrot.slane %v1029, 1
    %v1409 = vrot.slane %v1030, 1
    %vm1410 = vcmp.lt.s32.totalorder %v1036, 7
    %v1411 = vsel %vm1410, %v1408, %v1409
    %v1412 = vsel %vm1410, %v1407, %v1408
    %v1413 = vsel %vm1410, %v1406, %v1407
    %v1414 = vsel %vm1410, %v1409, %v1406
    %1416 = vset.pattern.permute.xlu0 0
    %1417 = vperm.xlu0 %1416, %v74
    %v1418 = vpop.permute.xlu0 %1417
    %1421 = vset.pattern.permute.xlu0 0
    %1422 = vperm.xlu0 %1421, %v75
    %v1423 = vpop.permute.xlu0 %1422
    %1426 = vset.pattern.permute.xlu0 0
    %1427 = vperm.xlu0 %1426, %v76
    %v1428 = vpop.permute.xlu0 %1427
    %1431 = vset.pattern.permute.xlu0 0
    %1432 = vperm.xlu0 %1431, %v77
    %v1433 = vpop.permute.xlu0 %1432
    %v1435 = vmul.f32 %v1413, %v1418
    %v1436 = vmul.f32 %v1412, %v1423
    %v1437 = vmul.f32 %v1411, %v1428
    %v1438 = vmul.f32 %v1414, %v1433
    %s1439 = scalar_lea.vmem %s9, 160
    %v1440 = vld [vmem:[%s1439] sm:$0xff]
    %v1441 = vld [vmem:[%s1439 + $0x8] sm:$0xff]
    %v1442 = vld [vmem:[%s1439 + $0x10] sm:$0xff]
    %v1443 = vld [vmem:[%s1439 + $0x18] sm:$0xff]
    %v1445 = vsel %vm99, %v1435, 0
    %v1448 = vsel %vm99, %v1436, 0
    %v1451 = vsel %vm99, %v1437, 0
    %v1454 = vsel %vm99, %v1438, 0
    %1456 = vmatpush.msra.mxu0 0.0
    %1457 = vmatpush.msra.mxu0 0.0
    %1458 = vmatpush.msra.mxu0 0.0
    %1459 = vmatpush.msra.mxu0 0.0
    %1460 = vmatpush.msra.mxu0 0.0
    %1461 = vmatpush.msra.mxu0 0.0
    %1462 = vmatpush.msra.mxu0 0.0
    %1463 = vmatpush.msra.mxu0 0.0
    %1464 = vmatpush.msra.mxu0 0.0
    %1465 = vmatpush.msra.mxu0 0.0
    %1466 = vmatpush.msra.mxu0 0.0
    %1467 = vmatpush.msra.mxu0 0.0
    %1468 = vmatpush.msra.mxu0 %v1443
    %1469 = vmatpush.msra.mxu0 %v1442
    %1470 = vmatpush.msra.mxu0 %v1441
    %1471 = vmatpush.msra.mxu0 %v1440
    %1472 = vmatmul.f32.gmra.mxu0 %v1445
    %v1473 = vpop.f32.mrf.mxu0
    %v1474 = vadd.f32 0.0, %v1473
    %1475 = vmatmul.f32.gmra.mxu0 %v1448
    %v1476 = vpop.f32.mrf.mxu0
    %v1477 = vadd.f32 0.0, %v1476
    %1478 = vmatmul.f32.gmra.mxu0 %v1451
    %v1479 = vpop.f32.mrf.mxu0
    %v1480 = vadd.f32 0.0, %v1479
    %1481 = vmatmul.f32.gmra.mxu0 %v1454
    %v1482 = vpop.f32.mrf.mxu0
    %v1483 = vadd.f32 0.0, %v1482
    %1484 = vdwg.mxu0
    %v1485 = vadd.f32 %v1402, %v1474
    %v1486 = vadd.f32 %v1403, %v1477
    %v1487 = vadd.f32 %v1404, %v1480
    %v1488 = vadd.f32 %v1405, %v1483
    %v1489 = vrot.slane %v1027, 2
    %v1490 = vrot.slane %v1028, 2
    %v1491 = vrot.slane %v1029, 2
    %v1492 = vrot.slane %v1030, 2
    %vm1493 = vcmp.lt.s32.totalorder %v1036, 6
    %v1494 = vsel %vm1493, %v1491, %v1492
    %v1495 = vsel %vm1493, %v1490, %v1491
    %v1496 = vsel %vm1493, %v1489, %v1490
    %v1497 = vsel %vm1493, %v1492, %v1489
    %1499 = vset.pattern.permute.xlu0 0
    %1500 = vperm.xlu0 %1499, %v79
    %v1501 = vpop.permute.xlu0 %1500
    %1504 = vset.pattern.permute.xlu0 0
    %1505 = vperm.xlu0 %1504, %v80
    %v1506 = vpop.permute.xlu0 %1505
    %1509 = vset.pattern.permute.xlu0 0
    %1510 = vperm.xlu0 %1509, %v81
    %v1511 = vpop.permute.xlu0 %1510
    %1514 = vset.pattern.permute.xlu0 0
    %1515 = vperm.xlu0 %1514, %v82
    %v1516 = vpop.permute.xlu0 %1515
    %v1518 = vmul.f32 %v1496, %v1501
    %v1519 = vmul.f32 %v1495, %v1506
    %v1520 = vmul.f32 %v1494, %v1511
    %v1521 = vmul.f32 %v1497, %v1516
    %s1522 = scalar_lea.vmem %s9, 192
    %v1523 = vld [vmem:[%s1522] sm:$0xff]
    %v1524 = vld [vmem:[%s1522 + $0x8] sm:$0xff]
    %v1525 = vld [vmem:[%s1522 + $0x10] sm:$0xff]
    %v1526 = vld [vmem:[%s1522 + $0x18] sm:$0xff]
    %v1528 = vsel %vm99, %v1518, 0
    %v1531 = vsel %vm99, %v1519, 0
    %v1534 = vsel %vm99, %v1520, 0
    %v1537 = vsel %vm99, %v1521, 0
    %1539 = vmatpush.msra.mxu0 0.0
    %1540 = vmatpush.msra.mxu0 0.0
    %1541 = vmatpush.msra.mxu0 0.0
    %1542 = vmatpush.msra.mxu0 0.0
    %1543 = vmatpush.msra.mxu0 0.0
    %1544 = vmatpush.msra.mxu0 0.0
    %1545 = vmatpush.msra.mxu0 0.0
    %1546 = vmatpush.msra.mxu0 0.0
    %1547 = vmatpush.msra.mxu0 0.0
    %1548 = vmatpush.msra.mxu0 0.0
    %1549 = vmatpush.msra.mxu0 0.0
    %1550 = vmatpush.msra.mxu0 0.0
    %1551 = vmatpush.msra.mxu0 %v1526
    %1552 = vmatpush.msra.mxu0 %v1525
    %1553 = vmatpush.msra.mxu0 %v1524
    %1554 = vmatpush.msra.mxu0 %v1523
    %1555 = vmatmul.f32.gmra.mxu0 %v1528
    %v1556 = vpop.f32.mrf.mxu0
    %v1557 = vadd.f32 0.0, %v1556
    %1558 = vmatmul.f32.gmra.mxu0 %v1531
    %v1559 = vpop.f32.mrf.mxu0
    %v1560 = vadd.f32 0.0, %v1559
    %1561 = vmatmul.f32.gmra.mxu0 %v1534
    %v1562 = vpop.f32.mrf.mxu0
    %v1563 = vadd.f32 0.0, %v1562
    %1564 = vmatmul.f32.gmra.mxu0 %v1537
    %v1565 = vpop.f32.mrf.mxu0
    %v1566 = vadd.f32 0.0, %v1565
    %1567 = vdwg.mxu0
    %v1568 = vadd.f32 %v1485, %v1557
    %v1569 = vadd.f32 %v1486, %v1560
    %v1570 = vadd.f32 %v1487, %v1563
    %v1571 = vadd.f32 %v1488, %v1566
    %v1572 = vrot.slane %v1027, 3
    %v1573 = vrot.slane %v1028, 3
    %v1574 = vrot.slane %v1029, 3
    %v1575 = vrot.slane %v1030, 3
    %vm1576 = vcmp.lt.s32.totalorder %v1036, 5
    %v1577 = vsel %vm1576, %v1574, %v1575
    %v1578 = vsel %vm1576, %v1573, %v1574
    %v1579 = vsel %vm1576, %v1572, %v1573
    %v1580 = vsel %vm1576, %v1575, %v1572
    %1582 = vset.pattern.permute.xlu0 0
    %1583 = vperm.xlu0 %1582, %v84
    %v1584 = vpop.permute.xlu0 %1583
    %1587 = vset.pattern.permute.xlu0 0
    %1588 = vperm.xlu0 %1587, %v85
    %v1589 = vpop.permute.xlu0 %1588
    %1592 = vset.pattern.permute.xlu0 0
    %1593 = vperm.xlu0 %1592, %v86
    %v1594 = vpop.permute.xlu0 %1593
    %1597 = vset.pattern.permute.xlu0 0
    %1598 = vperm.xlu0 %1597, %v87
    %v1599 = vpop.permute.xlu0 %1598
    %v1601 = vmul.f32 %v1579, %v1584
    %v1602 = vmul.f32 %v1578, %v1589
    %v1603 = vmul.f32 %v1577, %v1594
    %v1604 = vmul.f32 %v1580, %v1599
    %s1605 = scalar_lea.vmem %s9, 224
    %v1606 = vld [vmem:[%s1605] sm:$0xff]
    %v1607 = vld [vmem:[%s1605 + $0x8] sm:$0xff]
    %v1608 = vld [vmem:[%s1605 + $0x10] sm:$0xff]
    %v1609 = vld [vmem:[%s1605 + $0x18] sm:$0xff]
    %v1611 = vsel %vm99, %v1601, 0
    %v1614 = vsel %vm99, %v1602, 0
    %v1617 = vsel %vm99, %v1603, 0
    %v1620 = vsel %vm99, %v1604, 0
    %1622 = vmatpush.msra.mxu0 0.0
    %1623 = vmatpush.msra.mxu0 0.0
    %1624 = vmatpush.msra.mxu0 0.0
    %1625 = vmatpush.msra.mxu0 0.0
    %1626 = vmatpush.msra.mxu0 0.0
    %1627 = vmatpush.msra.mxu0 0.0
    %1628 = vmatpush.msra.mxu0 0.0
    %1629 = vmatpush.msra.mxu0 0.0
    %1630 = vmatpush.msra.mxu0 0.0
    %1631 = vmatpush.msra.mxu0 0.0
    %1632 = vmatpush.msra.mxu0 0.0
    %1633 = vmatpush.msra.mxu0 0.0
    %1634 = vmatpush.msra.mxu0 %v1609
    %1635 = vmatpush.msra.mxu0 %v1608
    %1636 = vmatpush.msra.mxu0 %v1607
    %1637 = vmatpush.msra.mxu0 %v1606
    %1638 = vmatmul.f32.gmra.mxu0 %v1611
    %v1639 = vpop.f32.mrf.mxu0
    %v1640 = vadd.f32 0.0, %v1639
    %1641 = vmatmul.f32.gmra.mxu0 %v1614
    %v1642 = vpop.f32.mrf.mxu0
    %v1643 = vadd.f32 0.0, %v1642
    %1644 = vmatmul.f32.gmra.mxu0 %v1617
    %v1645 = vpop.f32.mrf.mxu0
    %v1646 = vadd.f32 0.0, %v1645
    %1647 = vmatmul.f32.gmra.mxu0 %v1620
    %v1648 = vpop.f32.mrf.mxu0
    %v1649 = vadd.f32 0.0, %v1648
    %1650 = vdwg.mxu0
    %v1651 = vadd.f32 %v1568, %v1640
    %v1652 = vadd.f32 %v1569, %v1643
    %v1653 = vadd.f32 %v1570, %v1646
    %v1654 = vadd.f32 %v1571, %v1649
    %1656 = vset.pattern.permute.xlu0 0
    %1657 = vperm.xlu0 %1656, %v89
    %v1658 = vpop.permute.xlu0 %1657
    %1661 = vset.pattern.permute.xlu0 0
    %1662 = vperm.xlu0 %1661, %v90
    %v1663 = vpop.permute.xlu0 %1662
    %1666 = vset.pattern.permute.xlu0 0
    %1667 = vperm.xlu0 %1666, %v91
    %v1668 = vpop.permute.xlu0 %1667
    %1671 = vset.pattern.permute.xlu0 0
    %1672 = vperm.xlu0 %1671, %v92
    %v1673 = vpop.permute.xlu0 %1672
    %v1675 = vmul.f32 %v1040, %v1658
    %v1676 = vmul.f32 %v1039, %v1663
    %v1677 = vmul.f32 %v1038, %v1668
    %v1678 = vmul.f32 %v1041, %v1673
    %s1679 = scalar_lea.vmem %s9, 256
    %v1680 = vld [vmem:[%s1679] sm:$0xff]
    %v1681 = vld [vmem:[%s1679 + $0x8] sm:$0xff]
    %v1682 = vld [vmem:[%s1679 + $0x10] sm:$0xff]
    %v1683 = vld [vmem:[%s1679 + $0x18] sm:$0xff]
    %v1685 = vsel %vm99, %v1675, 0
    %v1688 = vsel %vm99, %v1676, 0
    %v1691 = vsel %vm99, %v1677, 0
    %v1694 = vsel %vm99, %v1678, 0
    %1696 = vmatpush.msra.mxu0 0.0
    %1697 = vmatpush.msra.mxu0 0.0
    %1698 = vmatpush.msra.mxu0 0.0
    %1699 = vmatpush.msra.mxu0 0.0
    %1700 = vmatpush.msra.mxu0 0.0
    %1701 = vmatpush.msra.mxu0 0.0
    %1702 = vmatpush.msra.mxu0 0.0
    %1703 = vmatpush.msra.mxu0 0.0
    %1704 = vmatpush.msra.mxu0 0.0
    %1705 = vmatpush.msra.mxu0 0.0
    %1706 = vmatpush.msra.mxu0 0.0
    %1707 = vmatpush.msra.mxu0 0.0
    %1708 = vmatpush.msra.mxu0 %v1683
    %1709 = vmatpush.msra.mxu0 %v1682
    %1710 = vmatpush.msra.mxu0 %v1681
    %1711 = vmatpush.msra.mxu0 %v1680
    %1712 = vmatmul.f32.gmra.mxu0 %v1685
    %v1713 = vpop.f32.mrf.mxu0
    %v1714 = vadd.f32 0.0, %v1713
    %1715 = vmatmul.f32.gmra.mxu0 %v1688
    %v1716 = vpop.f32.mrf.mxu0
    %v1717 = vadd.f32 0.0, %v1716
    %1718 = vmatmul.f32.gmra.mxu0 %v1691
    %v1719 = vpop.f32.mrf.mxu0
    %v1720 = vadd.f32 0.0, %v1719
    %1721 = vmatmul.f32.gmra.mxu0 %v1694
    %v1722 = vpop.f32.mrf.mxu0
    %v1723 = vadd.f32 0.0, %v1722
    %1724 = vdwg.mxu0
    %v1725 = vadd.f32 %v1651, %v1714
    %v1726 = vadd.f32 %v1652, %v1717
    %v1727 = vadd.f32 %v1653, %v1720
    %v1728 = vadd.f32 %v1654, %v1723
    %v1729 = vld [vmem:[%s12 + $0x4] sm:$0x1]
    %v1730 = vperm.slane %v1729, 0
    %v1731 = vadd.f32 %v1725, %v1730
    %v1732 = vadd.f32 %v1726, %v1730
    %v1733 = vadd.f32 %v1727, %v1730
    %v1734 = vadd.f32 %v1728, %v1730
    %v1735 = vmin.f32 %v1731, 20.0
    %v1736 = vmin.f32 %v1732, 20.0
    %v1737 = vmin.f32 %v1733, 20.0
    %v1738 = vmin.f32 %v1734, 20.0
    %v1739 = vmul.f32 %v1735, 1.442695
    %v1740 = vpow.pop %v1739
    %v1741 = vmul.f32 %v1736, 1.442695
    %v1742 = vpow.pop %v1741
    %v1743 = vmul.f32 %v1737, 1.442695
    %v1744 = vpow.pop %v1743
    %v1745 = vmul.f32 %v1738, 1.442695
    %v1746 = vpow.pop %v1745
    %v1747 = vadd.f32 %v1740, 1.0
    %v1748 = vadd.f32 %v1742, 1.0
    %v1749 = vadd.f32 %v1744, 1.0
    %v1750 = vadd.f32 %v1746, 1.0
    %v1751 = vmul.f32 %v1747, %v1747
    %v1752 = vmul.f32 %v1748, %v1748
    %v1753 = vmul.f32 %v1749, %v1749
    %v1754 = vmul.f32 %v1750, %v1750
    %v1755 = vsub.f32 %v1751, 1.0
    %v1756 = vsub.f32 %v1752, 1.0
    %v1757 = vsub.f32 %v1753, 1.0
    %v1758 = vsub.f32 %v1754, 1.0
    %v1759 = vmul.f32 %v1731, %v1755
    %v1760 = vmul.f32 %v1732, %v1756
    %v1761 = vmul.f32 %v1733, %v1757
    %v1762 = vmul.f32 %v1734, %v1758
    %v1763 = vadd.f32 %v1751, 1.0
    %v1764 = vadd.f32 %v1752, 1.0
    %v1765 = vadd.f32 %v1753, 1.0
    %v1766 = vadd.f32 %v1754, 1.0
    %v1767 = vrcp.pop %v1763
    %v1768 = vrcp.pop %v1764
    %v1769 = vrcp.pop %v1765
    %v1770 = vrcp.pop %v1766
    %v1771 = vmul.f32 %v1759, %v1767
    %v1772 = vmul.f32 %v1760, %v1768
    %v1773 = vmul.f32 %v1761, %v1769
    %v1774 = vmul.f32 %v1762, %v1770
    %v1775 = vld [vmem:[%s10] sm:$0xff]
    %v1776 = vld [vmem:[%s10 + $0x8] sm:$0xff]
    %v1777 = vld [vmem:[%s10 + $0x10] sm:$0xff]
    %v1778 = vld [vmem:[%s10 + $0x18] sm:$0xff]
    %v1779 = vld [vmem:[%s10 + $0x20] sm:$0xff]
    %v1780 = vld [vmem:[%s10 + $0x28] sm:$0xff]
    %v1781 = vld [vmem:[%s10 + $0x30] sm:$0xff]
    %v1782 = vld [vmem:[%s10 + $0x38] sm:$0xff]
    %v1783 = vld [vmem:[%s12 + $0x5] sm:$0x1]
    %v1784 = vperm.slane %v1783, 0
    %vm1785 = vcmask 523264
    %v1787 = vsel %vm1785, %v1771, 0
    %v1790 = vsel %vm1785, %v1772, 0
    %v1793 = vsel %vm1785, %v1773, 0
    %v1796 = vsel %vm1785, %v1774, 0
    %1798 = vmatpush.msra.mxu0 0.0
    %1799 = vmatpush.msra.mxu0 0.0
    %1800 = vmatpush.msra.mxu0 0.0
    %1801 = vmatpush.msra.mxu0 0.0
    %1802 = vmatpush.msra.mxu0 0.0
    %1803 = vmatpush.msra.mxu0 0.0
    %1804 = vmatpush.msra.mxu0 0.0
    %1805 = vmatpush.msra.mxu0 0.0
    %1806 = vmatpush.msra.mxu0 %v1782
    %1807 = vmatpush.msra.mxu0 %v1781
    %1808 = vmatpush.msra.mxu0 %v1780
    %1809 = vmatpush.msra.mxu0 %v1779
    %1810 = vmatpush.msra.mxu0 %v1778
    %1811 = vmatpush.msra.mxu0 %v1777
    %1812 = vmatpush.msra.mxu0 %v1776
    %1813 = vmatpush.msra.mxu0 %v1775
    %1814 = vmatmul.f32.gmra.mxu0 %v1787
    %v1815 = vpop.f32.mrf.mxu0
    %v1816 = vadd.f32 %v1784, %v1815
    %1817 = vmatmul.f32.gmra.mxu0 %v1790
    %v1818 = vpop.f32.mrf.mxu0
    %v1819 = vadd.f32 %v1784, %v1818
    %1820 = vmatmul.f32.gmra.mxu0 %v1793
    %v1821 = vpop.f32.mrf.mxu0
    %v1822 = vadd.f32 %v1784, %v1821
    %1823 = vmatmul.f32.gmra.mxu0 %v1796
    %v1824 = vpop.f32.mrf.mxu0
    %v1825 = vadd.f32 %v1784, %v1824
    %1826 = vdwg.mxu0
    %v1827 = vadd.f32 %v1816, %v1027
    %v1828 = vadd.f32 %v1819, %v1028
    %v1829 = vadd.f32 %v1822, %v1029
    %v1830 = vadd.f32 %v1825, %v1030
    %s1831 = scalar_lea.vmem %s4, 64
    %v1832 = vld [vmem:[%s1831] sm:$0xff]
    %v1833 = vld [vmem:[%s1831 + $0x8] sm:$0xff]
    %v1834 = vld [vmem:[%s1831 + $0x10] sm:$0xff]
    %v1835 = vld [vmem:[%s1831 + $0x18] sm:$0xff]
    %s1836 = scalar_lea.vmem %s4, 96
    %v1837 = vld [vmem:[%s1836] sm:$0xff]
    %v1838 = vld [vmem:[%s1836 + $0x8] sm:$0xff]
    %v1839 = vld [vmem:[%s1836 + $0x10] sm:$0xff]
    %v1840 = vld [vmem:[%s1836 + $0x18] sm:$0xff]
    %v1841 = vsel %vm99, %v1827, 0.0
    %1842 = vadd.xlane.f32.xlu0 %v1841
    %v1843 = vpop.xlane.xlu0 %1842
    %v1844 = vsel %vm99, %v1828, 0.0
    %1845 = vadd.xlane.f32.xlu0 %v1844
    %v1846 = vpop.xlane.xlu0 %1845
    %v1847 = vsel %vm99, %v1829, 0.0
    %1848 = vadd.xlane.f32.xlu0 %v1847
    %v1849 = vpop.xlane.xlu0 %1848
    %v1850 = vsel %vm99, %v1830, 0.0
    %1851 = vadd.xlane.f32.xlu0 %v1850
    %v1852 = vpop.xlane.xlu0 %1851
    %v1853 = vmul.f32 %v1843, %v922
    %v1854 = vmul.f32 %v1846, %v922
    %v1855 = vmul.f32 %v1849, %v922
    %v1856 = vmul.f32 %v1852, %v922
    %v1857 = vsub.f32 %v1827, %v1853
    %v1858 = vsub.f32 %v1828, %v1854
    %v1859 = vsub.f32 %v1829, %v1855
    %v1860 = vsub.f32 %v1830, %v1856
    %v1861 = vmul.f32 %v1857, %v1857
    %v1862 = vmul.f32 %v1858, %v1858
    %v1863 = vmul.f32 %v1859, %v1859
    %v1864 = vmul.f32 %v1860, %v1860
    %v1865 = vsel %vm99, %v1861, 0.0
    %1866 = vadd.xlane.f32.xlu0 %v1865
    %v1867 = vpop.xlane.xlu0 %1866
    %v1868 = vsel %vm99, %v1862, 0.0
    %1869 = vadd.xlane.f32.xlu0 %v1868
    %v1870 = vpop.xlane.xlu0 %1869
    %v1871 = vsel %vm99, %v1863, 0.0
    %1872 = vadd.xlane.f32.xlu0 %v1871
    %v1873 = vpop.xlane.xlu0 %1872
    %v1874 = vsel %vm99, %v1864, 0.0
    %1875 = vadd.xlane.f32.xlu0 %v1874
    %v1876 = vpop.xlane.xlu0 %1875
    %v1877 = vmul.f32 %v1867, %v922
    %v1878 = vmul.f32 %v1870, %v922
    %v1879 = vmul.f32 %v1873, %v922
    %v1880 = vmul.f32 %v1876, %v922
    %v1881 = vadd.f32 %v1877, 1e-05
    %v1882 = vadd.f32 %v1878, 1e-05
    %v1883 = vadd.f32 %v1879, 1e-05
    %v1884 = vadd.f32 %v1880, 1e-05
    %v1885 = vrsqrt.pop %v1881
    %v1886 = vmul.f32 %v1885, %v1881
    %v1887 = vmul.f32 %v1886, %v1885
    %v1888 = vmul.f32 0.5, %v1887
    %v1889 = vsub.f32 1.5, %v1888
    %v1890 = vmul.f32 %v1885, %v1889
    %vm1891 = vweird.f32 %v1881
    %vm1892 = vweird.f32 %v1885
    %vm1893 = vmor %vm1891, %vm1892
    %v1894 = vsel %vm1893, %v1885, %v1890
    %v1895 = vrsqrt.pop %v1882
    %v1896 = vmul.f32 %v1895, %v1882
    %v1897 = vmul.f32 %v1896, %v1895
    %v1898 = vmul.f32 0.5, %v1897
    %v1899 = vsub.f32 1.5, %v1898
    %v1900 = vmul.f32 %v1895, %v1899
    %vm1901 = vweird.f32 %v1882
    %vm1902 = vweird.f32 %v1895
    %vm1903 = vmor %vm1901, %vm1902
    %v1904 = vsel %vm1903, %v1895, %v1900
    %v1905 = vrsqrt.pop %v1883
    %v1906 = vmul.f32 %v1905, %v1883
    %v1907 = vmul.f32 %v1906, %v1905
    %v1908 = vmul.f32 0.5, %v1907
    %v1909 = vsub.f32 1.5, %v1908
    %v1910 = vmul.f32 %v1905, %v1909
    %vm1911 = vweird.f32 %v1883
    %vm1912 = vweird.f32 %v1905
    %vm1913 = vmor %vm1911, %vm1912
    %v1914 = vsel %vm1913, %v1905, %v1910
    %v1915 = vrsqrt.pop %v1884
    %v1916 = vmul.f32 %v1915, %v1884
    %v1917 = vmul.f32 %v1916, %v1915
    %v1918 = vmul.f32 0.5, %v1917
    %v1919 = vsub.f32 1.5, %v1918
    %v1920 = vmul.f32 %v1915, %v1919
    %vm1921 = vweird.f32 %v1884
    %vm1922 = vweird.f32 %v1915
    %vm1923 = vmor %vm1921, %vm1922
    %v1924 = vsel %vm1923, %v1915, %v1920
    %v1925 = vmul.f32 %v1857, %v1894
    %v1926 = vmul.f32 %v1858, %v1904
    %v1927 = vmul.f32 %v1859, %v1914
    %v1928 = vmul.f32 %v1860, %v1924
    %v1929 = vmul.f32 %v1832, %v1925
    %v1930 = vmul.f32 %v1833, %v1926
    %v1931 = vmul.f32 %v1834, %v1927
    %v1932 = vmul.f32 %v1835, %v1928
    %v1933 = vadd.f32 %v1929, %v1837
    %v1934 = vadd.f32 %v1930, %v1838
    %v1935 = vadd.f32 %v1931, %v1839
    %v1936 = vadd.f32 %v1932, %v1840
    %v1937 = vmul.f32 %v1933, %v1010
    %v1938 = vmul.f32 %v1934, %v1015
    %v1939 = vmul.f32 %v1935, %v1020
    %v1940 = vmul.f32 %v1936, %v1025
    %s1941 = scalar_lea.vmem %s7, 192
    %v1942 = vld [vmem:[%s1941] sm:$0xff]
    %v1943 = vld [vmem:[%s1941 + $0x8] sm:$0xff]
    %v1944 = vld [vmem:[%s1941 + $0x10] sm:$0xff]
    %v1945 = vld [vmem:[%s1941 + $0x18] sm:$0xff]
    %v1946 = vld [vmem:[%s12 + $0xf] sm:$0x1]
    %v1947 = vperm.slane %v1946, 0
    %v1949 = vsel %vm99, %v1937, 0
    %v1952 = vsel %vm99, %v1938, 0
    %v1955 = vsel %vm99, %v1939, 0
    %v1958 = vsel %vm99, %v1940, 0
    %1960 = vmatpush.msra.mxu0 0.0
    %1961 = vmatpush.msra.mxu0 0.0
    %1962 = vmatpush.msra.mxu0 0.0
    %1963 = vmatpush.msra.mxu0 0.0
    %1964 = vmatpush.msra.mxu0 0.0
    %1965 = vmatpush.msra.mxu0 0.0
    %1966 = vmatpush.msra.mxu0 0.0
    %1967 = vmatpush.msra.mxu0 0.0
    %1968 = vmatpush.msra.mxu0 0.0
    %1969 = vmatpush.msra.mxu0 0.0
    %1970 = vmatpush.msra.mxu0 0.0
    %1971 = vmatpush.msra.mxu0 0.0
    %1972 = vmatpush.msra.mxu0 %v1945
    %1973 = vmatpush.msra.mxu0 %v1944
    %1974 = vmatpush.msra.mxu0 %v1943
    %1975 = vmatpush.msra.mxu0 %v1942
    %1976 = vmatmul.f32.gmra.mxu0 %v1949
    %v1977 = vpop.f32.mrf.mxu0
    %v1978 = vadd.f32 %v1947, %v1977
    %1979 = vmatmul.f32.gmra.mxu0 %v1952
    %v1980 = vpop.f32.mrf.mxu0
    %v1981 = vadd.f32 %v1947, %v1980
    %1982 = vmatmul.f32.gmra.mxu0 %v1955
    %v1983 = vpop.f32.mrf.mxu0
    %v1984 = vadd.f32 %v1947, %v1983
    %1985 = vmatmul.f32.gmra.mxu0 %v1958
    %v1986 = vpop.f32.mrf.mxu0
    %v1987 = vadd.f32 %v1947, %v1986
    %1988 = vdwg.mxu0
    %s1989 = scalar_lea.vmem %s7, 256
    %v1990 = vld [vmem:[%s1989] sm:$0xff]
    %v1991 = vld [vmem:[%s1989 + $0x8] sm:$0xff]
    %v1992 = vld [vmem:[%s1989 + $0x10] sm:$0xff]
    %v1993 = vld [vmem:[%s1989 + $0x18] sm:$0xff]
    %v1994 = vld [vmem:[%s12 + $0x10] sm:$0x1]
    %v1995 = vperm.slane %v1994, 0
    %1996 = vmatpush.msra.mxu0 0.0
    %1997 = vmatpush.msra.mxu0 0.0
    %1998 = vmatpush.msra.mxu0 0.0
    %1999 = vmatpush.msra.mxu0 0.0
    %2000 = vmatpush.msra.mxu0 0.0
    %2001 = vmatpush.msra.mxu0 0.0
    %2002 = vmatpush.msra.mxu0 0.0
    %2003 = vmatpush.msra.mxu0 0.0
    %2004 = vmatpush.msra.mxu0 0.0
    %2005 = vmatpush.msra.mxu0 0.0
    %2006 = vmatpush.msra.mxu0 0.0
    %2007 = vmatpush.msra.mxu0 0.0
    %2008 = vmatpush.msra.mxu0 %v1993
    %2009 = vmatpush.msra.mxu0 %v1992
    %2010 = vmatpush.msra.mxu0 %v1991
    %2011 = vmatpush.msra.mxu0 %v1990
    %2012 = vmatmul.f32.gmra.mxu0 %v1949
    %v2013 = vpop.f32.mrf.mxu0
    %v2014 = vadd.f32 %v1995, %v2013
    %2015 = vmatmul.f32.gmra.mxu0 %v1952
    %v2016 = vpop.f32.mrf.mxu0
    %v2017 = vadd.f32 %v1995, %v2016
    %2018 = vmatmul.f32.gmra.mxu0 %v1955
    %v2019 = vpop.f32.mrf.mxu0
    %v2020 = vadd.f32 %v1995, %v2019
    %2021 = vmatmul.f32.gmra.mxu0 %v1958
    %v2022 = vpop.f32.mrf.mxu0
    %v2023 = vadd.f32 %v1995, %v2022
    %2024 = vdwg.mxu0
    %s2025 = scalar_lea.vmem %s7, 320
    %v2026 = vld [vmem:[%s2025] sm:$0xff]
    %v2027 = vld [vmem:[%s2025 + $0x8] sm:$0xff]
    %v2028 = vld [vmem:[%s2025 + $0x10] sm:$0xff]
    %v2029 = vld [vmem:[%s2025 + $0x18] sm:$0xff]
    %v2030 = vld [vmem:[%s12 + $0x11] sm:$0x1]
    %v2031 = vperm.slane %v2030, 0
    %2032 = vmatpush.msra.mxu0 0.0
    %2033 = vmatpush.msra.mxu0 0.0
    %2034 = vmatpush.msra.mxu0 0.0
    %2035 = vmatpush.msra.mxu0 0.0
    %2036 = vmatpush.msra.mxu0 0.0
    %2037 = vmatpush.msra.mxu0 0.0
    %2038 = vmatpush.msra.mxu0 0.0
    %2039 = vmatpush.msra.mxu0 0.0
    %2040 = vmatpush.msra.mxu0 0.0
    %2041 = vmatpush.msra.mxu0 0.0
    %2042 = vmatpush.msra.mxu0 0.0
    %2043 = vmatpush.msra.mxu0 0.0
    %2044 = vmatpush.msra.mxu0 %v2029
    %2045 = vmatpush.msra.mxu0 %v2028
    %2046 = vmatpush.msra.mxu0 %v2027
    %2047 = vmatpush.msra.mxu0 %v2026
    %2048 = vmatmul.f32.gmra.mxu0 %v1949
    %v2049 = vpop.f32.mrf.mxu0
    %v2050 = vadd.f32 %v2031, %v2049
    %2051 = vmatmul.f32.gmra.mxu0 %v1952
    %v2052 = vpop.f32.mrf.mxu0
    %v2053 = vadd.f32 %v2031, %v2052
    %2054 = vmatmul.f32.gmra.mxu0 %v1955
    %v2055 = vpop.f32.mrf.mxu0
    %v2056 = vadd.f32 %v2031, %v2055
    %2057 = vmatmul.f32.gmra.mxu0 %v1958
    %v2058 = vpop.f32.mrf.mxu0
    %v2059 = vadd.f32 %v2031, %v2058
    %2060 = vdwg.mxu0
    %v2062 = vsel %vm149, %v1978, 0
    %v2065 = vsel %vm149, %v1981, 0
    %v2068 = vsel %vm149, %v2014, 0
    %v2071 = vsel %vm149, %v2017, 0
    %2073 = vmatpush.xpose.msra.mxu0 0.0
    %2074 = vmatpush.xpose.msra.mxu0 0.0
    %2075 = vmatpush.xpose.msra.mxu0 0.0
    %2076 = vmatpush.xpose.msra.mxu0 0.0
    %2077 = vmatpush.xpose.msra.mxu0 0.0
    %2078 = vmatpush.xpose.msra.mxu0 0.0
    %2079 = vmatpush.xpose.msra.mxu0 0.0
    %2080 = vmatpush.xpose.msra.mxu0 0.0
    %2081 = vmatpush.xpose.msra.mxu0 0.0
    %2082 = vmatpush.xpose.msra.mxu0 0.0
    %2083 = vmatpush.xpose.msra.mxu0 0.0
    %2084 = vmatpush.xpose.msra.mxu0 0.0
    %2085 = vmatpush.xpose.msra.mxu0 0.0
    %2086 = vmatpush.xpose.msra.mxu0 0.0
    %2087 = vmatpush.xpose.msra.mxu0 %v2071
    %2088 = vmatpush.xpose.msra.mxu0 %v2068
    %2089 = vmatmul.f32.gmra.mxu0 %v2062
    %v2090 = vpop.f32.mrf.mxu0
    %v2091 = vadd.f32 %v310, %v2090
    %2092 = vmatmul.f32.gmra.mxu0 %v2065
    %v2093 = vpop.f32.mrf.mxu0
    %v2094 = vadd.f32 %v310, %v2093
    %2095 = vdwg.mxu0
    %v2096 = vsel %vm149, %v2091, -inf
    %2097 = vmax.xlane.f32.xlu0 %v2096
    %v2098 = vpop.xlane.xlu0 %2097
    %v2099 = vsel %vm149, %v2094, -inf
    %2100 = vmax.xlane.f32.xlu0 %v2099
    %v2101 = vpop.xlane.xlu0 %2100
    %v2102 = vsub.f32 %v2091, %v2098
    %v2103 = vsub.f32 %v2094, %v2101
    %v2104 = vmul.f32 %v2102, 1.442695
    %v2105 = vpow.pop %v2104
    %v2106 = vmul.f32 %v2103, 1.442695
    %v2107 = vpow.pop %v2106
    %v2108 = vsel %vm149, %v2105, 0.0
    %2109 = vadd.xlane.f32.xlu0 %v2108
    %v2110 = vpop.xlane.xlu0 %2109
    %v2111 = vsel %vm149, %v2107, 0.0
    %2112 = vadd.xlane.f32.xlu0 %v2111
    %v2113 = vpop.xlane.xlu0 %2112
    %v2114 = vrcp.pop %v2110
    %v2115 = vrcp.pop %v2113
    %v2116 = vmul.f32 %v2105, %v2114
    %v2117 = vmul.f32 %v2107, %v2115
    %v2119 = vsel %vm149, %v2116, 0
    %v2122 = vsel %vm149, %v2117, 0
    %2124 = vmatpush.msra.mxu0 0.0
    %2125 = vmatpush.msra.mxu0 0.0
    %2126 = vmatpush.msra.mxu0 0.0
    %2127 = vmatpush.msra.mxu0 0.0
    %2128 = vmatpush.msra.mxu0 0.0
    %2129 = vmatpush.msra.mxu0 0.0
    %2130 = vmatpush.msra.mxu0 0.0
    %2131 = vmatpush.msra.mxu0 0.0
    %2132 = vmatpush.msra.mxu0 0.0
    %2133 = vmatpush.msra.mxu0 0.0
    %2134 = vmatpush.msra.mxu0 0.0
    %2135 = vmatpush.msra.mxu0 0.0
    %2136 = vmatpush.msra.mxu0 0.0
    %2137 = vmatpush.msra.mxu0 0.0
    %2138 = vmatpush.msra.mxu0 %v2053
    %2139 = vmatpush.msra.mxu0 %v2050
    %2140 = vmatmul.f32.gmra.mxu0 %v2119
    %v2141 = vpop.f32.mrf.mxu0
    %v2142 = vadd.f32 0.0, %v2141
    %2143 = vmatmul.f32.gmra.mxu0 %v2122
    %v2144 = vpop.f32.mrf.mxu0
    %v2145 = vadd.f32 0.0, %v2144
    %2146 = vdwg.mxu0
    %s2147 = scalar_lea.vmem %s8, 32
    %v2148 = vld [vmem:[%s2147] sm:$0xff]
    %v2149 = vld [vmem:[%s2147 + $0x8] sm:$0xff]
    %v2151 = vsel %vm149, %v1984, 0
    %v2154 = vsel %vm149, %v1987, 0
    %v2157 = vsel %vm149, %v2020, 0
    %v2160 = vsel %vm149, %v2023, 0
    %2162 = vmatpush.xpose.msra.mxu0 0.0
    %2163 = vmatpush.xpose.msra.mxu0 0.0
    %2164 = vmatpush.xpose.msra.mxu0 0.0
    %2165 = vmatpush.xpose.msra.mxu0 0.0
    %2166 = vmatpush.xpose.msra.mxu0 0.0
    %2167 = vmatpush.xpose.msra.mxu0 0.0
    %2168 = vmatpush.xpose.msra.mxu0 0.0
    %2169 = vmatpush.xpose.msra.mxu0 0.0
    %2170 = vmatpush.xpose.msra.mxu0 0.0
    %2171 = vmatpush.xpose.msra.mxu0 0.0
    %2172 = vmatpush.xpose.msra.mxu0 0.0
    %2173 = vmatpush.xpose.msra.mxu0 0.0
    %2174 = vmatpush.xpose.msra.mxu0 0.0
    %2175 = vmatpush.xpose.msra.mxu0 0.0
    %2176 = vmatpush.xpose.msra.mxu0 %v2160
    %2177 = vmatpush.xpose.msra.mxu0 %v2157
    %2178 = vmatmul.f32.gmra.mxu0 %v2151
    %v2179 = vpop.f32.mrf.mxu0
    %v2180 = vadd.f32 %v399, %v2179
    %2181 = vmatmul.f32.gmra.mxu0 %v2154
    %v2182 = vpop.f32.mrf.mxu0
    %v2183 = vadd.f32 %v399, %v2182
    %2184 = vdwg.mxu0
    %v2185 = vsel %vm149, %v2180, -inf
    %2186 = vmax.xlane.f32.xlu0 %v2185
    %v2187 = vpop.xlane.xlu0 %2186
    %v2188 = vsel %vm149, %v2183, -inf
    %2189 = vmax.xlane.f32.xlu0 %v2188
    %v2190 = vpop.xlane.xlu0 %2189
    %v2191 = vsub.f32 %v2180, %v2187
    %v2192 = vsub.f32 %v2183, %v2190
    %v2193 = vmul.f32 %v2191, 1.442695
    %v2194 = vpow.pop %v2193
    %v2195 = vmul.f32 %v2192, 1.442695
    %v2196 = vpow.pop %v2195
    %v2197 = vsel %vm149, %v2194, 0.0
    %2198 = vadd.xlane.f32.xlu0 %v2197
    %v2199 = vpop.xlane.xlu0 %2198
    %v2200 = vsel %vm149, %v2196, 0.0
    %2201 = vadd.xlane.f32.xlu0 %v2200
    %v2202 = vpop.xlane.xlu0 %2201
    %v2203 = vrcp.pop %v2199
    %v2204 = vrcp.pop %v2202
    %v2205 = vmul.f32 %v2194, %v2203
    %v2206 = vmul.f32 %v2196, %v2204
    %v2208 = vsel %vm149, %v2205, 0
    %v2211 = vsel %vm149, %v2206, 0
    %2213 = vmatpush.msra.mxu0 0.0
    %2214 = vmatpush.msra.mxu0 0.0
    %2215 = vmatpush.msra.mxu0 0.0
    %2216 = vmatpush.msra.mxu0 0.0
    %2217 = vmatpush.msra.mxu0 0.0
    %2218 = vmatpush.msra.mxu0 0.0
    %2219 = vmatpush.msra.mxu0 0.0
    %2220 = vmatpush.msra.mxu0 0.0
    %2221 = vmatpush.msra.mxu0 0.0
    %2222 = vmatpush.msra.mxu0 0.0
    %2223 = vmatpush.msra.mxu0 0.0
    %2224 = vmatpush.msra.mxu0 0.0
    %2225 = vmatpush.msra.mxu0 0.0
    %2226 = vmatpush.msra.mxu0 0.0
    %2227 = vmatpush.msra.mxu0 %v2059
    %2228 = vmatpush.msra.mxu0 %v2056
    %2229 = vmatmul.f32.gmra.mxu0 %v2208
    %v2230 = vpop.f32.mrf.mxu0
    %v2231 = vadd.f32 0.0, %v2230
    %2232 = vmatmul.f32.gmra.mxu0 %v2211
    %v2233 = vpop.f32.mrf.mxu0
    %v2234 = vadd.f32 0.0, %v2233
    %2235 = vdwg.mxu0
    %s2236 = scalar_lea.vmem %s7, 224
    %v2237 = vld [vmem:[%s2236] sm:$0xff]
    %v2238 = vld [vmem:[%s2236 + $0x8] sm:$0xff]
    %v2239 = vld [vmem:[%s2236 + $0x10] sm:$0xff]
    %v2240 = vld [vmem:[%s2236 + $0x18] sm:$0xff]
    %v2241 = vld [vmem:[%s12 + $0x12] sm:$0x1]
    %v2242 = vperm.slane %v2241, 0
    %2243 = vmatpush.msra.mxu0 0.0
    %2244 = vmatpush.msra.mxu0 0.0
    %2245 = vmatpush.msra.mxu0 0.0
    %2246 = vmatpush.msra.mxu0 0.0
    %2247 = vmatpush.msra.mxu0 0.0
    %2248 = vmatpush.msra.mxu0 0.0
    %2249 = vmatpush.msra.mxu0 0.0
    %2250 = vmatpush.msra.mxu0 0.0
    %2251 = vmatpush.msra.mxu0 0.0
    %2252 = vmatpush.msra.mxu0 0.0
    %2253 = vmatpush.msra.mxu0 0.0
    %2254 = vmatpush.msra.mxu0 0.0
    %2255 = vmatpush.msra.mxu0 %v2240
    %2256 = vmatpush.msra.mxu0 %v2239
    %2257 = vmatpush.msra.mxu0 %v2238
    %2258 = vmatpush.msra.mxu0 %v2237
    %2259 = vmatmul.f32.gmra.mxu0 %v1949
    %v2260 = vpop.f32.mrf.mxu0
    %v2261 = vadd.f32 %v2242, %v2260
    %2262 = vmatmul.f32.gmra.mxu0 %v1952
    %v2263 = vpop.f32.mrf.mxu0
    %v2264 = vadd.f32 %v2242, %v2263
    %2265 = vmatmul.f32.gmra.mxu0 %v1955
    %v2266 = vpop.f32.mrf.mxu0
    %v2267 = vadd.f32 %v2242, %v2266
    %2268 = vmatmul.f32.gmra.mxu0 %v1958
    %v2269 = vpop.f32.mrf.mxu0
    %v2270 = vadd.f32 %v2242, %v2269
    %2271 = vdwg.mxu0
    %s2272 = scalar_lea.vmem %s7, 288
    %v2273 = vld [vmem:[%s2272] sm:$0xff]
    %v2274 = vld [vmem:[%s2272 + $0x8] sm:$0xff]
    %v2275 = vld [vmem:[%s2272 + $0x10] sm:$0xff]
    %v2276 = vld [vmem:[%s2272 + $0x18] sm:$0xff]
    %v2277 = vld [vmem:[%s12 + $0x13] sm:$0x1]
    %v2278 = vperm.slane %v2277, 0
    %2279 = vmatpush.msra.mxu0 0.0
    %2280 = vmatpush.msra.mxu0 0.0
    %2281 = vmatpush.msra.mxu0 0.0
    %2282 = vmatpush.msra.mxu0 0.0
    %2283 = vmatpush.msra.mxu0 0.0
    %2284 = vmatpush.msra.mxu0 0.0
    %2285 = vmatpush.msra.mxu0 0.0
    %2286 = vmatpush.msra.mxu0 0.0
    %2287 = vmatpush.msra.mxu0 0.0
    %2288 = vmatpush.msra.mxu0 0.0
    %2289 = vmatpush.msra.mxu0 0.0
    %2290 = vmatpush.msra.mxu0 0.0
    %2291 = vmatpush.msra.mxu0 %v2276
    %2292 = vmatpush.msra.mxu0 %v2275
    %2293 = vmatpush.msra.mxu0 %v2274
    %2294 = vmatpush.msra.mxu0 %v2273
    %2295 = vmatmul.f32.gmra.mxu0 %v1949
    %v2296 = vpop.f32.mrf.mxu0
    %v2297 = vadd.f32 %v2278, %v2296
    %2298 = vmatmul.f32.gmra.mxu0 %v1952
    %v2299 = vpop.f32.mrf.mxu0
    %v2300 = vadd.f32 %v2278, %v2299
    %2301 = vmatmul.f32.gmra.mxu0 %v1955
    %v2302 = vpop.f32.mrf.mxu0
    %v2303 = vadd.f32 %v2278, %v2302
    %2304 = vmatmul.f32.gmra.mxu0 %v1958
    %v2305 = vpop.f32.mrf.mxu0
    %v2306 = vadd.f32 %v2278, %v2305
    %2307 = vdwg.mxu0
    %s2308 = scalar_lea.vmem %s7, 352
    %v2309 = vld [vmem:[%s2308] sm:$0xff]
    %v2310 = vld [vmem:[%s2308 + $0x8] sm:$0xff]
    %v2311 = vld [vmem:[%s2308 + $0x10] sm:$0xff]
    %v2312 = vld [vmem:[%s2308 + $0x18] sm:$0xff]
    %v2313 = vld [vmem:[%s12 + $0x14] sm:$0x1]
    %v2314 = vperm.slane %v2313, 0
    %2315 = vmatpush.msra.mxu0 0.0
    %2316 = vmatpush.msra.mxu0 0.0
    %2317 = vmatpush.msra.mxu0 0.0
    %2318 = vmatpush.msra.mxu0 0.0
    %2319 = vmatpush.msra.mxu0 0.0
    %2320 = vmatpush.msra.mxu0 0.0
    %2321 = vmatpush.msra.mxu0 0.0
    %2322 = vmatpush.msra.mxu0 0.0
    %2323 = vmatpush.msra.mxu0 0.0
    %2324 = vmatpush.msra.mxu0 0.0
    %2325 = vmatpush.msra.mxu0 0.0
    %2326 = vmatpush.msra.mxu0 0.0
    %2327 = vmatpush.msra.mxu0 %v2312
    %2328 = vmatpush.msra.mxu0 %v2311
    %2329 = vmatpush.msra.mxu0 %v2310
    %2330 = vmatpush.msra.mxu0 %v2309
    %2331 = vmatmul.f32.gmra.mxu0 %v1949
    %v2332 = vpop.f32.mrf.mxu0
    %v2333 = vadd.f32 %v2314, %v2332
    %2334 = vmatmul.f32.gmra.mxu0 %v1952
    %v2335 = vpop.f32.mrf.mxu0
    %v2336 = vadd.f32 %v2314, %v2335
    %2337 = vmatmul.f32.gmra.mxu0 %v1955
    %v2338 = vpop.f32.mrf.mxu0
    %v2339 = vadd.f32 %v2314, %v2338
    %2340 = vmatmul.f32.gmra.mxu0 %v1958
    %v2341 = vpop.f32.mrf.mxu0
    %v2342 = vadd.f32 %v2314, %v2341
    %2343 = vdwg.mxu0
    %v2345 = vsel %vm149, %v2261, 0
    %v2348 = vsel %vm149, %v2264, 0
    %v2351 = vsel %vm149, %v2297, 0
    %v2354 = vsel %vm149, %v2300, 0
    %2356 = vmatpush.xpose.msra.mxu0 0.0
    %2357 = vmatpush.xpose.msra.mxu0 0.0
    %2358 = vmatpush.xpose.msra.mxu0 0.0
    %2359 = vmatpush.xpose.msra.mxu0 0.0
    %2360 = vmatpush.xpose.msra.mxu0 0.0
    %2361 = vmatpush.xpose.msra.mxu0 0.0
    %2362 = vmatpush.xpose.msra.mxu0 0.0
    %2363 = vmatpush.xpose.msra.mxu0 0.0
    %2364 = vmatpush.xpose.msra.mxu0 0.0
    %2365 = vmatpush.xpose.msra.mxu0 0.0
    %2366 = vmatpush.xpose.msra.mxu0 0.0
    %2367 = vmatpush.xpose.msra.mxu0 0.0
    %2368 = vmatpush.xpose.msra.mxu0 0.0
    %2369 = vmatpush.xpose.msra.mxu0 0.0
    %2370 = vmatpush.xpose.msra.mxu0 %v2354
    %2371 = vmatpush.xpose.msra.mxu0 %v2351
    %2372 = vmatmul.f32.gmra.mxu0 %v2345
    %v2373 = vpop.f32.mrf.mxu0
    %v2374 = vadd.f32 %v310, %v2373
    %2375 = vmatmul.f32.gmra.mxu0 %v2348
    %v2376 = vpop.f32.mrf.mxu0
    %v2377 = vadd.f32 %v310, %v2376
    %2378 = vdwg.mxu0
    %v2379 = vsel %vm149, %v2374, -inf
    %2380 = vmax.xlane.f32.xlu0 %v2379
    %v2381 = vpop.xlane.xlu0 %2380
    %v2382 = vsel %vm149, %v2377, -inf
    %2383 = vmax.xlane.f32.xlu0 %v2382
    %v2384 = vpop.xlane.xlu0 %2383
    %v2385 = vsub.f32 %v2374, %v2381
    %v2386 = vsub.f32 %v2377, %v2384
    %v2387 = vmul.f32 %v2385, 1.442695
    %v2388 = vpow.pop %v2387
    %v2389 = vmul.f32 %v2386, 1.442695
    %v2390 = vpow.pop %v2389
    %v2391 = vsel %vm149, %v2388, 0.0
    %2392 = vadd.xlane.f32.xlu0 %v2391
    %v2393 = vpop.xlane.xlu0 %2392
    %v2394 = vsel %vm149, %v2390, 0.0
    %2395 = vadd.xlane.f32.xlu0 %v2394
    %v2396 = vpop.xlane.xlu0 %2395
    %v2397 = vrcp.pop %v2393
    %v2398 = vrcp.pop %v2396
    %v2399 = vmul.f32 %v2388, %v2397
    %v2400 = vmul.f32 %v2390, %v2398
    %v2402 = vsel %vm149, %v2399, 0
    %v2405 = vsel %vm149, %v2400, 0
    %2407 = vmatpush.msra.mxu0 0.0
    %2408 = vmatpush.msra.mxu0 0.0
    %2409 = vmatpush.msra.mxu0 0.0
    %2410 = vmatpush.msra.mxu0 0.0
    %2411 = vmatpush.msra.mxu0 0.0
    %2412 = vmatpush.msra.mxu0 0.0
    %2413 = vmatpush.msra.mxu0 0.0
    %2414 = vmatpush.msra.mxu0 0.0
    %2415 = vmatpush.msra.mxu0 0.0
    %2416 = vmatpush.msra.mxu0 0.0
    %2417 = vmatpush.msra.mxu0 0.0
    %2418 = vmatpush.msra.mxu0 0.0
    %2419 = vmatpush.msra.mxu0 0.0
    %2420 = vmatpush.msra.mxu0 0.0
    %2421 = vmatpush.msra.mxu0 %v2336
    %2422 = vmatpush.msra.mxu0 %v2333
    %2423 = vmatmul.f32.gmra.mxu0 %v2402
    %v2424 = vpop.f32.mrf.mxu0
    %v2425 = vadd.f32 0.0, %v2424
    %2426 = vmatmul.f32.gmra.mxu0 %v2405
    %v2427 = vpop.f32.mrf.mxu0
    %v2428 = vadd.f32 0.0, %v2427
    %2429 = vdwg.mxu0
    %s2430 = scalar_lea.vmem %s8, 48
    %v2431 = vld [vmem:[%s2430] sm:$0xff]
    %v2432 = vld [vmem:[%s2430 + $0x8] sm:$0xff]
    %v2434 = vsel %vm149, %v2425, 0
    %v2437 = vsel %vm149, %v2428, 0
    %2439 = vmatpush.msra.mxu0 0.0
    %2440 = vmatpush.msra.mxu0 0.0
    %2441 = vmatpush.msra.mxu0 0.0
    %2442 = vmatpush.msra.mxu0 0.0
    %2443 = vmatpush.msra.mxu0 0.0
    %2444 = vmatpush.msra.mxu0 0.0
    %2445 = vmatpush.msra.mxu0 0.0
    %2446 = vmatpush.msra.mxu0 0.0
    %2447 = vmatpush.msra.mxu0 0.0
    %2448 = vmatpush.msra.mxu0 0.0
    %2449 = vmatpush.msra.mxu0 0.0
    %2450 = vmatpush.msra.mxu0 0.0
    %2451 = vmatpush.msra.mxu0 0.0
    %2452 = vmatpush.msra.mxu0 0.0
    %2453 = vmatpush.msra.mxu0 %v2432
    %2454 = vmatpush.msra.mxu0 %v2431
    %2455 = vmatmul.f32.gmra.mxu0 %v2434
    %v2456 = vpop.f32.mrf.mxu0
    %v2457 = vadd.f32 0.0, %v2456
    %2458 = vmatmul.f32.gmra.mxu0 %v2437
    %v2459 = vpop.f32.mrf.mxu0
    %v2460 = vadd.f32 0.0, %v2459
    %2461 = vdwg.mxu0
    %v2463 = vsel %vm149, %v2142, 0
    %v2466 = vsel %vm149, %v2145, 0
    %2468 = vmatpush.msra.mxu0 0.0
    %2469 = vmatpush.msra.mxu0 0.0
    %2470 = vmatpush.msra.mxu0 0.0
    %2471 = vmatpush.msra.mxu0 0.0
    %2472 = vmatpush.msra.mxu0 0.0
    %2473 = vmatpush.msra.mxu0 0.0
    %2474 = vmatpush.msra.mxu0 0.0
    %2475 = vmatpush.msra.mxu0 0.0
    %2476 = vmatpush.msra.mxu0 0.0
    %2477 = vmatpush.msra.mxu0 0.0
    %2478 = vmatpush.msra.mxu0 0.0
    %2479 = vmatpush.msra.mxu0 0.0
    %2480 = vmatpush.msra.mxu0 0.0
    %2481 = vmatpush.msra.mxu0 0.0
    %2482 = vmatpush.msra.mxu0 %v2149
    %2483 = vmatpush.msra.mxu0 %v2148
    %2484 = vmatmul.f32.gmra.mxu0 %v2463
    %v2485 = vpop.f32.mrf.mxu0
    %v2486 = vadd.f32 %v2457, %v2485
    %2487 = vmatmul.f32.gmra.mxu0 %v2466
    %v2488 = vpop.f32.mrf.mxu0
    %v2489 = vadd.f32 %v2460, %v2488
    %2490 = vdwg.mxu0
    %v2492 = vsel %vm149, %v2267, 0
    %v2495 = vsel %vm149, %v2270, 0
    %v2498 = vsel %vm149, %v2303, 0
    %v2501 = vsel %vm149, %v2306, 0
    %2503 = vmatpush.xpose.msra.mxu0 0.0
    %2504 = vmatpush.xpose.msra.mxu0 0.0
    %2505 = vmatpush.xpose.msra.mxu0 0.0
    %2506 = vmatpush.xpose.msra.mxu0 0.0
    %2507 = vmatpush.xpose.msra.mxu0 0.0
    %2508 = vmatpush.xpose.msra.mxu0 0.0
    %2509 = vmatpush.xpose.msra.mxu0 0.0
    %2510 = vmatpush.xpose.msra.mxu0 0.0
    %2511 = vmatpush.xpose.msra.mxu0 0.0
    %2512 = vmatpush.xpose.msra.mxu0 0.0
    %2513 = vmatpush.xpose.msra.mxu0 0.0
    %2514 = vmatpush.xpose.msra.mxu0 0.0
    %2515 = vmatpush.xpose.msra.mxu0 0.0
    %2516 = vmatpush.xpose.msra.mxu0 0.0
    %2517 = vmatpush.xpose.msra.mxu0 %v2501
    %2518 = vmatpush.xpose.msra.mxu0 %v2498
    %2519 = vmatmul.f32.gmra.mxu0 %v2492
    %v2520 = vpop.f32.mrf.mxu0
    %v2521 = vadd.f32 %v399, %v2520
    %2522 = vmatmul.f32.gmra.mxu0 %v2495
    %v2523 = vpop.f32.mrf.mxu0
    %v2524 = vadd.f32 %v399, %v2523
    %2525 = vdwg.mxu0
    %v2526 = vsel %vm149, %v2521, -inf
    %2527 = vmax.xlane.f32.xlu0 %v2526
    %v2528 = vpop.xlane.xlu0 %2527
    %v2529 = vsel %vm149, %v2524, -inf
    %2530 = vmax.xlane.f32.xlu0 %v2529
    %v2531 = vpop.xlane.xlu0 %2530
    %v2532 = vsub.f32 %v2521, %v2528
    %v2533 = vsub.f32 %v2524, %v2531
    %v2534 = vmul.f32 %v2532, 1.442695
    %v2535 = vpow.pop %v2534
    %v2536 = vmul.f32 %v2533, 1.442695
    %v2537 = vpow.pop %v2536
    %v2538 = vsel %vm149, %v2535, 0.0
    %2539 = vadd.xlane.f32.xlu0 %v2538
    %v2540 = vpop.xlane.xlu0 %2539
    %v2541 = vsel %vm149, %v2537, 0.0
    %2542 = vadd.xlane.f32.xlu0 %v2541
    %v2543 = vpop.xlane.xlu0 %2542
    %v2544 = vrcp.pop %v2540
    %v2545 = vrcp.pop %v2543
    %v2546 = vmul.f32 %v2535, %v2544
    %v2547 = vmul.f32 %v2537, %v2545
    %v2549 = vsel %vm149, %v2546, 0
    %v2552 = vsel %vm149, %v2547, 0
    %2554 = vmatpush.msra.mxu0 0.0
    %2555 = vmatpush.msra.mxu0 0.0
    %2556 = vmatpush.msra.mxu0 0.0
    %2557 = vmatpush.msra.mxu0 0.0
    %2558 = vmatpush.msra.mxu0 0.0
    %2559 = vmatpush.msra.mxu0 0.0
    %2560 = vmatpush.msra.mxu0 0.0
    %2561 = vmatpush.msra.mxu0 0.0
    %2562 = vmatpush.msra.mxu0 0.0
    %2563 = vmatpush.msra.mxu0 0.0
    %2564 = vmatpush.msra.mxu0 0.0
    %2565 = vmatpush.msra.mxu0 0.0
    %2566 = vmatpush.msra.mxu0 0.0
    %2567 = vmatpush.msra.mxu0 0.0
    %2568 = vmatpush.msra.mxu0 %v2342
    %2569 = vmatpush.msra.mxu0 %v2339
    %2570 = vmatmul.f32.gmra.mxu0 %v2549
    %v2571 = vpop.f32.mrf.mxu0
    %v2572 = vadd.f32 0.0, %v2571
    %2573 = vmatmul.f32.gmra.mxu0 %v2552
    %v2574 = vpop.f32.mrf.mxu0
    %v2575 = vadd.f32 0.0, %v2574
    %2576 = vdwg.mxu0
    %v2578 = vsel %vm149, %v2572, 0
    %v2581 = vsel %vm149, %v2575, 0
    %2583 = vmatpush.msra.mxu0 0.0
    %2584 = vmatpush.msra.mxu0 0.0
    %2585 = vmatpush.msra.mxu0 0.0
    %2586 = vmatpush.msra.mxu0 0.0
    %2587 = vmatpush.msra.mxu0 0.0
    %2588 = vmatpush.msra.mxu0 0.0
    %2589 = vmatpush.msra.mxu0 0.0
    %2590 = vmatpush.msra.mxu0 0.0
    %2591 = vmatpush.msra.mxu0 0.0
    %2592 = vmatpush.msra.mxu0 0.0
    %2593 = vmatpush.msra.mxu0 0.0
    %2594 = vmatpush.msra.mxu0 0.0
    %2595 = vmatpush.msra.mxu0 0.0
    %2596 = vmatpush.msra.mxu0 0.0
    %2597 = vmatpush.msra.mxu0 %v2432
    %2598 = vmatpush.msra.mxu0 %v2431
    %2599 = vmatmul.f32.gmra.mxu0 %v2578
    %v2600 = vpop.f32.mrf.mxu0
    %v2601 = vadd.f32 0.0, %v2600
    %2602 = vmatmul.f32.gmra.mxu0 %v2581
    %v2603 = vpop.f32.mrf.mxu0
    %v2604 = vadd.f32 0.0, %v2603
    %2605 = vdwg.mxu0
    %v2607 = vsel %vm149, %v2231, 0
    %v2610 = vsel %vm149, %v2234, 0
    %2612 = vmatpush.msra.mxu0 0.0
    %2613 = vmatpush.msra.mxu0 0.0
    %2614 = vmatpush.msra.mxu0 0.0
    %2615 = vmatpush.msra.mxu0 0.0
    %2616 = vmatpush.msra.mxu0 0.0
    %2617 = vmatpush.msra.mxu0 0.0
    %2618 = vmatpush.msra.mxu0 0.0
    %2619 = vmatpush.msra.mxu0 0.0
    %2620 = vmatpush.msra.mxu0 0.0
    %2621 = vmatpush.msra.mxu0 0.0
    %2622 = vmatpush.msra.mxu0 0.0
    %2623 = vmatpush.msra.mxu0 0.0
    %2624 = vmatpush.msra.mxu0 0.0
    %2625 = vmatpush.msra.mxu0 0.0
    %2626 = vmatpush.msra.mxu0 %v2149
    %2627 = vmatpush.msra.mxu0 %v2148
    %2628 = vmatmul.f32.gmra.mxu0 %v2607
    %v2629 = vpop.f32.mrf.mxu0
    %v2630 = vadd.f32 %v2601, %v2629
    %2631 = vmatmul.f32.gmra.mxu0 %v2610
    %v2632 = vpop.f32.mrf.mxu0
    %v2633 = vadd.f32 %v2604, %v2632
    %2634 = vdwg.mxu0
    %v2635 = vld [vmem:[%s12 + $0xc] sm:$0x1]
    %v2636 = vperm.slane %v2635, 0
    %v2637 = vadd.f32 %v2486, %v2636
    %v2638 = vadd.f32 %v2489, %v2636
    %v2639 = vadd.f32 %v2630, %v2636
    %v2640 = vadd.f32 %v2633, %v2636
    %v2641 = vadd.f32 %v2637, %v1937
    %v2642 = vadd.f32 %v2638, %v1938
    %v2643 = vadd.f32 %v2639, %v1939
    %v2644 = vadd.f32 %v2640, %v1940
    %s2645 = scalar_lea.vmem %s4, 128
    %v2646 = vld [vmem:[%s2645] sm:$0xff]
    %v2647 = vld [vmem:[%s2645 + $0x8] sm:$0xff]
    %v2648 = vld [vmem:[%s2645 + $0x10] sm:$0xff]
    %v2649 = vld [vmem:[%s2645 + $0x18] sm:$0xff]
    %s2650 = scalar_lea.vmem %s4, 160
    %v2651 = vld [vmem:[%s2650] sm:$0xff]
    %v2652 = vld [vmem:[%s2650 + $0x8] sm:$0xff]
    %v2653 = vld [vmem:[%s2650 + $0x10] sm:$0xff]
    %v2654 = vld [vmem:[%s2650 + $0x18] sm:$0xff]
    %v2655 = vsel %vm99, %v2641, 0.0
    %2656 = vadd.xlane.f32.xlu0 %v2655
    %v2657 = vpop.xlane.xlu0 %2656
    %v2658 = vsel %vm99, %v2642, 0.0
    %2659 = vadd.xlane.f32.xlu0 %v2658
    %v2660 = vpop.xlane.xlu0 %2659
    %v2661 = vsel %vm99, %v2643, 0.0
    %2662 = vadd.xlane.f32.xlu0 %v2661
    %v2663 = vpop.xlane.xlu0 %2662
    %v2664 = vsel %vm99, %v2644, 0.0
    %2665 = vadd.xlane.f32.xlu0 %v2664
    %v2666 = vpop.xlane.xlu0 %2665
    %v2667 = vmul.f32 %v2657, %v922
    %v2668 = vmul.f32 %v2660, %v922
    %v2669 = vmul.f32 %v2663, %v922
    %v2670 = vmul.f32 %v2666, %v922
    %v2671 = vsub.f32 %v2641, %v2667
    %v2672 = vsub.f32 %v2642, %v2668
    %v2673 = vsub.f32 %v2643, %v2669
    %v2674 = vsub.f32 %v2644, %v2670
    %v2675 = vmul.f32 %v2671, %v2671
    %v2676 = vmul.f32 %v2672, %v2672
    %v2677 = vmul.f32 %v2673, %v2673
    %v2678 = vmul.f32 %v2674, %v2674
    %v2679 = vsel %vm99, %v2675, 0.0
    %2680 = vadd.xlane.f32.xlu0 %v2679
    %v2681 = vpop.xlane.xlu0 %2680
    %v2682 = vsel %vm99, %v2676, 0.0
    %2683 = vadd.xlane.f32.xlu0 %v2682
    %v2684 = vpop.xlane.xlu0 %2683
    %v2685 = vsel %vm99, %v2677, 0.0
    %2686 = vadd.xlane.f32.xlu0 %v2685
    %v2687 = vpop.xlane.xlu0 %2686
    %v2688 = vsel %vm99, %v2678, 0.0
    %2689 = vadd.xlane.f32.xlu0 %v2688
    %v2690 = vpop.xlane.xlu0 %2689
    %v2691 = vmul.f32 %v2681, %v922
    %v2692 = vmul.f32 %v2684, %v922
    %v2693 = vmul.f32 %v2687, %v922
    %v2694 = vmul.f32 %v2690, %v922
    %v2695 = vadd.f32 %v2691, 1e-05
    %v2696 = vadd.f32 %v2692, 1e-05
    %v2697 = vadd.f32 %v2693, 1e-05
    %v2698 = vadd.f32 %v2694, 1e-05
    %v2699 = vrsqrt.pop %v2695
    %v2700 = vmul.f32 %v2699, %v2695
    %v2701 = vmul.f32 %v2700, %v2699
    %v2702 = vmul.f32 0.5, %v2701
    %v2703 = vsub.f32 1.5, %v2702
    %v2704 = vmul.f32 %v2699, %v2703
    %vm2705 = vweird.f32 %v2695
    %vm2706 = vweird.f32 %v2699
    %vm2707 = vmor %vm2705, %vm2706
    %v2708 = vsel %vm2707, %v2699, %v2704
    %v2709 = vrsqrt.pop %v2696
    %v2710 = vmul.f32 %v2709, %v2696
    %v2711 = vmul.f32 %v2710, %v2709
    %v2712 = vmul.f32 0.5, %v2711
    %v2713 = vsub.f32 1.5, %v2712
    %v2714 = vmul.f32 %v2709, %v2713
    %vm2715 = vweird.f32 %v2696
    %vm2716 = vweird.f32 %v2709
    %vm2717 = vmor %vm2715, %vm2716
    %v2718 = vsel %vm2717, %v2709, %v2714
    %v2719 = vrsqrt.pop %v2697
    %v2720 = vmul.f32 %v2719, %v2697
    %v2721 = vmul.f32 %v2720, %v2719
    %v2722 = vmul.f32 0.5, %v2721
    %v2723 = vsub.f32 1.5, %v2722
    %v2724 = vmul.f32 %v2719, %v2723
    %vm2725 = vweird.f32 %v2697
    %vm2726 = vweird.f32 %v2719
    %vm2727 = vmor %vm2725, %vm2726
    %v2728 = vsel %vm2727, %v2719, %v2724
    %v2729 = vrsqrt.pop %v2698
    %v2730 = vmul.f32 %v2729, %v2698
    %v2731 = vmul.f32 %v2730, %v2729
    %v2732 = vmul.f32 0.5, %v2731
    %v2733 = vsub.f32 1.5, %v2732
    %v2734 = vmul.f32 %v2729, %v2733
    %vm2735 = vweird.f32 %v2698
    %vm2736 = vweird.f32 %v2729
    %vm2737 = vmor %vm2735, %vm2736
    %v2738 = vsel %vm2737, %v2729, %v2734
    %v2739 = vmul.f32 %v2671, %v2708
    %v2740 = vmul.f32 %v2672, %v2718
    %v2741 = vmul.f32 %v2673, %v2728
    %v2742 = vmul.f32 %v2674, %v2738
    %v2743 = vmul.f32 %v2646, %v2739
    %v2744 = vmul.f32 %v2647, %v2740
    %v2745 = vmul.f32 %v2648, %v2741
    %v2746 = vmul.f32 %v2649, %v2742
    %v2747 = vadd.f32 %v2743, %v2651
    %v2748 = vadd.f32 %v2744, %v2652
    %v2749 = vadd.f32 %v2745, %v2653
    %v2750 = vadd.f32 %v2746, %v2654
    %v2751 = vmul.f32 %v2747, %v1010
    %v2752 = vmul.f32 %v2748, %v1015
    %v2753 = vmul.f32 %v2749, %v1020
    %v2754 = vmul.f32 %v2750, %v1025
    %v2755 = vrot.slane %v2751, 4
    %v2756 = vrot.slane %v2752, 4
    %v2757 = vrot.slane %v2753, 4
    %v2758 = vrot.slane %v2754, 4
    %v2759 = vsel %vm1037, %v2757, %v2758
    %v2760 = vsel %vm1037, %v2756, %v2757
    %v2761 = vsel %vm1037, %v2755, %v2756
    %v2762 = vsel %vm1037, %v2758, %v2755
    %v2763 = vmul.f32 %v2762, %v1045
    %v2764 = vmul.f32 %v2761, %v1050
    %v2765 = vmul.f32 %v2760, %v1055
    %v2766 = vmul.f32 %v2759, %v1060
    %s2767 = scalar_lea.vmem %s9, 288
    %v2768 = vld [vmem:[%s2767] sm:$0xff]
    %v2769 = vld [vmem:[%s2767 + $0x8] sm:$0xff]
    %v2770 = vld [vmem:[%s2767 + $0x10] sm:$0xff]
    %v2771 = vld [vmem:[%s2767 + $0x18] sm:$0xff]
    %v2772 = vrot.slane %v2751, 5
    %v2773 = vrot.slane %v2752, 5
    %v2774 = vrot.slane %v2753, 5
    %v2775 = vrot.slane %v2754, 5
    %v2776 = vsel %vm1074, %v2774, %v2775
    %v2777 = vsel %vm1074, %v2773, %v2774
    %v2778 = vsel %vm1074, %v2772, %v2773
    %v2779 = vsel %vm1074, %v2775, %v2772
    %v2780 = vmul.f32 %v2779, %v1082
    %v2781 = vmul.f32 %v2778, %v1087
    %v2782 = vmul.f32 %v2777, %v1092
    %v2783 = vmul.f32 %v2776, %v1097
    %s2784 = scalar_lea.vmem %s9, 320
    %v2785 = vld [vmem:[%s2784] sm:$0xff]
    %v2786 = vld [vmem:[%s2784 + $0x8] sm:$0xff]
    %v2787 = vld [vmem:[%s2784 + $0x10] sm:$0xff]
    %v2788 = vld [vmem:[%s2784 + $0x18] sm:$0xff]
    %v2790 = vsel %vm99, %v2780, 0
    %v2793 = vsel %vm99, %v2781, 0
    %v2796 = vsel %vm99, %v2782, 0
    %v2799 = vsel %vm99, %v2783, 0
    %2801 = vmatpush.msra.mxu0 0.0
    %2802 = vmatpush.msra.mxu0 0.0
    %2803 = vmatpush.msra.mxu0 0.0
    %2804 = vmatpush.msra.mxu0 0.0
    %2805 = vmatpush.msra.mxu0 0.0
    %2806 = vmatpush.msra.mxu0 0.0
    %2807 = vmatpush.msra.mxu0 0.0
    %2808 = vmatpush.msra.mxu0 0.0
    %2809 = vmatpush.msra.mxu0 0.0
    %2810 = vmatpush.msra.mxu0 0.0
    %2811 = vmatpush.msra.mxu0 0.0
    %2812 = vmatpush.msra.mxu0 0.0
    %2813 = vmatpush.msra.mxu0 %v2788
    %2814 = vmatpush.msra.mxu0 %v2787
    %2815 = vmatpush.msra.mxu0 %v2786
    %2816 = vmatpush.msra.mxu0 %v2785
    %2817 = vmatmul.f32.gmra.mxu0 %v2790
    %v2818 = vpop.f32.mrf.mxu0
    %v2819 = vadd.f32 0.0, %v2818
    %2820 = vmatmul.f32.gmra.mxu0 %v2793
    %v2821 = vpop.f32.mrf.mxu0
    %v2822 = vadd.f32 0.0, %v2821
    %2823 = vmatmul.f32.gmra.mxu0 %v2796
    %v2824 = vpop.f32.mrf.mxu0
    %v2825 = vadd.f32 0.0, %v2824
    %2826 = vmatmul.f32.gmra.mxu0 %v2799
    %v2827 = vpop.f32.mrf.mxu0
    %v2828 = vadd.f32 0.0, %v2827
    %2829 = vdwg.mxu0
    %v2831 = vsel %vm99, %v2763, 0
    %v2834 = vsel %vm99, %v2764, 0
    %v2837 = vsel %vm99, %v2765, 0
    %v2840 = vsel %vm99, %v2766, 0
    %2842 = vmatpush.msra.mxu0 0.0
    %2843 = vmatpush.msra.mxu0 0.0
    %2844 = vmatpush.msra.mxu0 0.0
    %2845 = vmatpush.msra.mxu0 0.0
    %2846 = vmatpush.msra.mxu0 0.0
    %2847 = vmatpush.msra.mxu0 0.0
    %2848 = vmatpush.msra.mxu0 0.0
    %2849 = vmatpush.msra.mxu0 0.0
    %2850 = vmatpush.msra.mxu0 0.0
    %2851 = vmatpush.msra.mxu0 0.0
    %2852 = vmatpush.msra.mxu0 0.0
    %2853 = vmatpush.msra.mxu0 0.0
    %2854 = vmatpush.msra.mxu0 %v2771
    %2855 = vmatpush.msra.mxu0 %v2770
    %2856 = vmatpush.msra.mxu0 %v2769
    %2857 = vmatpush.msra.mxu0 %v2768
    %2858 = vmatmul.f32.gmra.mxu0 %v2831
    %v2859 = vpop.f32.mrf.mxu0
    %v2860 = vadd.f32 %v2819, %v2859
    %2861 = vmatmul.f32.gmra.mxu0 %v2834
    %v2862 = vpop.f32.mrf.mxu0
    %v2863 = vadd.f32 %v2822, %v2862
    %2864 = vmatmul.f32.gmra.mxu0 %v2837
    %v2865 = vpop.f32.mrf.mxu0
    %v2866 = vadd.f32 %v2825, %v2865
    %2867 = vmatmul.f32.gmra.mxu0 %v2840
    %v2868 = vpop.f32.mrf.mxu0
    %v2869 = vadd.f32 %v2828, %v2868
    %2870 = vdwg.mxu0
    %v2871 = vrot.slane %v2751, 6
    %v2872 = vrot.slane %v2752, 6
    %v2873 = vrot.slane %v2753, 6
    %v2874 = vrot.slane %v2754, 6
    %v2875 = vsel %vm1194, %v2873, %v2874
    %v2876 = vsel %vm1194, %v2872, %v2873
    %v2877 = vsel %vm1194, %v2871, %v2872
    %v2878 = vsel %vm1194, %v2874, %v2871
    %v2879 = vmul.f32 %v2878, %v1202
    %v2880 = vmul.f32 %v2877, %v1207
    %v2881 = vmul.f32 %v2876, %v1212
    %v2882 = vmul.f32 %v2875, %v1217
    %s2883 = scalar_lea.vmem %s9, 352
    %v2884 = vld [vmem:[%s2883] sm:$0xff]
    %v2885 = vld [vmem:[%s2883 + $0x8] sm:$0xff]
    %v2886 = vld [vmem:[%s2883 + $0x10] sm:$0xff]
    %v2887 = vld [vmem:[%s2883 + $0x18] sm:$0xff]
    %v2889 = vsel %vm99, %v2879, 0
    %v2892 = vsel %vm99, %v2880, 0
    %v2895 = vsel %vm99, %v2881, 0
    %v2898 = vsel %vm99, %v2882, 0
    %2900 = vmatpush.msra.mxu0 0.0
    %2901 = vmatpush.msra.mxu0 0.0
    %2902 = vmatpush.msra.mxu0 0.0
    %2903 = vmatpush.msra.mxu0 0.0
    %2904 = vmatpush.msra.mxu0 0.0
    %2905 = vmatpush.msra.mxu0 0.0
    %2906 = vmatpush.msra.mxu0 0.0
    %2907 = vmatpush.msra.mxu0 0.0
    %2908 = vmatpush.msra.mxu0 0.0
    %2909 = vmatpush.msra.mxu0 0.0
    %2910 = vmatpush.msra.mxu0 0.0
    %2911 = vmatpush.msra.mxu0 0.0
    %2912 = vmatpush.msra.mxu0 %v2887
    %2913 = vmatpush.msra.mxu0 %v2886
    %2914 = vmatpush.msra.mxu0 %v2885
    %2915 = vmatpush.msra.mxu0 %v2884
    %2916 = vmatmul.f32.gmra.mxu0 %v2889
    %v2917 = vpop.f32.mrf.mxu0
    %v2918 = vadd.f32 0.0, %v2917
    %2919 = vmatmul.f32.gmra.mxu0 %v2892
    %v2920 = vpop.f32.mrf.mxu0
    %v2921 = vadd.f32 0.0, %v2920
    %2922 = vmatmul.f32.gmra.mxu0 %v2895
    %v2923 = vpop.f32.mrf.mxu0
    %v2924 = vadd.f32 0.0, %v2923
    %2925 = vmatmul.f32.gmra.mxu0 %v2898
    %v2926 = vpop.f32.mrf.mxu0
    %v2927 = vadd.f32 0.0, %v2926
    %2928 = vdwg.mxu0
    %v2929 = vadd.f32 %v2860, %v2918
    %v2930 = vadd.f32 %v2863, %v2921
    %v2931 = vadd.f32 %v2866, %v2924
    %v2932 = vadd.f32 %v2869, %v2927
    %v2933 = vrot.slane %v2751, 7
    %v2934 = vrot.slane %v2752, 7
    %v2935 = vrot.slane %v2753, 7
    %v2936 = vrot.slane %v2754, 7
    %v2937 = vsel %vm1277, %v2935, %v2936
    %v2938 = vsel %vm1277, %v2934, %v2935
    %v2939 = vsel %vm1277, %v2933, %v2934
    %v2940 = vsel %vm1277, %v2936, %v2933
    %v2941 = vmul.f32 %v2940, %v1285
    %v2942 = vmul.f32 %v2939, %v1290
    %v2943 = vmul.f32 %v2938, %v1295
    %v2944 = vmul.f32 %v2937, %v1300
    %s2945 = scalar_lea.vmem %s9, 384
    %v2946 = vld [vmem:[%s2945] sm:$0xff]
    %v2947 = vld [vmem:[%s2945 + $0x8] sm:$0xff]
    %v2948 = vld [vmem:[%s2945 + $0x10] sm:$0xff]
    %v2949 = vld [vmem:[%s2945 + $0x18] sm:$0xff]
    %v2951 = vsel %vm99, %v2941, 0
    %v2954 = vsel %vm99, %v2942, 0
    %v2957 = vsel %vm99, %v2943, 0
    %v2960 = vsel %vm99, %v2944, 0
    %2962 = vmatpush.msra.mxu0 0.0
    %2963 = vmatpush.msra.mxu0 0.0
    %2964 = vmatpush.msra.mxu0 0.0
    %2965 = vmatpush.msra.mxu0 0.0
    %2966 = vmatpush.msra.mxu0 0.0
    %2967 = vmatpush.msra.mxu0 0.0
    %2968 = vmatpush.msra.mxu0 0.0
    %2969 = vmatpush.msra.mxu0 0.0
    %2970 = vmatpush.msra.mxu0 0.0
    %2971 = vmatpush.msra.mxu0 0.0
    %2972 = vmatpush.msra.mxu0 0.0
    %2973 = vmatpush.msra.mxu0 0.0
    %2974 = vmatpush.msra.mxu0 %v2949
    %2975 = vmatpush.msra.mxu0 %v2948
    %2976 = vmatpush.msra.mxu0 %v2947
    %2977 = vmatpush.msra.mxu0 %v2946
    %2978 = vmatmul.f32.gmra.mxu0 %v2951
    %v2979 = vpop.f32.mrf.mxu0
    %v2980 = vadd.f32 0.0, %v2979
    %2981 = vmatmul.f32.gmra.mxu0 %v2954
    %v2982 = vpop.f32.mrf.mxu0
    %v2983 = vadd.f32 0.0, %v2982
    %2984 = vmatmul.f32.gmra.mxu0 %v2957
    %v2985 = vpop.f32.mrf.mxu0
    %v2986 = vadd.f32 0.0, %v2985
    %2987 = vmatmul.f32.gmra.mxu0 %v2960
    %v2988 = vpop.f32.mrf.mxu0
    %v2989 = vadd.f32 0.0, %v2988
    %2990 = vdwg.mxu0
    %v2991 = vadd.f32 %v2929, %v2980
    %v2992 = vadd.f32 %v2930, %v2983
    %v2993 = vadd.f32 %v2931, %v2986
    %v2994 = vadd.f32 %v2932, %v2989
    %s2995 = scalar_lea.vmem %s9, 416
    %v2996 = vld [vmem:[%s2995] sm:$0xff]
    %v2997 = vld [vmem:[%s2995 + $0x8] sm:$0xff]
    %v2998 = vld [vmem:[%s2995 + $0x10] sm:$0xff]
    %v2999 = vld [vmem:[%s2995 + $0x18] sm:$0xff]
    %v3001 = vsel %vm99, %v2751, 0
    %v3004 = vsel %vm99, %v2752, 0
    %v3007 = vsel %vm99, %v2753, 0
    %v3010 = vsel %vm99, %v2754, 0
    %3012 = vmatpush.msra.mxu0 0.0
    %3013 = vmatpush.msra.mxu0 0.0
    %3014 = vmatpush.msra.mxu0 0.0
    %3015 = vmatpush.msra.mxu0 0.0
    %3016 = vmatpush.msra.mxu0 0.0
    %3017 = vmatpush.msra.mxu0 0.0
    %3018 = vmatpush.msra.mxu0 0.0
    %3019 = vmatpush.msra.mxu0 0.0
    %3020 = vmatpush.msra.mxu0 0.0
    %3021 = vmatpush.msra.mxu0 0.0
    %3022 = vmatpush.msra.mxu0 0.0
    %3023 = vmatpush.msra.mxu0 0.0
    %3024 = vmatpush.msra.mxu0 %v2999
    %3025 = vmatpush.msra.mxu0 %v2998
    %3026 = vmatpush.msra.mxu0 %v2997
    %3027 = vmatpush.msra.mxu0 %v2996
    %3028 = vmatmul.f32.gmra.mxu0 %v3001
    %v3029 = vpop.f32.mrf.mxu0
    %v3030 = vadd.f32 0.0, %v3029
    %3031 = vmatmul.f32.gmra.mxu0 %v3004
    %v3032 = vpop.f32.mrf.mxu0
    %v3033 = vadd.f32 0.0, %v3032
    %3034 = vmatmul.f32.gmra.mxu0 %v3007
    %v3035 = vpop.f32.mrf.mxu0
    %v3036 = vadd.f32 0.0, %v3035
    %3037 = vmatmul.f32.gmra.mxu0 %v3010
    %v3038 = vpop.f32.mrf.mxu0
    %v3039 = vadd.f32 0.0, %v3038
    %3040 = vdwg.mxu0
    %v3041 = vadd.f32 %v2991, %v3030
    %v3042 = vadd.f32 %v2992, %v3033
    %v3043 = vadd.f32 %v2993, %v3036
    %v3044 = vadd.f32 %v2994, %v3039
    %v3045 = vrot.slane %v2751, 1
    %v3046 = vrot.slane %v2752, 1
    %v3047 = vrot.slane %v2753, 1
    %v3048 = vrot.slane %v2754, 1
    %v3049 = vsel %vm1410, %v3047, %v3048
    %v3050 = vsel %vm1410, %v3046, %v3047
    %v3051 = vsel %vm1410, %v3045, %v3046
    %v3052 = vsel %vm1410, %v3048, %v3045
    %v3053 = vmul.f32 %v3051, %v1418
    %v3054 = vmul.f32 %v3050, %v1423
    %v3055 = vmul.f32 %v3049, %v1428
    %v3056 = vmul.f32 %v3052, %v1433
    %s3057 = scalar_lea.vmem %s9, 448
    %v3058 = vld [vmem:[%s3057] sm:$0xff]
    %v3059 = vld [vmem:[%s3057 + $0x8] sm:$0xff]
    %v3060 = vld [vmem:[%s3057 + $0x10] sm:$0xff]
    %v3061 = vld [vmem:[%s3057 + $0x18] sm:$0xff]
    %v3063 = vsel %vm99, %v3053, 0
    %v3066 = vsel %vm99, %v3054, 0
    %v3069 = vsel %vm99, %v3055, 0
    %v3072 = vsel %vm99, %v3056, 0
    %3074 = vmatpush.msra.mxu0 0.0
    %3075 = vmatpush.msra.mxu0 0.0
    %3076 = vmatpush.msra.mxu0 0.0
    %3077 = vmatpush.msra.mxu0 0.0
    %3078 = vmatpush.msra.mxu0 0.0
    %3079 = vmatpush.msra.mxu0 0.0
    %3080 = vmatpush.msra.mxu0 0.0
    %3081 = vmatpush.msra.mxu0 0.0
    %3082 = vmatpush.msra.mxu0 0.0
    %3083 = vmatpush.msra.mxu0 0.0
    %3084 = vmatpush.msra.mxu0 0.0
    %3085 = vmatpush.msra.mxu0 0.0
    %3086 = vmatpush.msra.mxu0 %v3061
    %3087 = vmatpush.msra.mxu0 %v3060
    %3088 = vmatpush.msra.mxu0 %v3059
    %3089 = vmatpush.msra.mxu0 %v3058
    %3090 = vmatmul.f32.gmra.mxu0 %v3063
    %v3091 = vpop.f32.mrf.mxu0
    %v3092 = vadd.f32 0.0, %v3091
    %3093 = vmatmul.f32.gmra.mxu0 %v3066
    %v3094 = vpop.f32.mrf.mxu0
    %v3095 = vadd.f32 0.0, %v3094
    %3096 = vmatmul.f32.gmra.mxu0 %v3069
    %v3097 = vpop.f32.mrf.mxu0
    %v3098 = vadd.f32 0.0, %v3097
    %3099 = vmatmul.f32.gmra.mxu0 %v3072
    %v3100 = vpop.f32.mrf.mxu0
    %v3101 = vadd.f32 0.0, %v3100
    %3102 = vdwg.mxu0
    %v3103 = vadd.f32 %v3041, %v3092
    %v3104 = vadd.f32 %v3042, %v3095
    %v3105 = vadd.f32 %v3043, %v3098
    %v3106 = vadd.f32 %v3044, %v3101
    %v3107 = vrot.slane %v2751, 2
    %v3108 = vrot.slane %v2752, 2
    %v3109 = vrot.slane %v2753, 2
    %v3110 = vrot.slane %v2754, 2
    %v3111 = vsel %vm1493, %v3109, %v3110
    %v3112 = vsel %vm1493, %v3108, %v3109
    %v3113 = vsel %vm1493, %v3107, %v3108
    %v3114 = vsel %vm1493, %v3110, %v3107
    %v3115 = vmul.f32 %v3113, %v1501
    %v3116 = vmul.f32 %v3112, %v1506
    %v3117 = vmul.f32 %v3111, %v1511
    %v3118 = vmul.f32 %v3114, %v1516
    %s3119 = scalar_lea.vmem %s9, 480
    %v3120 = vld [vmem:[%s3119] sm:$0xff]
    %v3121 = vld [vmem:[%s3119 + $0x8] sm:$0xff]
    %v3122 = vld [vmem:[%s3119 + $0x10] sm:$0xff]
    %v3123 = vld [vmem:[%s3119 + $0x18] sm:$0xff]
    %v3125 = vsel %vm99, %v3115, 0
    %v3128 = vsel %vm99, %v3116, 0
    %v3131 = vsel %vm99, %v3117, 0
    %v3134 = vsel %vm99, %v3118, 0
    %3136 = vmatpush.msra.mxu0 0.0
    %3137 = vmatpush.msra.mxu0 0.0
    %3138 = vmatpush.msra.mxu0 0.0
    %3139 = vmatpush.msra.mxu0 0.0
    %3140 = vmatpush.msra.mxu0 0.0
    %3141 = vmatpush.msra.mxu0 0.0
    %3142 = vmatpush.msra.mxu0 0.0
    %3143 = vmatpush.msra.mxu0 0.0
    %3144 = vmatpush.msra.mxu0 0.0
    %3145 = vmatpush.msra.mxu0 0.0
    %3146 = vmatpush.msra.mxu0 0.0
    %3147 = vmatpush.msra.mxu0 0.0
    %3148 = vmatpush.msra.mxu0 %v3123
    %3149 = vmatpush.msra.mxu0 %v3122
    %3150 = vmatpush.msra.mxu0 %v3121
    %3151 = vmatpush.msra.mxu0 %v3120
    %3152 = vmatmul.f32.gmra.mxu0 %v3125
    %v3153 = vpop.f32.mrf.mxu0
    %v3154 = vadd.f32 0.0, %v3153
    %3155 = vmatmul.f32.gmra.mxu0 %v3128
    %v3156 = vpop.f32.mrf.mxu0
    %v3157 = vadd.f32 0.0, %v3156
    %3158 = vmatmul.f32.gmra.mxu0 %v3131
    %v3159 = vpop.f32.mrf.mxu0
    %v3160 = vadd.f32 0.0, %v3159
    %3161 = vmatmul.f32.gmra.mxu0 %v3134
    %v3162 = vpop.f32.mrf.mxu0
    %v3163 = vadd.f32 0.0, %v3162
    %3164 = vdwg.mxu0
    %v3165 = vadd.f32 %v3103, %v3154
    %v3166 = vadd.f32 %v3104, %v3157
    %v3167 = vadd.f32 %v3105, %v3160
    %v3168 = vadd.f32 %v3106, %v3163
    %v3169 = vrot.slane %v2751, 3
    %v3170 = vrot.slane %v2752, 3
    %v3171 = vrot.slane %v2753, 3
    %v3172 = vrot.slane %v2754, 3
    %v3173 = vsel %vm1576, %v3171, %v3172
    %v3174 = vsel %vm1576, %v3170, %v3171
    %v3175 = vsel %vm1576, %v3169, %v3170
    %v3176 = vsel %vm1576, %v3172, %v3169
    %v3177 = vmul.f32 %v3175, %v1584
    %v3178 = vmul.f32 %v3174, %v1589
    %v3179 = vmul.f32 %v3173, %v1594
    %v3180 = vmul.f32 %v3176, %v1599
    %s3181 = scalar_lea.vmem %s9, 512
    %v3182 = vld [vmem:[%s3181] sm:$0xff]
    %v3183 = vld [vmem:[%s3181 + $0x8] sm:$0xff]
    %v3184 = vld [vmem:[%s3181 + $0x10] sm:$0xff]
    %v3185 = vld [vmem:[%s3181 + $0x18] sm:$0xff]
    %v3187 = vsel %vm99, %v3177, 0
    %v3190 = vsel %vm99, %v3178, 0
    %v3193 = vsel %vm99, %v3179, 0
    %v3196 = vsel %vm99, %v3180, 0
    %3198 = vmatpush.msra.mxu0 0.0
    %3199 = vmatpush.msra.mxu0 0.0
    %3200 = vmatpush.msra.mxu0 0.0
    %3201 = vmatpush.msra.mxu0 0.0
    %3202 = vmatpush.msra.mxu0 0.0
    %3203 = vmatpush.msra.mxu0 0.0
    %3204 = vmatpush.msra.mxu0 0.0
    %3205 = vmatpush.msra.mxu0 0.0
    %3206 = vmatpush.msra.mxu0 0.0
    %3207 = vmatpush.msra.mxu0 0.0
    %3208 = vmatpush.msra.mxu0 0.0
    %3209 = vmatpush.msra.mxu0 0.0
    %3210 = vmatpush.msra.mxu0 %v3185
    %3211 = vmatpush.msra.mxu0 %v3184
    %3212 = vmatpush.msra.mxu0 %v3183
    %3213 = vmatpush.msra.mxu0 %v3182
    %3214 = vmatmul.f32.gmra.mxu0 %v3187
    %v3215 = vpop.f32.mrf.mxu0
    %v3216 = vadd.f32 0.0, %v3215
    %3217 = vmatmul.f32.gmra.mxu0 %v3190
    %v3218 = vpop.f32.mrf.mxu0
    %v3219 = vadd.f32 0.0, %v3218
    %3220 = vmatmul.f32.gmra.mxu0 %v3193
    %v3221 = vpop.f32.mrf.mxu0
    %v3222 = vadd.f32 0.0, %v3221
    %3223 = vmatmul.f32.gmra.mxu0 %v3196
    %v3224 = vpop.f32.mrf.mxu0
    %v3225 = vadd.f32 0.0, %v3224
    %3226 = vdwg.mxu0
    %v3227 = vadd.f32 %v3165, %v3216
    %v3228 = vadd.f32 %v3166, %v3219
    %v3229 = vadd.f32 %v3167, %v3222
    %v3230 = vadd.f32 %v3168, %v3225
    %v3231 = vmul.f32 %v2761, %v1658
    %v3232 = vmul.f32 %v2760, %v1663
    %v3233 = vmul.f32 %v2759, %v1668
    %v3234 = vmul.f32 %v2762, %v1673
    %s3235 = scalar_lea.vmem %s9, 544
    %v3236 = vld [vmem:[%s3235] sm:$0xff]
    %v3237 = vld [vmem:[%s3235 + $0x8] sm:$0xff]
    %v3238 = vld [vmem:[%s3235 + $0x10] sm:$0xff]
    %v3239 = vld [vmem:[%s3235 + $0x18] sm:$0xff]
    %v3241 = vsel %vm99, %v3231, 0
    %v3244 = vsel %vm99, %v3232, 0
    %v3247 = vsel %vm99, %v3233, 0
    %v3250 = vsel %vm99, %v3234, 0
    %3252 = vmatpush.msra.mxu0 0.0
    %3253 = vmatpush.msra.mxu0 0.0
    %3254 = vmatpush.msra.mxu0 0.0
    %3255 = vmatpush.msra.mxu0 0.0
    %3256 = vmatpush.msra.mxu0 0.0
    %3257 = vmatpush.msra.mxu0 0.0
    %3258 = vmatpush.msra.mxu0 0.0
    %3259 = vmatpush.msra.mxu0 0.0
    %3260 = vmatpush.msra.mxu0 0.0
    %3261 = vmatpush.msra.mxu0 0.0
    %3262 = vmatpush.msra.mxu0 0.0
    %3263 = vmatpush.msra.mxu0 0.0
    %3264 = vmatpush.msra.mxu0 %v3239
    %3265 = vmatpush.msra.mxu0 %v3238
    %3266 = vmatpush.msra.mxu0 %v3237
    %3267 = vmatpush.msra.mxu0 %v3236
    %3268 = vmatmul.f32.gmra.mxu0 %v3241
    %v3269 = vpop.f32.mrf.mxu0
    %v3270 = vadd.f32 0.0, %v3269
    %3271 = vmatmul.f32.gmra.mxu0 %v3244
    %v3272 = vpop.f32.mrf.mxu0
    %v3273 = vadd.f32 0.0, %v3272
    %3274 = vmatmul.f32.gmra.mxu0 %v3247
    %v3275 = vpop.f32.mrf.mxu0
    %v3276 = vadd.f32 0.0, %v3275
    %3277 = vmatmul.f32.gmra.mxu0 %v3250
    %v3278 = vpop.f32.mrf.mxu0
    %v3279 = vadd.f32 0.0, %v3278
    %3280 = vdwg.mxu0
    %v3281 = vadd.f32 %v3227, %v3270
    %v3282 = vadd.f32 %v3228, %v3273
    %v3283 = vadd.f32 %v3229, %v3276
    %v3284 = vadd.f32 %v3230, %v3279
    %v3285 = vld [vmem:[%s12 + $0xd] sm:$0x1]
    %v3286 = vperm.slane %v3285, 0
    %v3287 = vadd.f32 %v3281, %v3286
    %v3288 = vadd.f32 %v3282, %v3286
    %v3289 = vadd.f32 %v3283, %v3286
    %v3290 = vadd.f32 %v3284, %v3286
    %v3291 = vmin.f32 %v3287, 20.0
    %v3292 = vmin.f32 %v3288, 20.0
    %v3293 = vmin.f32 %v3289, 20.0
    %v3294 = vmin.f32 %v3290, 20.0
    %v3295 = vmul.f32 %v3291, 1.442695
    %v3296 = vpow.pop %v3295
    %v3297 = vmul.f32 %v3292, 1.442695
    %v3298 = vpow.pop %v3297
    %v3299 = vmul.f32 %v3293, 1.442695
    %v3300 = vpow.pop %v3299
    %v3301 = vmul.f32 %v3294, 1.442695
    %v3302 = vpow.pop %v3301
    %v3303 = vadd.f32 %v3296, 1.0
    %v3304 = vadd.f32 %v3298, 1.0
    %v3305 = vadd.f32 %v3300, 1.0
    %v3306 = vadd.f32 %v3302, 1.0
    %v3307 = vmul.f32 %v3303, %v3303
    %v3308 = vmul.f32 %v3304, %v3304
    %v3309 = vmul.f32 %v3305, %v3305
    %v3310 = vmul.f32 %v3306, %v3306
    %v3311 = vsub.f32 %v3307, 1.0
    %v3312 = vsub.f32 %v3308, 1.0
    %v3313 = vsub.f32 %v3309, 1.0
    %v3314 = vsub.f32 %v3310, 1.0
    %v3315 = vmul.f32 %v3287, %v3311
    %v3316 = vmul.f32 %v3288, %v3312
    %v3317 = vmul.f32 %v3289, %v3313
    %v3318 = vmul.f32 %v3290, %v3314
    %v3319 = vadd.f32 %v3307, 1.0
    %v3320 = vadd.f32 %v3308, 1.0
    %v3321 = vadd.f32 %v3309, 1.0
    %v3322 = vadd.f32 %v3310, 1.0
    %v3323 = vrcp.pop %v3319
    %v3324 = vrcp.pop %v3320
    %v3325 = vrcp.pop %v3321
    %v3326 = vrcp.pop %v3322
    %v3327 = vmul.f32 %v3315, %v3323
    %v3328 = vmul.f32 %v3316, %v3324
    %v3329 = vmul.f32 %v3317, %v3325
    %v3330 = vmul.f32 %v3318, %v3326
    %s3331 = scalar_lea.vmem %s10, 64
    %v3332 = vld [vmem:[%s3331] sm:$0xff]
    %v3333 = vld [vmem:[%s3331 + $0x8] sm:$0xff]
    %v3334 = vld [vmem:[%s3331 + $0x10] sm:$0xff]
    %v3335 = vld [vmem:[%s3331 + $0x18] sm:$0xff]
    %v3336 = vld [vmem:[%s3331 + $0x20] sm:$0xff]
    %v3337 = vld [vmem:[%s3331 + $0x28] sm:$0xff]
    %v3338 = vld [vmem:[%s3331 + $0x30] sm:$0xff]
    %v3339 = vld [vmem:[%s3331 + $0x38] sm:$0xff]
    %v3340 = vld [vmem:[%s12 + $0xe] sm:$0x1]
    %v3341 = vperm.slane %v3340, 0
    %v3343 = vsel %vm1785, %v3327, 0
    %v3346 = vsel %vm1785, %v3328, 0
    %v3349 = vsel %vm1785, %v3329, 0
    %v3352 = vsel %vm1785, %v3330, 0
    %3354 = vmatpush.msra.mxu0 0.0
    %3355 = vmatpush.msra.mxu0 0.0
    %3356 = vmatpush.msra.mxu0 0.0
    %3357 = vmatpush.msra.mxu0 0.0
    %3358 = vmatpush.msra.mxu0 0.0
    %3359 = vmatpush.msra.mxu0 0.0
    %3360 = vmatpush.msra.mxu0 0.0
    %3361 = vmatpush.msra.mxu0 0.0
    %3362 = vmatpush.msra.mxu0 %v3339
    %3363 = vmatpush.msra.mxu0 %v3338
    %3364 = vmatpush.msra.mxu0 %v3337
    %3365 = vmatpush.msra.mxu0 %v3336
    %3366 = vmatpush.msra.mxu0 %v3335
    %3367 = vmatpush.msra.mxu0 %v3334
    %3368 = vmatpush.msra.mxu0 %v3333
    %3369 = vmatpush.msra.mxu0 %v3332
    %3370 = vmatmul.f32.gmra.mxu0 %v3343
    %v3371 = vpop.f32.mrf.mxu0
    %v3372 = vadd.f32 %v3341, %v3371
    %3373 = vmatmul.f32.gmra.mxu0 %v3346
    %v3374 = vpop.f32.mrf.mxu0
    %v3375 = vadd.f32 %v3341, %v3374
    %3376 = vmatmul.f32.gmra.mxu0 %v3349
    %v3377 = vpop.f32.mrf.mxu0
    %v3378 = vadd.f32 %v3341, %v3377
    %3379 = vmatmul.f32.gmra.mxu0 %v3352
    %v3380 = vpop.f32.mrf.mxu0
    %v3381 = vadd.f32 %v3341, %v3380
    %3382 = vdwg.mxu0
    %v3383 = vadd.f32 %v3372, %v2751
    %v3384 = vadd.f32 %v3375, %v2752
    %v3385 = vadd.f32 %v3378, %v2753
    %v3386 = vadd.f32 %v3381, %v2754
    %s3387 = scalar_lea.vmem %s4, 192
    %v3388 = vld [vmem:[%s3387] sm:$0xff]
    %v3389 = vld [vmem:[%s3387 + $0x8] sm:$0xff]
    %v3390 = vld [vmem:[%s3387 + $0x10] sm:$0xff]
    %v3391 = vld [vmem:[%s3387 + $0x18] sm:$0xff]
    %s3392 = scalar_lea.vmem %s4, 224
    %v3393 = vld [vmem:[%s3392] sm:$0xff]
    %v3394 = vld [vmem:[%s3392 + $0x8] sm:$0xff]
    %v3395 = vld [vmem:[%s3392 + $0x10] sm:$0xff]
    %v3396 = vld [vmem:[%s3392 + $0x18] sm:$0xff]
    %v3397 = vsel %vm99, %v3383, 0.0
    %3398 = vadd.xlane.f32.xlu0 %v3397
    %v3399 = vpop.xlane.xlu0 %3398
    %v3400 = vsel %vm99, %v3384, 0.0
    %3401 = vadd.xlane.f32.xlu0 %v3400
    %v3402 = vpop.xlane.xlu0 %3401
    %v3403 = vsel %vm99, %v3385, 0.0
    %3404 = vadd.xlane.f32.xlu0 %v3403
    %v3405 = vpop.xlane.xlu0 %3404
    %v3406 = vsel %vm99, %v3386, 0.0
    %3407 = vadd.xlane.f32.xlu0 %v3406
    %v3408 = vpop.xlane.xlu0 %3407
    %v3409 = vmul.f32 %v3399, %v922
    %v3410 = vmul.f32 %v3402, %v922
    %v3411 = vmul.f32 %v3405, %v922
    %v3412 = vmul.f32 %v3408, %v922
    %v3413 = vsub.f32 %v3383, %v3409
    %v3414 = vsub.f32 %v3384, %v3410
    %v3415 = vsub.f32 %v3385, %v3411
    %v3416 = vsub.f32 %v3386, %v3412
    %v3417 = vmul.f32 %v3413, %v3413
    %v3418 = vmul.f32 %v3414, %v3414
    %v3419 = vmul.f32 %v3415, %v3415
    %v3420 = vmul.f32 %v3416, %v3416
    %v3421 = vsel %vm99, %v3417, 0.0
    %3422 = vadd.xlane.f32.xlu0 %v3421
    %v3423 = vpop.xlane.xlu0 %3422
    %v3424 = vsel %vm99, %v3418, 0.0
    %3425 = vadd.xlane.f32.xlu0 %v3424
    %v3426 = vpop.xlane.xlu0 %3425
    %v3427 = vsel %vm99, %v3419, 0.0
    %3428 = vadd.xlane.f32.xlu0 %v3427
    %v3429 = vpop.xlane.xlu0 %3428
    %v3430 = vsel %vm99, %v3420, 0.0
    %3431 = vadd.xlane.f32.xlu0 %v3430
    %v3432 = vpop.xlane.xlu0 %3431
    %v3433 = vmul.f32 %v3423, %v922
    %v3434 = vmul.f32 %v3426, %v922
    %v3435 = vmul.f32 %v3429, %v922
    %v3436 = vmul.f32 %v3432, %v922
    %v3437 = vadd.f32 %v3433, 1e-05
    %v3438 = vadd.f32 %v3434, 1e-05
    %v3439 = vadd.f32 %v3435, 1e-05
    %v3440 = vadd.f32 %v3436, 1e-05
    %v3441 = vrsqrt.pop %v3437
    %v3442 = vmul.f32 %v3441, %v3437
    %v3443 = vmul.f32 %v3442, %v3441
    %v3444 = vmul.f32 0.5, %v3443
    %v3445 = vsub.f32 1.5, %v3444
    %v3446 = vmul.f32 %v3441, %v3445
    %vm3447 = vweird.f32 %v3437
    %vm3448 = vweird.f32 %v3441
    %vm3449 = vmor %vm3447, %vm3448
    %v3450 = vsel %vm3449, %v3441, %v3446
    %v3451 = vrsqrt.pop %v3438
    %v3452 = vmul.f32 %v3451, %v3438
    %v3453 = vmul.f32 %v3452, %v3451
    %v3454 = vmul.f32 0.5, %v3453
    %v3455 = vsub.f32 1.5, %v3454
    %v3456 = vmul.f32 %v3451, %v3455
    %vm3457 = vweird.f32 %v3438
    %vm3458 = vweird.f32 %v3451
    %vm3459 = vmor %vm3457, %vm3458
    %v3460 = vsel %vm3459, %v3451, %v3456
    %v3461 = vrsqrt.pop %v3439
    %v3462 = vmul.f32 %v3461, %v3439
    %v3463 = vmul.f32 %v3462, %v3461
    %v3464 = vmul.f32 0.5, %v3463
    %v3465 = vsub.f32 1.5, %v3464
    %v3466 = vmul.f32 %v3461, %v3465
    %vm3467 = vweird.f32 %v3439
    %vm3468 = vweird.f32 %v3461
    %vm3469 = vmor %vm3467, %vm3468
    %v3470 = vsel %vm3469, %v3461, %v3466
    %v3471 = vrsqrt.pop %v3440
    %v3472 = vmul.f32 %v3471, %v3440
    %v3473 = vmul.f32 %v3472, %v3471
    %v3474 = vmul.f32 0.5, %v3473
    %v3475 = vsub.f32 1.5, %v3474
    %v3476 = vmul.f32 %v3471, %v3475
    %vm3477 = vweird.f32 %v3440
    %vm3478 = vweird.f32 %v3471
    %vm3479 = vmor %vm3477, %vm3478
    %v3480 = vsel %vm3479, %v3471, %v3476
    %v3481 = vmul.f32 %v3413, %v3450
    %v3482 = vmul.f32 %v3414, %v3460
    %v3483 = vmul.f32 %v3415, %v3470
    %v3484 = vmul.f32 %v3416, %v3480
    %v3485 = vmul.f32 %v3388, %v3481
    %v3486 = vmul.f32 %v3389, %v3482
    %v3487 = vmul.f32 %v3390, %v3483
    %v3488 = vmul.f32 %v3391, %v3484
    %v3489 = vadd.f32 %v3485, %v3393
    %v3490 = vadd.f32 %v3486, %v3394
    %v3491 = vadd.f32 %v3487, %v3395
    %v3492 = vadd.f32 %v3488, %v3396
    %v3493 = vmul.f32 %v3489, %v1010
    %v3494 = vmul.f32 %v3490, %v1015
    %v3495 = vmul.f32 %v3491, %v1020
    %v3496 = vmul.f32 %v3492, %v1025
    %v3497 = vld [vmem:[%s11] sm:$0xff]
    %v3498 = vld [vmem:[%s11 + $0x8] sm:$0xff]
    %v3499 = vld [vmem:[%s11 + $0x10] sm:$0xff]
    %v3500 = vld [vmem:[%s11 + $0x18] sm:$0xff]
    %v3501 = vld [vmem:[%s12 + $0x2] sm:$0x1]
    %v3502 = vperm.slane %v3501, 0
    %v3504 = vsel %vm99, %v3493, 0
    %v3507 = vsel %vm99, %v3494, 0
    %v3510 = vsel %vm99, %v3495, 0
    %v3513 = vsel %vm99, %v3496, 0
    %3515 = vmatpush.msra.mxu0 0.0
    %3516 = vmatpush.msra.mxu0 0.0
    %3517 = vmatpush.msra.mxu0 0.0
    %3518 = vmatpush.msra.mxu0 0.0
    %3519 = vmatpush.msra.mxu0 0.0
    %3520 = vmatpush.msra.mxu0 0.0
    %3521 = vmatpush.msra.mxu0 0.0
    %3522 = vmatpush.msra.mxu0 0.0
    %3523 = vmatpush.msra.mxu0 0.0
    %3524 = vmatpush.msra.mxu0 0.0
    %3525 = vmatpush.msra.mxu0 0.0
    %3526 = vmatpush.msra.mxu0 0.0
    %3527 = vmatpush.msra.mxu0 %v3500
    %3528 = vmatpush.msra.mxu0 %v3499
    %3529 = vmatpush.msra.mxu0 %v3498
    %3530 = vmatpush.msra.mxu0 %v3497
    %3531 = vmatmul.f32.gmra.mxu0 %v3504
    %v3532 = vpop.f32.mrf.mxu0
    %v3533 = vadd.f32 %v3502, %v3532
    %3534 = vmatmul.f32.gmra.mxu0 %v3507
    %v3535 = vpop.f32.mrf.mxu0
    %v3536 = vadd.f32 %v3502, %v3535
    %3537 = vmatmul.f32.gmra.mxu0 %v3510
    %v3538 = vpop.f32.mrf.mxu0
    %v3539 = vadd.f32 %v3502, %v3538
    %3540 = vmatmul.f32.gmra.mxu0 %v3513
    %v3541 = vpop.f32.mrf.mxu0
    %v3542 = vadd.f32 %v3502, %v3541
    %3543 = vdwg.mxu0
    %v3544 = vmul.f32 %v3533, %v1010
    %v3545 = vmul.f32 %v3536, %v1015
    %v3546 = vmul.f32 %v3539, %v1020
    %v3547 = vmul.f32 %v3542, %v1025
    %3548 = vst [vmem:[#allocation2] sm:$0xff] %v3544
    %3549 = vst [vmem:[#allocation2 + $0x8] sm:$0xff] %v3545
    %3550 = vst [vmem:[#allocation2 + $0x10] sm:$0xff] %v3546
    %3551 = vst [vmem:[#allocation2 + $0x18] sm:$0xff] %v3547
    // Predicated region
    $region54: #{high_decoder_forward.1} parent=1 // pred_check
      _
    $region55: #{high_decoder_forward.1} parent=1 // pred_check_branch
      %3553 = sbr.rel (0) target = $region57
    $region56: #{high_decoder_forward.1} parent=1 // pred_region
      %3555 = vsyncadd [#allocation3], 0
      %s3556 = sshll.u32 [#allocation2], 4
      %s3557 = int_to_ptr.vmem [resolvable:$true] %s3556
      %s3558 = sshll.u32 %s13, 4
      %s3559 = int_to_ptr.hbm [resolvable:$true] %s3558
      %3564 = dma.vmem_to_hbm [thread:$0]  %s3557, 512, %s3559, [#allocation3], 128, 128, 8
    $region57: #{high_decoder_forward.1} parent=1 // pred_fallthru
      _
    // Predicated region
    $region58: #{high_decoder_forward.1} parent=1 // pred_check
      _
    $region59: #{high_decoder_forward.1} parent=1 // pred_check_branch
      %3566 = sbr.rel (0) target = $region61
    $region60: #{high_decoder_forward.1} parent=1 // pred_region
      %3568 = dma.done [#allocation3], 512
    $region61: #{high_decoder_forward.1} parent=1 // pred_fallthru
      _
    %3569 = vsyncpa [#allocation3], 1

</llo_original>
